<compile_context>
chip_gen: v5e
topology: v5e:2x2
jax: 0.10.0
libtpu: 0.0.40
codegen_flags: <defaults>
</compile_context>

<pallas_src>
import jax
import jax.numpy as jnp
from jax.experimental import pallas as pl
from jax.experimental.pallas import tpu as pltpu

# Logical model dims (PyTorch Generator).
LATENT = 100           # nn.Linear(100, 256)
H1 = 256
H2 = 512
OUT = 28 * 28          # 784

# Lane-padded dims (multiples of 128 -> aligned MXU feed / unmasked stores).
LATENT_PAD = 128
OUT_PAD = 896          # 7 * 128


def generator_kernel(x_ref, w1_ref, b1_ref, w2_ref, b2_ref, w3_ref, b3_ref,
                     o_ref):
    # x tile: (TM, 128) bf16; weights bf16 and VMEM-resident across grid steps.
    # Matmuls accumulate in f32 on the MXU; bias/ReLU/Tanh are done in f32.
    x = x_ref[...]

    # Linear(128 -> 256) + ReLU   (rows 100..127 of w1 are zero padding)
    h1 = jnp.dot(x, w1_ref[...], preferred_element_type=jnp.float32)
    h1 = jnp.maximum(h1 + b1_ref[...], 0.0)

    # Linear(256 -> 512) + ReLU
    h2 = jnp.dot(h1.astype(jnp.bfloat16), w2_ref[...],
                 preferred_element_type=jnp.float32)
    h2 = jnp.maximum(h2 + b2_ref[...], 0.0)

    # Linear(512 -> 896) + Tanh   (cols 784..895 of w3/b3 are zero padding)
    h3 = jnp.dot(h2.astype(jnp.bfloat16), w3_ref[...],
                 preferred_element_type=jnp.float32)
    o_ref[...] = jnp.tanh(h3 + b3_ref[...]).astype(o_ref.dtype)


def generator_forward(x, params, *, tm=128):
    """x: (B, 100) float32 -> (B, 28, 28) float32.

    params: lane-padded bf16 weights / f32 biases from init_params().
    tm: batch tile (128 fills the v5e MXU; use 256 on v6e/v7x for the
        2x256x256 MXU if batches are large).
    """
    w1, b1, w2, b2, w3, b3 = params
    B = x.shape[0]

    # Pad batch to a tile multiple and latent 100 -> 128 (zeros), cast to bf16.
    n_tiles = pl.cdiv(B, tm)
    b_pad = n_tiles * tm
    x_pad = jnp.zeros((b_pad, LATENT_PAD), jnp.bfloat16)
    x_pad = x_pad.at[:B, :LATENT].set(x.astype(jnp.bfloat16))

    flops = 2 * b_pad * (LATENT_PAD * H1 + H1 * H2 + H2 * OUT_PAD)
    bytes_accessed = (x_pad.size * 2
                      + (w1.size + w2.size + w3.size) * 2
                      + (b1.size + b2.size + b3.size) * 4
                      + b_pad * OUT_PAD * 4)
    cost = pl.CostEstimate(flops=flops,
                           transcendentals=b_pad * OUT_PAD,
                           bytes_accessed=bytes_accessed)

    const = lambda i: (0, 0)  # weights/biases: same block every step (resident)

    out_flat = pl.pallas_call(
        generator_kernel,
        out_shape=jax.ShapeDtypeStruct((b_pad, OUT_PAD), jnp.float32),
        grid=(n_tiles,),
        in_specs=[
            pl.BlockSpec((tm, LATENT_PAD), lambda i: (i, 0)),
            pl.BlockSpec(w1.shape, const),
            pl.BlockSpec(b1.shape, const),
            pl.BlockSpec(w2.shape, const),
            pl.BlockSpec(b2.shape, const),
            pl.BlockSpec(w3.shape, const),
            pl.BlockSpec(b3.shape, const),
        ],
        out_specs=pl.BlockSpec((tm, OUT_PAD), lambda i: (i, 0)),
        compiler_params=pltpu.CompilerParams(
            dimension_semantics=("parallel",)),   # v7x: shard tiles over 2 TCs
        cost_estimate=cost,
    )(x_pad, w1, b1, w2, b2, w3, b3)

    # Strip batch/lane padding; reshape matches PyTorch img.view(-1, 28, 28).
    return out_flat[:B, :OUT].reshape(-1, 28, 28)


def init_params(key):
    """Deterministic synthetic init matching nn.Linear shapes, kernel-ready:

    * weights in (in, out) layout (transpose of PyTorch's (out, in)), bf16,
      w1 zero-padded 100->128 rows, w3/b3 zero-padded 784->896 cols;
    * biases kept in f32 (added in f32 inside the kernel).
    """
    dims = [(LATENT, H1), (H1, H2), (H2, OUT)]
    pad_in = [LATENT_PAD, H1, H2]
    pad_out = [H1, H2, OUT_PAD]
    params = []
    for (fan_in, fan_out), pin, pout in zip(dims, pad_in, pad_out):
        key, kw, kb = jax.random.split(key, 3)
        bound = 1.0 / jnp.sqrt(fan_in)
        w = jax.random.uniform(kw, (fan_in, fan_out), jnp.float32,
                               minval=-bound, maxval=bound).astype(jnp.bfloat16)
        b = jax.random.uniform(kb, (1, fan_out), jnp.float32,
                               minval=-bound, maxval=bound)
        w_pad = jnp.zeros((pin, pout), jnp.bfloat16)
        w_pad = w_pad.at[:fan_in, :fan_out].set(w)
        b_pad = jnp.zeros((1, pout), jnp.float32)
        b_pad = b_pad.at[:, :fan_out].set(b)
        params.extend([w_pad, b_pad])
    return tuple(params)


if __name__ == "__main__":
    key = jax.random.PRNGKey(0)
    key, kx = jax.random.split(key)

    # Small-but-non-trivial batch: not a multiple of the 128-row tile, so the
    # batch-padding + multi-tile grid path is exercised.
    B = 200
    x = jax.random.normal(kx, (B, LATENT), jnp.float32)  # latent noise z

    params = init_params(key)

    img = jax.block_until_ready(generator_forward(x, params))
    assert img.shape == (B, 28, 28), img.shape

    # Pure-JAX reference mirroring the kernel's bf16-weight / f32-accumulate
    # quantization (so agreement is tight despite bf16 storage).
    w1, b1, w2, b2, w3, b3 = params
    xr = jnp.pad(x.astype(jnp.bfloat16).astype(jnp.float32),
                 ((0, 0), (0, LATENT_PAD - LATENT)))
    h1 = jnp.maximum(xr @ w1.astype(jnp.float32) + b1, 0.0)
    h1 = h1.astype(jnp.bfloat16).astype(jnp.float32)
    h2 = jnp.maximum(h1 @ w2.astype(jnp.float32) + b2, 0.0)
    h2 = h2.astype(jnp.bfloat16).astype(jnp.float32)
    ref = jnp.tanh(h2 @ w3.astype(jnp.float32) + b3)[:, :OUT].reshape(-1, 28, 28)

    err = float(jnp.max(jnp.abs(img - ref)))
    assert jnp.allclose(img, ref, atol=1e-2, rtol=1e-2), err

    print("KERNEL_OK")
</pallas_src>

<mosaic_0001>
module attributes {stable_mosaic.version = 11 : i64} {
  func.func @generator_kernel(%arg0: i32, %arg1: memref<128x128xbf16, #tpu.memory_space<vmem>>, %arg2: memref<128x256xbf16, #tpu.memory_space<vmem>>, %arg3: memref<1x256xf32, #tpu.memory_space<vmem>>, %arg4: memref<256x512xbf16, #tpu.memory_space<vmem>>, %arg5: memref<1x512xf32, #tpu.memory_space<vmem>>, %arg6: memref<512x896xbf16, #tpu.memory_space<vmem>>, %arg7: memref<1x896xf32, #tpu.memory_space<vmem>>, %arg8: memref<128x896xf32, #tpu.memory_space<vmem>>) attributes {dimension_semantics = [#tpu.dimension_semantics<parallel>], iteration_bounds = array<i64: 2>, scalar_prefetch = 0 : i64, scratch_operands = 0 : i64, tpu.core_type = #tpu.core_type<tc>, window_params = [{transform_indices = @transform_0, window_bounds = array<i64: 128, 128>}, {pipeline_mode = #tpu.pipeline_mode<synchronous>, transform_indices = @transform_1, window_bounds = array<i64: 128, 256>}, {pipeline_mode = #tpu.pipeline_mode<synchronous>, transform_indices = @transform_2, window_bounds = array<i64: 1, 256>}, {pipeline_mode = #tpu.pipeline_mode<synchronous>, transform_indices = @transform_3, window_bounds = array<i64: 256, 512>}, {pipeline_mode = #tpu.pipeline_mode<synchronous>, transform_indices = @transform_4, window_bounds = array<i64: 1, 512>}, {pipeline_mode = #tpu.pipeline_mode<synchronous>, transform_indices = @transform_5, window_bounds = array<i64: 512, 896>}, {pipeline_mode = #tpu.pipeline_mode<synchronous>, transform_indices = @transform_6, window_bounds = array<i64: 1, 896>}, {transform_indices = @transform_7, window_bounds = array<i64: 128, 896>}]} {
    %c0 = arith.constant 0 : index
    %c0_0 = arith.constant 0 : index
    %0 = vector.load %arg1[%c0, %c0_0] : memref<128x128xbf16, #tpu.memory_space<vmem>>, vector<128x128xbf16>
    %c0_1 = arith.constant 0 : index
    %c0_2 = arith.constant 0 : index
    %1 = vector.load %arg2[%c0_1, %c0_2] : memref<128x256xbf16, #tpu.memory_space<vmem>>, vector<128x256xbf16>
    %cst = arith.constant dense<0.000000e+00> : vector<128x256xf32>
    %2 = tpu.matmul %0, %1, %cst {dimension_numbers = #tpu.dot_dimension_numbers<[1], [0], [0], [1], [0, 0, 1, 1], [], []>} : vector<128x128xbf16>, vector<128x256xbf16>, vector<128x256xf32> -> vector<128x256xf32>
    %c0_3 = arith.constant 0 : index
    %c0_4 = arith.constant 0 : index
    %3 = vector.load %arg3[%c0_3, %c0_4] : memref<1x256xf32, #tpu.memory_space<vmem>>, vector<1x256xf32>
    %4 = vector.broadcast %3 : vector<1x256xf32> to vector<128x256xf32>
    %5 = arith.addf %2, %4 : vector<128x256xf32>
    %cst_5 = arith.constant 0.000000e+00 : f32
    %6 = vector.broadcast %cst_5 : f32 to vector<128x256xf32>
    %7 = arith.maximumf %5, %6 : vector<128x256xf32>
    %8 = arith.truncf %7 : vector<128x256xf32> to vector<128x256xbf16>
    %c0_6 = arith.constant 0 : index
    %c0_7 = arith.constant 0 : index
    %9 = vector.load %arg4[%c0_6, %c0_7] : memref<256x512xbf16, #tpu.memory_space<vmem>>, vector<256x512xbf16>
    %cst_8 = arith.constant dense<0.000000e+00> : vector<128x512xf32>
    %10 = tpu.matmul %8, %9, %cst_8 {dimension_numbers = #tpu.dot_dimension_numbers<[1], [0], [0], [1], [0, 0, 1, 1], [], []>} : vector<128x256xbf16>, vector<256x512xbf16>, vector<128x512xf32> -> vector<128x512xf32>
    %c0_9 = arith.constant 0 : index
    %c0_10 = arith.constant 0 : index
    %11 = vector.load %arg5[%c0_9, %c0_10] : memref<1x512xf32, #tpu.memory_space<vmem>>, vector<1x512xf32>
    %12 = vector.broadcast %11 : vector<1x512xf32> to vector<128x512xf32>
    %13 = arith.addf %10, %12 : vector<128x512xf32>
    %cst_11 = arith.constant 0.000000e+00 : f32
    %14 = vector.broadcast %cst_11 : f32 to vector<128x512xf32>
    %15 = arith.maximumf %13, %14 : vector<128x512xf32>
    %16 = arith.truncf %15 : vector<128x512xf32> to vector<128x512xbf16>
    %c0_12 = arith.constant 0 : index
    %c0_13 = arith.constant 0 : index
    %17 = vector.load %arg6[%c0_12, %c0_13] : memref<512x896xbf16, #tpu.memory_space<vmem>>, vector<512x896xbf16>
    %cst_14 = arith.constant dense<0.000000e+00> : vector<128x896xf32>
    %18 = tpu.matmul %16, %17, %cst_14 {dimension_numbers = #tpu.dot_dimension_numbers<[1], [0], [0], [1], [0, 0, 1, 1], [], []>} : vector<128x512xbf16>, vector<512x896xbf16>, vector<128x896xf32> -> vector<128x896xf32>
    %c0_15 = arith.constant 0 : index
    %c0_16 = arith.constant 0 : index
    %19 = vector.load %arg7[%c0_15, %c0_16] : memref<1x896xf32, #tpu.memory_space<vmem>>, vector<1x896xf32>
    %20 = vector.broadcast %19 : vector<1x896xf32> to vector<128x896xf32>
    %21 = arith.addf %18, %20 : vector<128x896xf32>
    %22 = math.tanh %21 : vector<128x896xf32>
    %c0_17 = arith.constant 0 : index
    %c0_18 = arith.constant 0 : index
    %23 = vector.load %arg8[%c0_17, %c0_18] : memref<128x896xf32, #tpu.memory_space<vmem>>, vector<128x896xf32>
    tpu.vector_store %arg8[%c0_17, %c0_18], %22 {strides = array<i32>} : memref<128x896xf32, #tpu.memory_space<vmem>>, vector<128x896xf32>,
    return
  }
  func.func @transform_0(%arg0: i32) -> (i32, i32) {
    %c0_i32 = arith.constant 0 : i32
    %c0_i32_0 = arith.constant 0 : i32
    return %arg0, %c0_i32 : i32, i32
  }
  func.func @transform_1(%arg0: i32) -> (i32, i32) {
    %c0_i32 = arith.constant 0 : i32
    %c0_i32_0 = arith.constant 0 : i32
    %c0_i32_1 = arith.constant 0 : i32
    return %c0_i32, %c0_i32_0 : i32, i32
  }
  func.func @transform_2(%arg0: i32) -> (i32, i32) {
    %c0_i32 = arith.constant 0 : i32
    %c0_i32_0 = arith.constant 0 : i32
    %c0_i32_1 = arith.constant 0 : i32
    return %c0_i32, %c0_i32_0 : i32, i32
  }
  func.func @transform_3(%arg0: i32) -> (i32, i32) {
    %c0_i32 = arith.constant 0 : i32
    %c0_i32_0 = arith.constant 0 : i32
    %c0_i32_1 = arith.constant 0 : i32
    return %c0_i32, %c0_i32_0 : i32, i32
  }
  func.func @transform_4(%arg0: i32) -> (i32, i32) {
    %c0_i32 = arith.constant 0 : i32
    %c0_i32_0 = arith.constant 0 : i32
    %c0_i32_1 = arith.constant 0 : i32
    return %c0_i32, %c0_i32_0 : i32, i32
  }
  func.func @transform_5(%arg0: i32) -> (i32, i32) {
    %c0_i32 = arith.constant 0 : i32
    %c0_i32_0 = arith.constant 0 : i32
    %c0_i32_1 = arith.constant 0 : i32
    return %c0_i32, %c0_i32_0 : i32, i32
  }
  func.func @transform_6(%arg0: i32) -> (i32, i32) {
    %c0_i32 = arith.constant 0 : i32
    %c0_i32_0 = arith.constant 0 : i32
    %c0_i32_1 = arith.constant 0 : i32
    return %c0_i32, %c0_i32_0 : i32, i32
  }
  func.func @transform_7(%arg0: i32) -> (i32, i32) {
    %c0_i32 = arith.constant 0 : i32
    %c0_i32_0 = arith.constant 0 : i32
    return %arg0, %c0_i32 : i32, i32
  }
}

</mosaic_0001>

<llo_original>
// kernel: tpu_custom_call.1
$region0: #{tpu_custom_call.1}
  #allocation0 [shape = 'u32[]', space=smem, size = 0x4, offset = 0x4, fixed_abs, tag = 'smem constant byte address 0x4 - core index']
  #allocation1 [shape = 'u32[72,128]{1,0:T(1,128)}', space=vmem, size = 0x9000, scoped, tag = 'internal scratch']
  %s0 = inlined_call_operand.hbm [shape: bf16[256,128], index: 0, kind: input, shape index: {}]
  %s1 = inlined_call_operand.hbm [shape: bf16[128,256], index: 1, kind: input, shape index: {}]
  %s2 = inlined_call_operand.hbm [shape: f32[1,256], index: 2, kind: input, shape index: {}]
  %s3 = inlined_call_operand.hbm [shape: bf16[256,512], index: 3, kind: input, shape index: {}]
  %s4 = inlined_call_operand.hbm [shape: f32[1,512], index: 4, kind: input, shape index: {}]
  %s5 = inlined_call_operand.hbm [shape: bf16[512,896], index: 5, kind: input, shape index: {}]
  %s6 = inlined_call_operand.hbm [shape: f32[1,896], index: 6, kind: input, shape index: {}]
  %s7 = inlined_call_operand.hbm [shape: f32[256,896], index: 7, kind: output, shape index: {}]
  %s8 = sld [smem:[#allocation0]]
  $region89: #{tpu_custom_call.1} parent=0
    _
  %s10 = ssub.s32 1, %s8
  %s11 = scalar_select 0, %s10, %s8
  $region1: #{tpu_custom_call.1} parent=0
    #allocation2 [shape = 'u8[65536]{0}', space=vmem, size = 0x10000, scoped, tag = 'input window, operand 0']
    #allocation3 [shape = 's32[2]{0}', space=sflag, size = 0x8, scoped, tag = 'scoped memory for tpu_custom_call.1']
    #allocation4 [shape = 's32[2]{0}', space=sflag, size = 0x8, scoped, tag = 'scoped memory for tpu_custom_call.1']
    #allocation5 [shape = 'u8[65536]{0}', space=vmem, size = 0x10000, scoped, tag = 'input window, operand 1, single buffered']
    #allocation6 [shape = 's32[1]{0}', space=sflag, size = 0x4, scoped, tag = 'scoped memory for tpu_custom_call.1']
    #allocation7 [shape = 'u8[1024]{0}', space=vmem, size = 0x400, scoped, tag = 'input window, operand 2, single buffered']
    #allocation8 [shape = 'u8[262144]{0}', space=vmem, size = 0x40000, scoped, tag = 'input window, operand 3, single buffered']
    #allocation9 [shape = 's32[1]{0}', space=sflag, size = 0x4, scoped, tag = 'scoped memory for tpu_custom_call.1']
    #allocation10 [shape = 'u8[2048]{0}', space=vmem, size = 0x800, scoped, tag = 'input window, operand 4, single buffered']
    #allocation11 [shape = 'u8[917504]{0}', space=vmem, size = 0xe0000, scoped, tag = 'input window, operand 5, single buffered']
    #allocation12 [shape = 's32[1]{0}', space=sflag, size = 0x4, scoped, tag = 'scoped memory for tpu_custom_call.1']
    #allocation13 [shape = 'u8[3584]{0}', space=vmem, size = 0x1000, scoped, tag = 'input window, operand 6, single buffered']
    #allocation14 [shape = 'u8[917504]{0}', space=vmem, size = 0xe0000, scoped, tag = 'output window, operand 0']
    %12 = vsyncpa [#allocation3], 0
    %s13 = scalar_lea.sflag [#allocation3], 1
    %14 = vsyncpa %s13, 0
    %15 = vsyncpa [#allocation6], 0
    %16 = vsyncpa [#allocation9], 0
    %17 = vsyncpa [#allocation12], 0
    %18 = vsyncpa [#allocation4], 0
    %s19 = scalar_lea.sflag [#allocation4], 1
    %20 = vsyncpa %s19, 0
    loop: start=0, step=1, limit=4
    $region2: #{tpu_custom_call.1} parent=1 // loop_pre_header
      _
    $region3: #{tpu_custom_call.1} parent=1 // loop_header
      %s22 = sphi 0, %s26
      %p23 = scmp.ge.s32.totalorder %s22, 4
      %s32 = sphi 0, %s34
      %s35 = sphi 0, %s32
      %s36 = sphi 0, %s35
      %s52 = sphi 0, %s36
      %s56 = sphi 0, %s56
      %s58 = sphi 0, %s56
      %s59 = sphi 0, %s58
      %s73 = sphi 0, %s59
      %s77 = sphi 0, %s77
      %s79 = sphi 0, %s77
      %s80 = sphi 0, %s79
      %s94 = sphi 0, %s80
      %s98 = sphi 0, %s98
      %s100 = sphi 0, %s98
      %s101 = sphi 0, %s100
      %s115 = sphi 0, %s101
      %s119 = sphi 0, %s119
      %s121 = sphi 0, %s119
      %s122 = sphi 0, %s121
      %s136 = sphi 0, %s122
      %s140 = sphi 0, %s140
      %s142 = sphi 0, %s140
      %s143 = sphi 0, %s142
      %s157 = sphi 0, %s143
      %s161 = sphi 0, %s161
      %s163 = sphi 0, %s161
      %s164 = sphi 0, %s163
      %s178 = sphi 0, %s164
      %s184 = sphi 0, %s186
      %s187 = sphi 0, %s184
      %s188 = sphi 0, %s187
      %s204 = sphi 0, %s188
    $region4: #{tpu_custom_call.1} parent=1 // loop_header_branch
      %25 = sbr.rel (%p23) target = $region8
    $region5: #{tpu_custom_call.1} parent=1 // loop_body
      %s27 = ssub.s32 %s22, 1
      %s28 = ssub.s32 %s22, 2
      %s29 = sadd.s32 %s22, 1
      %s30 = ssub.s32 %s22, %s29
      %p31 = scmp.eq.s32.totalorder %s30, 0
      %s33 = sadd.s32 %s32, 1
      %s34 = scalar_select %p31, %s32, %s33
      %p37 = pneg %p31
      %p38 = scmp.eq.s32.totalorder %s22, 1
      %p39 = por %p37, %p38
      %p40 = scmp.ne.s32.totalorder %s32, %s35
      %p41 = scmp.eq.s32.totalorder %s22, 0
      %p42 = por %p40, %p41
      %p43 = scmp.ne.s32.totalorder %s32, %s35
      %p44 = scmp.eq.s32.totalorder %s27, 1
      %p45 = por %p43, %p44
      %p46 = scmp.ne.s32.totalorder %s35, %s36
      %p47 = scmp.eq.s32.totalorder %s27, 0
      %p48 = por %p46, %p47
      %p49 = scmp.ne.s32.totalorder %s35, %s36
      %p50 = scmp.eq.s32.totalorder %s28, 1
      %p51 = por %p49, %p50
      %p53 = scmp.ne.s32.totalorder %s36, %s52
      %p54 = scmp.eq.s32.totalorder %s28, 0
      %p55 = por %p53, %p54
      %s57 = sadd.s32 %s56, 1
      %p60 = scmp.eq.s32.totalorder %s22, 1
      %p61 = scmp.ne.s32.totalorder %s56, %s58
      %p62 = scmp.eq.s32.totalorder %s22, 0
      %p63 = por %p61, %p62
      %p64 = scmp.ne.s32.totalorder %s56, %s58
      %p65 = scmp.eq.s32.totalorder %s27, 1
      %p66 = por %p64, %p65
      %p67 = scmp.ne.s32.totalorder %s58, %s59
      %p68 = scmp.eq.s32.totalorder %s27, 0
      %p69 = por %p67, %p68
      %p70 = scmp.ne.s32.totalorder %s58, %s59
      %p71 = scmp.eq.s32.totalorder %s28, 1
      %p72 = por %p70, %p71
      %p74 = scmp.ne.s32.totalorder %s59, %s73
      %p75 = scmp.eq.s32.totalorder %s28, 0
      %p76 = por %p74, %p75
      %s78 = sadd.s32 %s77, 1
      %p81 = scmp.eq.s32.totalorder %s22, 1
      %p82 = scmp.ne.s32.totalorder %s77, %s79
      %p83 = scmp.eq.s32.totalorder %s22, 0
      %p84 = por %p82, %p83
      %p85 = scmp.ne.s32.totalorder %s77, %s79
      %p86 = scmp.eq.s32.totalorder %s27, 1
      %p87 = por %p85, %p86
      %p88 = scmp.ne.s32.totalorder %s79, %s80
      %p89 = scmp.eq.s32.totalorder %s27, 0
      %p90 = por %p88, %p89
      %p91 = scmp.ne.s32.totalorder %s79, %s80
      %p92 = scmp.eq.s32.totalorder %s28, 1
      %p93 = por %p91, %p92
      %p95 = scmp.ne.s32.totalorder %s80, %s94
      %p96 = scmp.eq.s32.totalorder %s28, 0
      %p97 = por %p95, %p96
      %s99 = sadd.s32 %s98, 1
      %p102 = scmp.eq.s32.totalorder %s22, 1
      %p103 = scmp.ne.s32.totalorder %s98, %s100
      %p104 = scmp.eq.s32.totalorder %s22, 0
      %p105 = por %p103, %p104
      %p106 = scmp.ne.s32.totalorder %s98, %s100
      %p107 = scmp.eq.s32.totalorder %s27, 1
      %p108 = por %p106, %p107
      %p109 = scmp.ne.s32.totalorder %s100, %s101
      %p110 = scmp.eq.s32.totalorder %s27, 0
      %p111 = por %p109, %p110
      %p112 = scmp.ne.s32.totalorder %s100, %s101
      %p113 = scmp.eq.s32.totalorder %s28, 1
      %p114 = por %p112, %p113
      %p116 = scmp.ne.s32.totalorder %s101, %s115
      %p117 = scmp.eq.s32.totalorder %s28, 0
      %p118 = por %p116, %p117
      %s120 = sadd.s32 %s119, 1
      %p123 = scmp.eq.s32.totalorder %s22, 1
      %p124 = scmp.ne.s32.totalorder %s119, %s121
      %p125 = scmp.eq.s32.totalorder %s22, 0
      %p126 = por %p124, %p125
      %p127 = scmp.ne.s32.totalorder %s119, %s121
      %p128 = scmp.eq.s32.totalorder %s27, 1
      %p129 = por %p127, %p128
      %p130 = scmp.ne.s32.totalorder %s121, %s122
      %p131 = scmp.eq.s32.totalorder %s27, 0
      %p132 = por %p130, %p131
      %p133 = scmp.ne.s32.totalorder %s121, %s122
      %p134 = scmp.eq.s32.totalorder %s28, 1
      %p135 = por %p133, %p134
      %p137 = scmp.ne.s32.totalorder %s122, %s136
      %p138 = scmp.eq.s32.totalorder %s28, 0
      %p139 = por %p137, %p138
      %s141 = sadd.s32 %s140, 1
      %p144 = scmp.eq.s32.totalorder %s22, 1
      %p145 = scmp.ne.s32.totalorder %s140, %s142
      %p146 = scmp.eq.s32.totalorder %s22, 0
      %p147 = por %p145, %p146
      %p148 = scmp.ne.s32.totalorder %s140, %s142
      %p149 = scmp.eq.s32.totalorder %s27, 1
      %p150 = por %p148, %p149
      %p151 = scmp.ne.s32.totalorder %s142, %s143
      %p152 = scmp.eq.s32.totalorder %s27, 0
      %p153 = por %p151, %p152
      %p154 = scmp.ne.s32.totalorder %s142, %s143
      %p155 = scmp.eq.s32.totalorder %s28, 1
      %p156 = por %p154, %p155
      %p158 = scmp.ne.s32.totalorder %s143, %s157
      %p159 = scmp.eq.s32.totalorder %s28, 0
      %p160 = por %p158, %p159
      %s162 = sadd.s32 %s161, 1
      %p165 = scmp.eq.s32.totalorder %s22, 1
      %p166 = scmp.ne.s32.totalorder %s161, %s163
      %p167 = scmp.eq.s32.totalorder %s22, 0
      %p168 = por %p166, %p167
      %p169 = scmp.ne.s32.totalorder %s161, %s163
      %p170 = scmp.eq.s32.totalorder %s27, 1
      %p171 = por %p169, %p170
      %p172 = scmp.ne.s32.totalorder %s163, %s164
      %p173 = scmp.eq.s32.totalorder %s27, 0
      %p174 = por %p172, %p173
      %p175 = scmp.ne.s32.totalorder %s163, %s164
      %p176 = scmp.eq.s32.totalorder %s28, 1
      %p177 = por %p175, %p176
      %p179 = scmp.ne.s32.totalorder %s164, %s178
      %p180 = scmp.eq.s32.totalorder %s28, 0
      %p181 = por %p179, %p180
      %s182 = ssub.s32 %s22, %s29
      %p183 = scmp.eq.s32.totalorder %s182, 0
      %s185 = sadd.s32 %s184, 1
      %s186 = scalar_select %p183, %s184, %s185
      %p189 = pneg %p183
      %p190 = scmp.eq.s32.totalorder %s22, 1
      %p191 = por %p189, %p190
      %p192 = scmp.ne.s32.totalorder %s184, %s187
      %p193 = scmp.eq.s32.totalorder %s22, 0
      %p194 = por %p192, %p193
      %p195 = scmp.ne.s32.totalorder %s184, %s187
      %p196 = scmp.eq.s32.totalorder %s27, 1
      %p197 = por %p195, %p196
      %p198 = scmp.ne.s32.totalorder %s187, %s188
      %p199 = scmp.eq.s32.totalorder %s27, 0
      %p200 = por %p198, %p199
      %p201 = scmp.ne.s32.totalorder %s187, %s188
      %p202 = scmp.eq.s32.totalorder %s28, 1
      %p203 = por %p201, %p202
      %p205 = scmp.ne.s32.totalorder %s188, %s204
      %p206 = scmp.eq.s32.totalorder %s28, 0
      %p207 = por %p205, %p206
      %p208 = scmp.le.s32.totalorder 1, %s22
      %p209 = scmp.lt.s32.totalorder %s22, 3
      %p210 = pnand %p208, %p209
      %p211 = pneg %p210
      // Predicated region
      $region9: #{tpu_custom_call.1} parent=5 // pred_check
        _
      $region10: #{tpu_custom_call.1} parent=5 // pred_check_branch
        %213 = sbr.rel (%p210) target = $region12
      $region11: #{tpu_custom_call.1} parent=5 // pred_region
        %s214 = ssub.s32 %s22, 1
        // Predicated region
        $region13: #{tpu_custom_call.1} parent=11 // pred_check
          %p215 = pneg %p69
        $region14: #{tpu_custom_call.1} parent=11 // pred_check_branch
          %217 = sbr.rel (%p215) target = $region16
        $region15: #{tpu_custom_call.1} parent=11 // pred_region
          %219 = vsyncadd [#allocation6], 0
          %s220 = sshll.u32 %s1, 4
          %s221 = int_to_ptr.hbm [resolvable:$true] %s220
          %s222 = sshll.u32 [#allocation5], 4
          %s223 = int_to_ptr.vmem [resolvable:$true] %s222
          %228 = dma.hbm_to_vmem [thread:$0]  %s221, 2048, %s223, [#allocation6], 128, 128, 8
        $region16: #{tpu_custom_call.1} parent=11 // pred_fallthru
          _
        // Predicated region
        $region17: #{tpu_custom_call.1} parent=11 // pred_check
          %p229 = pneg %p90
        $region18: #{tpu_custom_call.1} parent=11 // pred_check_branch
          %231 = sbr.rel (%p229) target = $region20
        $region19: #{tpu_custom_call.1} parent=11 // pred_region
          %233 = vsyncadd [#allocation6], 0
          %s235 = sshll.u32 %s2, 4
          %s236 = int_to_ptr.hbm [resolvable:$true] %s235
          %s237 = sshll.u32 [#allocation7], 4
          %s238 = int_to_ptr.vmem [resolvable:$true] %s237
          %240 = dma.hbm_to_vmem [thread:$0]  %s236, 32, %s238, [#allocation6]
        $region20: #{tpu_custom_call.1} parent=11 // pred_fallthru
          _
        // Predicated region
        $region21: #{tpu_custom_call.1} parent=11 // pred_check
          %p241 = pneg %p111
        $region22: #{tpu_custom_call.1} parent=11 // pred_check_branch
          %243 = sbr.rel (%p241) target = $region24
        $region23: #{tpu_custom_call.1} parent=11 // pred_region
          %245 = vsyncadd [#allocation9], 0
          %s246 = sshll.u32 %s3, 4
          %s247 = int_to_ptr.hbm [resolvable:$true] %s246
          %s248 = sshll.u32 [#allocation8], 4
          %s249 = int_to_ptr.vmem [resolvable:$true] %s248
          %254 = dma.hbm_to_vmem [thread:$0]  %s247, 8192, %s249, [#allocation9], 256, 256, 16
        $region24: #{tpu_custom_call.1} parent=11 // pred_fallthru
          _
        // Predicated region
        $region25: #{tpu_custom_call.1} parent=11 // pred_check
          %p255 = pneg %p132
        $region26: #{tpu_custom_call.1} parent=11 // pred_check_branch
          %257 = sbr.rel (%p255) target = $region28
        $region27: #{tpu_custom_call.1} parent=11 // pred_region
          %259 = vsyncadd [#allocation9], 0
          %s261 = sshll.u32 %s4, 4
          %s262 = int_to_ptr.hbm [resolvable:$true] %s261
          %s263 = sshll.u32 [#allocation10], 4
          %s264 = int_to_ptr.vmem [resolvable:$true] %s263
          %266 = dma.hbm_to_vmem [thread:$0]  %s262, 64, %s264, [#allocation9]
        $region28: #{tpu_custom_call.1} parent=11 // pred_fallthru
          _
        // Predicated region
        $region29: #{tpu_custom_call.1} parent=11 // pred_check
          %p267 = pneg %p153
        $region30: #{tpu_custom_call.1} parent=11 // pred_check_branch
          %269 = sbr.rel (%p267) target = $region32
        $region31: #{tpu_custom_call.1} parent=11 // pred_region
          %271 = vsyncadd [#allocation12], 0
          %s272 = sshll.u32 %s5, 4
          %s273 = int_to_ptr.hbm [resolvable:$true] %s272
          %s274 = sshll.u32 [#allocation11], 4
          %s275 = int_to_ptr.vmem [resolvable:$true] %s274
          %280 = dma.hbm_to_vmem [thread:$0]  %s273, 28672, %s275, [#allocation12], 448, 448, 28
        $region32: #{tpu_custom_call.1} parent=11 // pred_fallthru
          _
        // Predicated region
        $region33: #{tpu_custom_call.1} parent=11 // pred_check
          %p281 = pneg %p174
        $region34: #{tpu_custom_call.1} parent=11 // pred_check_branch
          %283 = sbr.rel (%p281) target = $region36
        $region35: #{tpu_custom_call.1} parent=11 // pred_region
          %285 = vsyncadd [#allocation12], 0
          %s287 = sshll.u32 %s6, 4
          %s288 = int_to_ptr.hbm [resolvable:$true] %s287
          %s289 = sshll.u32 [#allocation13], 4
          %s290 = int_to_ptr.vmem [resolvable:$true] %s289
          %292 = dma.hbm_to_vmem [thread:$0]  %s288, 112, %s290, [#allocation12]
        $region36: #{tpu_custom_call.1} parent=11 // pred_fallthru
          _
      $region12: #{tpu_custom_call.1} parent=5 // pred_fallthru
        _
      %p293 = scmp.lt.s32.totalorder %s22, 2
      // Predicated region
      $region37: #{tpu_custom_call.1} parent=5 // pred_check
        %p294 = pneg %p293
      $region38: #{tpu_custom_call.1} parent=5 // pred_check_branch
        %296 = sbr.rel (%p294) target = $region40
      $region39: #{tpu_custom_call.1} parent=5 // pred_region
        // Predicated region
        $region41: #{tpu_custom_call.1} parent=39 // pred_check
          %p297 = pneg %p42
        $region42: #{tpu_custom_call.1} parent=39 // pred_check_branch
          %299 = sbr.rel (%p297) target = $region44
        $region43: #{tpu_custom_call.1} parent=39 // pred_region
          %s300 = sand.u32 %s32, 1
          %s301 = scalar_lea.sflag [#allocation3], %s300
          %s302 = sand.u32 %s32, 1
          %s303 = smul.addr %s302, 64
          %s304 = scalar_lea.vmem [#allocation2], %s303
          %s305 = smul.u32 16, %s22
          %307 = vsyncadd %s301, 0
          %s308 = smul.addr %s305, 4
          %s309 = scalar_lea.hbm %s0, %s308
          %s310 = sshll.u32 %s309, 4
          %s311 = int_to_ptr.hbm [resolvable:$true] %s310
          %s312 = sshll.u32 %s304, 4
          %s313 = int_to_ptr.vmem [resolvable:$true] %s312
          %318 = dma.hbm_to_vmem [thread:$0]  %s311, 1024, %s313, %s301, 64, 64, 4
        $region44: #{tpu_custom_call.1} parent=39 // pred_fallthru
          _
      $region40: #{tpu_custom_call.1} parent=5 // pred_fallthru
        _
      %p319 = scmp.le.s32.totalorder 1, %s22
      %p320 = scmp.lt.s32.totalorder %s22, 3
      %p321 = pnand %p319, %p320
      %p322 = pneg %p321
      // Predicated region
      $region45: #{tpu_custom_call.1} parent=5 // pred_check
        _
      $region46: #{tpu_custom_call.1} parent=5 // pred_check_branch
        %324 = sbr.rel (%p321) target = $region48
      $region47: #{tpu_custom_call.1} parent=5 // pred_region
        %s325 = ssub.s32 %s22, 1
        %s326 = sand.u32 %s35, 1
        %s327 = scalar_lea.sflag [#allocation3], %s326
        %s328 = sand.u32 %s35, 1
        %s329 = smul.addr %s328, 64
        %s330 = scalar_lea.vmem [#allocation2], %s329
        // Predicated region
        $region49: #{tpu_custom_call.1} parent=47 // pred_check
          %p331 = pneg %p48
        $region50: #{tpu_custom_call.1} parent=47 // pred_check_branch
          %333 = sbr.rel (%p331) target = $region52
        $region51: #{tpu_custom_call.1} parent=47 // pred_region
          %335 = dma.done %s327, 1024
        $region52: #{tpu_custom_call.1} parent=47 // pred_fallthru
          _
        // Predicated region
        $region53: #{tpu_custom_call.1} parent=47 // pred_check
          %p336 = pneg %p69
        $region54: #{tpu_custom_call.1} parent=47 // pred_check_branch
          %338 = sbr.rel (%p336) target = $region56
        $region55: #{tpu_custom_call.1} parent=47 // pred_region
          %340 = dma.done [#allocation6], 2048
        $region56: #{tpu_custom_call.1} parent=47 // pred_fallthru
          _
        // Predicated region
        $region57: #{tpu_custom_call.1} parent=47 // pred_check
          %p341 = pneg %p90
        $region58: #{tpu_custom_call.1} parent=47 // pred_check_branch
          %343 = sbr.rel (%p341) target = $region60
        $region59: #{tpu_custom_call.1} parent=47 // pred_region
          %345 = dma.done [#allocation6], 32
        $region60: #{tpu_custom_call.1} parent=47 // pred_fallthru
          _
        // Predicated region
        $region61: #{tpu_custom_call.1} parent=47 // pred_check
          %p346 = pneg %p111
        $region62: #{tpu_custom_call.1} parent=47 // pred_check_branch
          %348 = sbr.rel (%p346) target = $region64
        $region63: #{tpu_custom_call.1} parent=47 // pred_region
          %350 = dma.done [#allocation9], 8192
        $region64: #{tpu_custom_call.1} parent=47 // pred_fallthru
          _
        // Predicated region
        $region65: #{tpu_custom_call.1} parent=47 // pred_check
          %p351 = pneg %p132
        $region66: #{tpu_custom_call.1} parent=47 // pred_check_branch
          %353 = sbr.rel (%p351) target = $region68
        $region67: #{tpu_custom_call.1} parent=47 // pred_region
          %355 = dma.done [#allocation9], 64
        $region68: #{tpu_custom_call.1} parent=47 // pred_fallthru
          _
        // Predicated region
        $region69: #{tpu_custom_call.1} parent=47 // pred_check
          %p356 = pneg %p153
        $region70: #{tpu_custom_call.1} parent=47 // pred_check_branch
          %358 = sbr.rel (%p356) target = $region72
        $region71: #{tpu_custom_call.1} parent=47 // pred_region
          %360 = dma.done [#allocation12], 28672
        $region72: #{tpu_custom_call.1} parent=47 // pred_fallthru
          _
        // Predicated region
        $region73: #{tpu_custom_call.1} parent=47 // pred_check
          %p361 = pneg %p174
        $region74: #{tpu_custom_call.1} parent=47 // pred_check_branch
          %363 = sbr.rel (%p361) target = $region76
        $region75: #{tpu_custom_call.1} parent=47 // pred_region
          %365 = dma.done [#allocation12], 112
        $region76: #{tpu_custom_call.1} parent=47 // pred_fallthru
          _
        %s366 = sand.u32 %s35, 1
        %s367 = scalar_lea.sflag [#allocation3], %s366
        %s368 = sand.u32 %s35, 1
        %s369 = smul.addr %s368, 64
        %s370 = scalar_lea.vmem [#allocation2], %s369
        %p371 = pneg %p48
        %p372 = pneg %p45
        %p373 = pneg %p69
        %p374 = pneg %p66
        %p375 = pneg %p90
        %p376 = pneg %p87
        %p377 = pneg %p111
        %p378 = pneg %p108
        %p379 = pneg %p132
        %p380 = pneg %p129
        %p381 = pneg %p153
        %p382 = pneg %p150
        %p383 = pneg %p174
        %p384 = pneg %p171
        %p385 = pneg %p200
        %p386 = pneg %p197
        %s387 = sand.u32 %s187, 1
        %s388 = scalar_lea.sflag [#allocation4], %s387
        %s389 = sand.u32 %s187, 1
        %s390 = smul.addr %s389, 896
        %s391 = scalar_lea.vmem [#allocation14], %s390
        %s392 = smul.u32 16, %s27
        %s393 = smul.u32 16, %s27
        %v394 = vld [vmem:[%s330] sm:$0xf]
        %v395 = vld [vmem:[%s330 + $0x4] sm:$0xf]
        %v396 = vld [vmem:[%s330 + $0x8] sm:$0xf]
        %v397 = vld [vmem:[%s330 + $0xc] sm:$0xf]
        %v398 = vld [vmem:[%s330 + $0x10] sm:$0xf]
        %v399 = vld [vmem:[%s330 + $0x14] sm:$0xf]
        %v400 = vld [vmem:[%s330 + $0x18] sm:$0xf]
        %v401 = vld [vmem:[%s330 + $0x1c] sm:$0xf]
        %v402 = vld [vmem:[%s330 + $0x20] sm:$0xf]
        %v403 = vld [vmem:[%s330 + $0x24] sm:$0xf]
        %v404 = vld [vmem:[%s330 + $0x28] sm:$0xf]
        %v405 = vld [vmem:[%s330 + $0x2c] sm:$0xf]
        %v406 = vld [vmem:[%s330 + $0x30] sm:$0xf]
        %v407 = vld [vmem:[%s330 + $0x34] sm:$0xf]
        %v408 = vld [vmem:[%s330 + $0x38] sm:$0xf]
        %v409 = vld [vmem:[%s330 + $0x3c] sm:$0xf]
        %v410 = vld [vmem:[#allocation5] sm:$0xff]
        %v411 = vld [vmem:[#allocation5 + $0x8] sm:$0xff]
        %v412 = vld [vmem:[#allocation5 + $0x10] sm:$0xff]
        %v413 = vld [vmem:[#allocation5 + $0x18] sm:$0xff]
        %v414 = vld [vmem:[#allocation5 + $0x20] sm:$0xff]
        %v415 = vld [vmem:[#allocation5 + $0x28] sm:$0xff]
        %v416 = vld [vmem:[#allocation5 + $0x30] sm:$0xff]
        %v417 = vld [vmem:[#allocation5 + $0x38] sm:$0xff]
        %v418 = vld [vmem:[#allocation5 + $0x40] sm:$0xff]
        %v419 = vld [vmem:[#allocation5 + $0x48] sm:$0xff]
        %v420 = vld [vmem:[#allocation5 + $0x50] sm:$0xff]
        %v421 = vld [vmem:[#allocation5 + $0x58] sm:$0xff]
        %v422 = vld [vmem:[#allocation5 + $0x60] sm:$0xff]
        %v423 = vld [vmem:[#allocation5 + $0x68] sm:$0xff]
        %v424 = vld [vmem:[#allocation5 + $0x70] sm:$0xff]
        %v425 = vld [vmem:[#allocation5 + $0x78] sm:$0xff]
        %v426 = vld [vmem:[#allocation7] sm:$0x3]
        %v428 = vperm.slane %v426, 0
        %v429 = vperm.slane %v426, 1
        %v448 = vunpack.c.l.b16 %v394
        %v449 = vunpack.c.l.b16 %v395
        %v450 = vunpack.c.l.b16 %v396
        %v451 = vunpack.c.l.b16 %v397
        %v452 = vunpack.c.l.b16 %v398
        %v453 = vunpack.c.l.b16 %v399
        %v454 = vunpack.c.l.b16 %v400
        %v455 = vunpack.c.l.b16 %v401
        %v456 = vunpack.c.l.b16 %v402
        %v457 = vunpack.c.l.b16 %v403
        %v458 = vunpack.c.l.b16 %v404
        %v459 = vunpack.c.l.b16 %v405
        %v460 = vunpack.c.l.b16 %v406
        %v461 = vunpack.c.l.b16 %v407
        %v462 = vunpack.c.l.b16 %v408
        %v463 = vunpack.c.l.b16 %v409
        %v464 = vpack.c.b16 %v449, %v448
        %v465 = vpack.c.b16 %v451, %v450
        %v466 = vpack.c.b16 %v453, %v452
        %v467 = vpack.c.b16 %v455, %v454
        %v468 = vpack.c.b16 %v457, %v456
        %v469 = vpack.c.b16 %v459, %v458
        %v470 = vpack.c.b16 %v461, %v460
        %v471 = vpack.c.b16 %v463, %v462
        %v496 = vunpack.c.l.b16 %v410
        %v497 = vunpack.c.h.b16 %v410
        %v498 = vunpack.c.l.b16 %v411
        %v499 = vunpack.c.h.b16 %v411
        %v500 = vunpack.c.l.b16 %v412
        %v501 = vunpack.c.h.b16 %v412
        %v502 = vunpack.c.l.b16 %v413
        %v503 = vunpack.c.h.b16 %v413
        %v504 = vunpack.c.l.b16 %v414
        %v505 = vunpack.c.h.b16 %v414
        %v506 = vunpack.c.l.b16 %v415
        %v507 = vunpack.c.h.b16 %v415
        %v508 = vunpack.c.l.b16 %v416
        %v509 = vunpack.c.h.b16 %v416
        %v510 = vunpack.c.l.b16 %v417
        %v511 = vunpack.c.h.b16 %v417
        %v512 = vunpack.c.l.b16 %v418
        %v513 = vunpack.c.h.b16 %v418
        %v514 = vunpack.c.l.b16 %v419
        %v515 = vunpack.c.h.b16 %v419
        %v516 = vunpack.c.l.b16 %v420
        %v517 = vunpack.c.h.b16 %v420
        %v518 = vunpack.c.l.b16 %v421
        %v519 = vunpack.c.h.b16 %v421
        %v520 = vunpack.c.l.b16 %v422
        %v521 = vunpack.c.h.b16 %v422
        %v522 = vunpack.c.l.b16 %v423
        %v523 = vunpack.c.h.b16 %v423
        %v524 = vunpack.c.l.b16 %v424
        %v525 = vunpack.c.h.b16 %v424
        %v526 = vunpack.c.l.b16 %v425
        %v527 = vunpack.c.h.b16 %v425
        %v528 = vpack.c.b16 %v498, %v496
        %v529 = vpack.c.b16 %v499, %v497
        %v530 = vpack.c.b16 %v502, %v500
        %v531 = vpack.c.b16 %v503, %v501
        %v532 = vpack.c.b16 %v506, %v504
        %v533 = vpack.c.b16 %v507, %v505
        %v534 = vpack.c.b16 %v510, %v508
        %v535 = vpack.c.b16 %v511, %v509
        %v536 = vpack.c.b16 %v514, %v512
        %v537 = vpack.c.b16 %v515, %v513
        %v538 = vpack.c.b16 %v518, %v516
        %v539 = vpack.c.b16 %v519, %v517
        %v540 = vpack.c.b16 %v522, %v520
        %v541 = vpack.c.b16 %v523, %v521
        %v542 = vpack.c.b16 %v526, %v524
        %v543 = vpack.c.b16 %v527, %v525
        %560 = vmatpush.bf16.msra.mxu0 %v542
        %561 = vmatpush.bf16.msra.mxu0 %v540
        %562 = vmatpush.bf16.msra.mxu0 %v538
        %563 = vmatpush.bf16.msra.mxu0 %v536
        %564 = vmatpush.bf16.msra.mxu0 %v534
        %565 = vmatpush.bf16.msra.mxu0 %v532
        %566 = vmatpush.bf16.msra.mxu0 %v530
        %567 = vmatpush.bf16.msra.mxu0 %v528
        %568 = vmatmul.bf16.gmra.mxu0 %v464
        %v569 = vpop.f32.mrf.mxu0
        %v570 = vadd.f32 %v428, %v569
        %v571 = vpop.f32.mrf.mxu0
        %v572 = vadd.f32 %v428, %v571
        %573 = vmatmul.bf16.gmra.mxu0 %v465
        %v574 = vpop.f32.mrf.mxu0
        %v575 = vadd.f32 %v428, %v574
        %v576 = vpop.f32.mrf.mxu0
        %v577 = vadd.f32 %v428, %v576
        %578 = vmatmul.bf16.gmra.mxu0 %v466
        %v579 = vpop.f32.mrf.mxu0
        %v580 = vadd.f32 %v428, %v579
        %v581 = vpop.f32.mrf.mxu0
        %v582 = vadd.f32 %v428, %v581
        %583 = vmatmul.bf16.gmra.mxu0 %v467
        %v584 = vpop.f32.mrf.mxu0
        %v585 = vadd.f32 %v428, %v584
        %v586 = vpop.f32.mrf.mxu0
        %v587 = vadd.f32 %v428, %v586
        %588 = vmatmul.bf16.gmra.mxu0 %v468
        %v589 = vpop.f32.mrf.mxu0
        %v590 = vadd.f32 %v428, %v589
        %v591 = vpop.f32.mrf.mxu0
        %v592 = vadd.f32 %v428, %v591
        %593 = vmatmul.bf16.gmra.mxu0 %v469
        %v594 = vpop.f32.mrf.mxu0
        %v595 = vadd.f32 %v428, %v594
        %v596 = vpop.f32.mrf.mxu0
        %v597 = vadd.f32 %v428, %v596
        %598 = vmatmul.bf16.gmra.mxu0 %v470
        %v599 = vpop.f32.mrf.mxu0
        %v600 = vadd.f32 %v428, %v599
        %v601 = vpop.f32.mrf.mxu0
        %v602 = vadd.f32 %v428, %v601
        %603 = vmatmul.bf16.gmra.mxu0 %v471
        %v604 = vpop.f32.mrf.mxu0
        %v605 = vadd.f32 %v428, %v604
        %v606 = vpop.f32.mrf.mxu0
        %v607 = vadd.f32 %v428, %v606
        %608 = vdwg.mxu0
        %609 = vmatpush.bf16.msra.mxu0 %v543
        %610 = vmatpush.bf16.msra.mxu0 %v541
        %611 = vmatpush.bf16.msra.mxu0 %v539
        %612 = vmatpush.bf16.msra.mxu0 %v537
        %613 = vmatpush.bf16.msra.mxu0 %v535
        %614 = vmatpush.bf16.msra.mxu0 %v533
        %615 = vmatpush.bf16.msra.mxu0 %v531
        %616 = vmatpush.bf16.msra.mxu0 %v529
        %617 = vmatmul.bf16.gmra.mxu0 %v464
        %v618 = vpop.f32.mrf.mxu0
        %v619 = vadd.f32 %v429, %v618
        %v620 = vpop.f32.mrf.mxu0
        %v621 = vadd.f32 %v429, %v620
        %622 = vmatmul.bf16.gmra.mxu0 %v465
        %v623 = vpop.f32.mrf.mxu0
        %v624 = vadd.f32 %v429, %v623
        %v625 = vpop.f32.mrf.mxu0
        %v626 = vadd.f32 %v429, %v625
        %627 = vmatmul.bf16.gmra.mxu0 %v466
        %v628 = vpop.f32.mrf.mxu0
        %v629 = vadd.f32 %v429, %v628
        %v630 = vpop.f32.mrf.mxu0
        %v631 = vadd.f32 %v429, %v630
        %632 = vmatmul.bf16.gmra.mxu0 %v467
        %v633 = vpop.f32.mrf.mxu0
        %v634 = vadd.f32 %v429, %v633
        %v635 = vpop.f32.mrf.mxu0
        %v636 = vadd.f32 %v429, %v635
        %637 = vmatmul.bf16.gmra.mxu0 %v468
        %v638 = vpop.f32.mrf.mxu0
        %v639 = vadd.f32 %v429, %v638
        %v640 = vpop.f32.mrf.mxu0
        %v641 = vadd.f32 %v429, %v640
        %642 = vmatmul.bf16.gmra.mxu0 %v469
        %v643 = vpop.f32.mrf.mxu0
        %v644 = vadd.f32 %v429, %v643
        %v645 = vpop.f32.mrf.mxu0
        %v646 = vadd.f32 %v429, %v645
        %647 = vmatmul.bf16.gmra.mxu0 %v470
        %v648 = vpop.f32.mrf.mxu0
        %v649 = vadd.f32 %v429, %v648
        %v650 = vpop.f32.mrf.mxu0
        %v651 = vadd.f32 %v429, %v650
        %652 = vmatmul.bf16.gmra.mxu0 %v471
        %v653 = vpop.f32.mrf.mxu0
        %v654 = vadd.f32 %v429, %v653
        %v655 = vpop.f32.mrf.mxu0
        %v656 = vadd.f32 %v429, %v655
        %657 = vdwg.mxu0
        %v658 = vmax.f32 %v570, 0.0
        %v659 = vmax.f32 %v619, 0.0
        %v660 = vmax.f32 %v572, 0.0
        %v661 = vmax.f32 %v621, 0.0
        %v662 = vmax.f32 %v575, 0.0
        %v663 = vmax.f32 %v624, 0.0
        %v664 = vmax.f32 %v577, 0.0
        %v665 = vmax.f32 %v626, 0.0
        %v666 = vmax.f32 %v580, 0.0
        %v667 = vmax.f32 %v629, 0.0
        %v668 = vmax.f32 %v582, 0.0
        %v669 = vmax.f32 %v631, 0.0
        %v670 = vmax.f32 %v585, 0.0
        %v671 = vmax.f32 %v634, 0.0
        %v672 = vmax.f32 %v587, 0.0
        %v673 = vmax.f32 %v636, 0.0
        %v674 = vmax.f32 %v590, 0.0
        %v675 = vmax.f32 %v639, 0.0
        %v676 = vmax.f32 %v592, 0.0
        %v677 = vmax.f32 %v641, 0.0
        %v678 = vmax.f32 %v595, 0.0
        %v679 = vmax.f32 %v644, 0.0
        %v680 = vmax.f32 %v597, 0.0
        %v681 = vmax.f32 %v646, 0.0
        %v682 = vmax.f32 %v600, 0.0
        %v683 = vmax.f32 %v649, 0.0
        %v684 = vmax.f32 %v602, 0.0
        %v685 = vmax.f32 %v651, 0.0
        %v686 = vmax.f32 %v605, 0.0
        %v687 = vmax.f32 %v654, 0.0
        %v688 = vmax.f32 %v607, 0.0
        %v689 = vmax.f32 %v656, 0.0
        %v690 = vpack.c.bf16 %v660, %v658
        %v691 = vpack.c.bf16 %v661, %v659
        %v692 = vpack.c.bf16 %v664, %v662
        %v693 = vpack.c.bf16 %v665, %v663
        %v694 = vpack.c.bf16 %v668, %v666
        %v695 = vpack.c.bf16 %v669, %v667
        %v696 = vpack.c.bf16 %v672, %v670
        %v697 = vpack.c.bf16 %v673, %v671
        %v698 = vpack.c.bf16 %v676, %v674
        %v699 = vpack.c.bf16 %v677, %v675
        %v700 = vpack.c.bf16 %v680, %v678
        %v701 = vpack.c.bf16 %v681, %v679
        %v702 = vpack.c.bf16 %v684, %v682
        %v703 = vpack.c.bf16 %v685, %v683
        %v704 = vpack.c.bf16 %v688, %v686
        %v705 = vpack.c.bf16 %v689, %v687
        %v706 = vld [vmem:[#allocation8] sm:$0xff]
        %v707 = vld [vmem:[#allocation8 + $0x8] sm:$0xff]
        %v708 = vld [vmem:[#allocation8 + $0x10] sm:$0xff]
        %v709 = vld [vmem:[#allocation8 + $0x18] sm:$0xff]
        %v710 = vld [vmem:[#allocation8 + $0x20] sm:$0xff]
        %v711 = vld [vmem:[#allocation8 + $0x28] sm:$0xff]
        %v712 = vld [vmem:[#allocation8 + $0x30] sm:$0xff]
        %v713 = vld [vmem:[#allocation8 + $0x38] sm:$0xff]
        %v714 = vld [vmem:[#allocation8 + $0x40] sm:$0xff]
        %v715 = vld [vmem:[#allocation8 + $0x48] sm:$0xff]
        %v716 = vld [vmem:[#allocation8 + $0x50] sm:$0xff]
        %v717 = vld [vmem:[#allocation8 + $0x58] sm:$0xff]
        %v718 = vld [vmem:[#allocation8 + $0x60] sm:$0xff]
        %v719 = vld [vmem:[#allocation8 + $0x68] sm:$0xff]
        %v720 = vld [vmem:[#allocation8 + $0x70] sm:$0xff]
        %v721 = vld [vmem:[#allocation8 + $0x78] sm:$0xff]
        %v722 = vld [vmem:[#allocation8 + $0x80] sm:$0xff]
        %v723 = vld [vmem:[#allocation8 + $0x88] sm:$0xff]
        %v724 = vld [vmem:[#allocation8 + $0x90] sm:$0xff]
        %v725 = vld [vmem:[#allocation8 + $0x98] sm:$0xff]
        %v726 = vld [vmem:[#allocation8 + $0xa0] sm:$0xff]
        %v727 = vld [vmem:[#allocation8 + $0xa8] sm:$0xff]
        %v728 = vld [vmem:[#allocation8 + $0xb0] sm:$0xff]
        %v729 = vld [vmem:[#allocation8 + $0xb8] sm:$0xff]
        %v730 = vld [vmem:[#allocation8 + $0xc0] sm:$0xff]
        %v731 = vld [vmem:[#allocation8 + $0xc8] sm:$0xff]
        %v732 = vld [vmem:[#allocation8 + $0xd0] sm:$0xff]
        %v733 = vld [vmem:[#allocation8 + $0xd8] sm:$0xff]
        %v734 = vld [vmem:[#allocation8 + $0xe0] sm:$0xff]
        %v735 = vld [vmem:[#allocation8 + $0xe8] sm:$0xff]
        %v736 = vld [vmem:[#allocation8 + $0xf0] sm:$0xff]
        %v737 = vld [vmem:[#allocation8 + $0xf8] sm:$0xff]
        %v738 = vld [vmem:[#allocation8 + $0x100] sm:$0xff]
        %v739 = vld [vmem:[#allocation8 + $0x108] sm:$0xff]
        %v740 = vld [vmem:[#allocation8 + $0x110] sm:$0xff]
        %v741 = vld [vmem:[#allocation8 + $0x118] sm:$0xff]
        %v742 = vld [vmem:[#allocation8 + $0x120] sm:$0xff]
        %v743 = vld [vmem:[#allocation8 + $0x128] sm:$0xff]
        %v744 = vld [vmem:[#allocation8 + $0x130] sm:$0xff]
        %v745 = vld [vmem:[#allocation8 + $0x138] sm:$0xff]
        %v746 = vld [vmem:[#allocation8 + $0x140] sm:$0xff]
        %v747 = vld [vmem:[#allocation8 + $0x148] sm:$0xff]
        %v748 = vld [vmem:[#allocation8 + $0x150] sm:$0xff]
        %v749 = vld [vmem:[#allocation8 + $0x158] sm:$0xff]
        %v750 = vld [vmem:[#allocation8 + $0x160] sm:$0xff]
        %v751 = vld [vmem:[#allocation8 + $0x168] sm:$0xff]
        %v752 = vld [vmem:[#allocation8 + $0x170] sm:$0xff]
        %v753 = vld [vmem:[#allocation8 + $0x178] sm:$0xff]
        %v754 = vld [vmem:[#allocation8 + $0x180] sm:$0xff]
        %v755 = vld [vmem:[#allocation8 + $0x188] sm:$0xff]
        %v756 = vld [vmem:[#allocation8 + $0x190] sm:$0xff]
        %v757 = vld [vmem:[#allocation8 + $0x198] sm:$0xff]
        %v758 = vld [vmem:[#allocation8 + $0x1a0] sm:$0xff]
        %v759 = vld [vmem:[#allocation8 + $0x1a8] sm:$0xff]
        %v760 = vld [vmem:[#allocation8 + $0x1b0] sm:$0xff]
        %v761 = vld [vmem:[#allocation8 + $0x1b8] sm:$0xff]
        %v762 = vld [vmem:[#allocation8 + $0x1c0] sm:$0xff]
        %v763 = vld [vmem:[#allocation8 + $0x1c8] sm:$0xff]
        %v764 = vld [vmem:[#allocation8 + $0x1d0] sm:$0xff]
        %v765 = vld [vmem:[#allocation8 + $0x1d8] sm:$0xff]
        %v766 = vld [vmem:[#allocation8 + $0x1e0] sm:$0xff]
        %v767 = vld [vmem:[#allocation8 + $0x1e8] sm:$0xff]
        %v768 = vld [vmem:[#allocation8 + $0x1f0] sm:$0xff]
        %v769 = vld [vmem:[#allocation8 + $0x1f8] sm:$0xff]
        %v770 = vld [vmem:[#allocation10] sm:$0xf]
        %v772 = vperm.slane %v770, 0
        %v773 = vperm.slane %v770, 1
        %v774 = vperm.slane %v770, 2
        %v775 = vperm.slane %v770, 3
        %v844 = vunpack.c.l.b16 %v706
        %v845 = vunpack.c.h.b16 %v706
        %v846 = vunpack.c.l.b16 %v707
        %v847 = vunpack.c.h.b16 %v707
        %v848 = vunpack.c.l.b16 %v708
        %v849 = vunpack.c.h.b16 %v708
        %v850 = vunpack.c.l.b16 %v709
        %v851 = vunpack.c.h.b16 %v709
        %v852 = vunpack.c.l.b16 %v710
        %v853 = vunpack.c.h.b16 %v710
        %v854 = vunpack.c.l.b16 %v711
        %v855 = vunpack.c.h.b16 %v711
        %v856 = vunpack.c.l.b16 %v712
        %v857 = vunpack.c.h.b16 %v712
        %v858 = vunpack.c.l.b16 %v713
        %v859 = vunpack.c.h.b16 %v713
        %v860 = vunpack.c.l.b16 %v714
        %v861 = vunpack.c.h.b16 %v714
        %v862 = vunpack.c.l.b16 %v715
        %v863 = vunpack.c.h.b16 %v715
        %v864 = vunpack.c.l.b16 %v716
        %v865 = vunpack.c.h.b16 %v716
        %v866 = vunpack.c.l.b16 %v717
        %v867 = vunpack.c.h.b16 %v717
        %v868 = vunpack.c.l.b16 %v718
        %v869 = vunpack.c.h.b16 %v718
        %v870 = vunpack.c.l.b16 %v719
        %v871 = vunpack.c.h.b16 %v719
        %v872 = vunpack.c.l.b16 %v720
        %v873 = vunpack.c.h.b16 %v720
        %v874 = vunpack.c.l.b16 %v721
        %v875 = vunpack.c.h.b16 %v721
        %v876 = vunpack.c.l.b16 %v722
        %v877 = vunpack.c.h.b16 %v722
        %v878 = vunpack.c.l.b16 %v723
        %v879 = vunpack.c.h.b16 %v723
        %v880 = vunpack.c.l.b16 %v724
        %v881 = vunpack.c.h.b16 %v724
        %v882 = vunpack.c.l.b16 %v725
        %v883 = vunpack.c.h.b16 %v725
        %v884 = vunpack.c.l.b16 %v726
        %v885 = vunpack.c.h.b16 %v726
        %v886 = vunpack.c.l.b16 %v727
        %v887 = vunpack.c.h.b16 %v727
        %v888 = vunpack.c.l.b16 %v728
        %v889 = vunpack.c.h.b16 %v728
        %v890 = vunpack.c.l.b16 %v729
        %v891 = vunpack.c.h.b16 %v729
        %v892 = vunpack.c.l.b16 %v730
        %v893 = vunpack.c.h.b16 %v730
        %v894 = vunpack.c.l.b16 %v731
        %v895 = vunpack.c.h.b16 %v731
        %v896 = vunpack.c.l.b16 %v732
        %v897 = vunpack.c.h.b16 %v732
        %v898 = vunpack.c.l.b16 %v733
        %v899 = vunpack.c.h.b16 %v733
        %v900 = vunpack.c.l.b16 %v734
        %v901 = vunpack.c.h.b16 %v734
        %v902 = vunpack.c.l.b16 %v735
        %v903 = vunpack.c.h.b16 %v735
        %v904 = vunpack.c.l.b16 %v736
        %v905 = vunpack.c.h.b16 %v736
        %v906 = vunpack.c.l.b16 %v737
        %v907 = vunpack.c.h.b16 %v737
        %v908 = vunpack.c.l.b16 %v738
        %v909 = vunpack.c.h.b16 %v738
        %v910 = vunpack.c.l.b16 %v739
        %v911 = vunpack.c.h.b16 %v739
        %v912 = vunpack.c.l.b16 %v740
        %v913 = vunpack.c.h.b16 %v740
        %v914 = vunpack.c.l.b16 %v741
        %v915 = vunpack.c.h.b16 %v741
        %v916 = vunpack.c.l.b16 %v742
        %v917 = vunpack.c.h.b16 %v742
        %v918 = vunpack.c.l.b16 %v743
        %v919 = vunpack.c.h.b16 %v743
        %v920 = vunpack.c.l.b16 %v744
        %v921 = vunpack.c.h.b16 %v744
        %v922 = vunpack.c.l.b16 %v745
        %v923 = vunpack.c.h.b16 %v745
        %v924 = vunpack.c.l.b16 %v746
        %v925 = vunpack.c.h.b16 %v746
        %v926 = vunpack.c.l.b16 %v747
        %v927 = vunpack.c.h.b16 %v747
        %v928 = vunpack.c.l.b16 %v748
        %v929 = vunpack.c.h.b16 %v748
        %v930 = vunpack.c.l.b16 %v749
        %v931 = vunpack.c.h.b16 %v749
        %v932 = vunpack.c.l.b16 %v750
        %v933 = vunpack.c.h.b16 %v750
        %v934 = vunpack.c.l.b16 %v751
        %v935 = vunpack.c.h.b16 %v751
        %v936 = vunpack.c.l.b16 %v752
        %v937 = vunpack.c.h.b16 %v752
        %v938 = vunpack.c.l.b16 %v753
        %v939 = vunpack.c.h.b16 %v753
        %v940 = vunpack.c.l.b16 %v754
        %v941 = vunpack.c.h.b16 %v754
        %v942 = vunpack.c.l.b16 %v755
        %v943 = vunpack.c.h.b16 %v755
        %v944 = vunpack.c.l.b16 %v756
        %v945 = vunpack.c.h.b16 %v756
        %v946 = vunpack.c.l.b16 %v757
        %v947 = vunpack.c.h.b16 %v757
        %v948 = vunpack.c.l.b16 %v758
        %v949 = vunpack.c.h.b16 %v758
        %v950 = vunpack.c.l.b16 %v759
        %v951 = vunpack.c.h.b16 %v759
        %v952 = vunpack.c.l.b16 %v760
        %v953 = vunpack.c.h.b16 %v760
        %v954 = vunpack.c.l.b16 %v761
        %v955 = vunpack.c.h.b16 %v761
        %v956 = vunpack.c.l.b16 %v762
        %v957 = vunpack.c.h.b16 %v762
        %v958 = vunpack.c.l.b16 %v763
        %v959 = vunpack.c.h.b16 %v763
        %v960 = vunpack.c.l.b16 %v764
        %v961 = vunpack.c.h.b16 %v764
        %v962 = vunpack.c.l.b16 %v765
        %v963 = vunpack.c.h.b16 %v765
        %v964 = vunpack.c.l.b16 %v766
        %v965 = vunpack.c.h.b16 %v766
        %v966 = vunpack.c.l.b16 %v767
        %v967 = vunpack.c.h.b16 %v767
        %v968 = vunpack.c.l.b16 %v768
        %v969 = vunpack.c.h.b16 %v768
        %v970 = vunpack.c.l.b16 %v769
        %v971 = vunpack.c.h.b16 %v769
        %v972 = vpack.c.b16 %v848, %v844
        %v973 = vpack.c.b16 %v849, %v845
        %v974 = vpack.c.b16 %v850, %v846
        %v975 = vpack.c.b16 %v851, %v847
        %v976 = vpack.c.b16 %v856, %v852
        %v977 = vpack.c.b16 %v857, %v853
        %v978 = vpack.c.b16 %v858, %v854
        %v979 = vpack.c.b16 %v859, %v855
        %v980 = vpack.c.b16 %v864, %v860
        %v981 = vpack.c.b16 %v865, %v861
        %v982 = vpack.c.b16 %v866, %v862
        %v983 = vpack.c.b16 %v867, %v863
        %v984 = vpack.c.b16 %v872, %v868
        %v985 = vpack.c.b16 %v873, %v869
        %v986 = vpack.c.b16 %v874, %v870
        %v987 = vpack.c.b16 %v875, %v871
        %v988 = vpack.c.b16 %v880, %v876
        %v989 = vpack.c.b16 %v881, %v877
        %v990 = vpack.c.b16 %v882, %v878
        %v991 = vpack.c.b16 %v883, %v879
        %v992 = vpack.c.b16 %v888, %v884
        %v993 = vpack.c.b16 %v889, %v885
        %v994 = vpack.c.b16 %v890, %v886
        %v995 = vpack.c.b16 %v891, %v887
        %v996 = vpack.c.b16 %v896, %v892
        %v997 = vpack.c.b16 %v897, %v893
        %v998 = vpack.c.b16 %v898, %v894
        %v999 = vpack.c.b16 %v899, %v895
        %v1000 = vpack.c.b16 %v904, %v900
        %v1001 = vpack.c.b16 %v905, %v901
        %v1002 = vpack.c.b16 %v906, %v902
        %v1003 = vpack.c.b16 %v907, %v903
        %v1004 = vpack.c.b16 %v912, %v908
        %v1005 = vpack.c.b16 %v913, %v909
        %v1006 = vpack.c.b16 %v914, %v910
        %v1007 = vpack.c.b16 %v915, %v911
        %v1008 = vpack.c.b16 %v920, %v916
        %v1009 = vpack.c.b16 %v921, %v917
        %v1010 = vpack.c.b16 %v922, %v918
        %v1011 = vpack.c.b16 %v923, %v919
        %v1012 = vpack.c.b16 %v928, %v924
        %v1013 = vpack.c.b16 %v929, %v925
        %v1014 = vpack.c.b16 %v930, %v926
        %v1015 = vpack.c.b16 %v931, %v927
        %v1016 = vpack.c.b16 %v936, %v932
        %v1017 = vpack.c.b16 %v937, %v933
        %v1018 = vpack.c.b16 %v938, %v934
        %v1019 = vpack.c.b16 %v939, %v935
        %v1020 = vpack.c.b16 %v944, %v940
        %v1021 = vpack.c.b16 %v945, %v941
        %v1022 = vpack.c.b16 %v946, %v942
        %v1023 = vpack.c.b16 %v947, %v943
        %v1024 = vpack.c.b16 %v952, %v948
        %v1025 = vpack.c.b16 %v953, %v949
        %v1026 = vpack.c.b16 %v954, %v950
        %v1027 = vpack.c.b16 %v955, %v951
        %v1028 = vpack.c.b16 %v960, %v956
        %v1029 = vpack.c.b16 %v961, %v957
        %v1030 = vpack.c.b16 %v962, %v958
        %v1031 = vpack.c.b16 %v963, %v959
        %v1032 = vpack.c.b16 %v968, %v964
        %v1033 = vpack.c.b16 %v969, %v965
        %v1034 = vpack.c.b16 %v970, %v966
        %v1035 = vpack.c.b16 %v971, %v967
        %1100 = vmatpush.bf16.msra.mxu0 %v1000
        %1101 = vmatpush.bf16.msra.mxu0 %v996
        %1102 = vmatpush.bf16.msra.mxu0 %v992
        %1103 = vmatpush.bf16.msra.mxu0 %v988
        %1104 = vmatpush.bf16.msra.mxu0 %v984
        %1105 = vmatpush.bf16.msra.mxu0 %v980
        %1106 = vmatpush.bf16.msra.mxu0 %v976
        %1107 = vmatpush.bf16.msra.mxu0 %v972
        %1108 = vmatmul.bf16.gmra.mxu0 %v690
        %v1109 = vpop.f32.mrf.mxu0
        %v1110 = vadd.f32 %v772, %v1109
        %v1111 = vpop.f32.mrf.mxu0
        %v1112 = vadd.f32 %v772, %v1111
        %1113 = vmatmul.bf16.gmra.mxu0 %v692
        %v1114 = vpop.f32.mrf.mxu0
        %v1115 = vadd.f32 %v772, %v1114
        %v1116 = vpop.f32.mrf.mxu0
        %v1117 = vadd.f32 %v772, %v1116
        %1118 = vmatmul.bf16.gmra.mxu0 %v694
        %v1119 = vpop.f32.mrf.mxu0
        %v1120 = vadd.f32 %v772, %v1119
        %v1121 = vpop.f32.mrf.mxu0
        %v1122 = vadd.f32 %v772, %v1121
        %1123 = vmatmul.bf16.gmra.mxu0 %v696
        %v1124 = vpop.f32.mrf.mxu0
        %v1125 = vadd.f32 %v772, %v1124
        %v1126 = vpop.f32.mrf.mxu0
        %v1127 = vadd.f32 %v772, %v1126
        %1128 = vmatmul.bf16.gmra.mxu0 %v698
        %v1129 = vpop.f32.mrf.mxu0
        %v1130 = vadd.f32 %v772, %v1129
        %v1131 = vpop.f32.mrf.mxu0
        %v1132 = vadd.f32 %v772, %v1131
        %1133 = vmatmul.bf16.gmra.mxu0 %v700
        %v1134 = vpop.f32.mrf.mxu0
        %v1135 = vadd.f32 %v772, %v1134
        %v1136 = vpop.f32.mrf.mxu0
        %v1137 = vadd.f32 %v772, %v1136
        %1138 = vmatmul.bf16.gmra.mxu0 %v702
        %v1139 = vpop.f32.mrf.mxu0
        %v1140 = vadd.f32 %v772, %v1139
        %v1141 = vpop.f32.mrf.mxu0
        %v1142 = vadd.f32 %v772, %v1141
        %1143 = vmatmul.bf16.gmra.mxu0 %v704
        %v1144 = vpop.f32.mrf.mxu0
        %v1145 = vadd.f32 %v772, %v1144
        %v1146 = vpop.f32.mrf.mxu0
        %v1147 = vadd.f32 %v772, %v1146
        %1148 = vdwg.mxu0
        %1149 = vmatpush.bf16.msra.mxu0 %v1032
        %1150 = vmatpush.bf16.msra.mxu0 %v1028
        %1151 = vmatpush.bf16.msra.mxu0 %v1024
        %1152 = vmatpush.bf16.msra.mxu0 %v1020
        %1153 = vmatpush.bf16.msra.mxu0 %v1016
        %1154 = vmatpush.bf16.msra.mxu0 %v1012
        %1155 = vmatpush.bf16.msra.mxu0 %v1008
        %1156 = vmatpush.bf16.msra.mxu0 %v1004
        %1157 = vmatmul.bf16.gmra.mxu0 %v691
        %v1158 = vpop.f32.mrf.mxu0
        %v1159 = vadd.f32 %v1110, %v1158
        %v1160 = vpop.f32.mrf.mxu0
        %v1161 = vadd.f32 %v1112, %v1160
        %1162 = vmatmul.bf16.gmra.mxu0 %v693
        %v1163 = vpop.f32.mrf.mxu0
        %v1164 = vadd.f32 %v1115, %v1163
        %v1165 = vpop.f32.mrf.mxu0
        %v1166 = vadd.f32 %v1117, %v1165
        %1167 = vmatmul.bf16.gmra.mxu0 %v695
        %v1168 = vpop.f32.mrf.mxu0
        %v1169 = vadd.f32 %v1120, %v1168
        %v1170 = vpop.f32.mrf.mxu0
        %v1171 = vadd.f32 %v1122, %v1170
        %1172 = vmatmul.bf16.gmra.mxu0 %v697
        %v1173 = vpop.f32.mrf.mxu0
        %v1174 = vadd.f32 %v1125, %v1173
        %v1175 = vpop.f32.mrf.mxu0
        %v1176 = vadd.f32 %v1127, %v1175
        %1177 = vmatmul.bf16.gmra.mxu0 %v699
        %v1178 = vpop.f32.mrf.mxu0
        %v1179 = vadd.f32 %v1130, %v1178
        %v1180 = vpop.f32.mrf.mxu0
        %v1181 = vadd.f32 %v1132, %v1180
        %1182 = vmatmul.bf16.gmra.mxu0 %v701
        %v1183 = vpop.f32.mrf.mxu0
        %v1184 = vadd.f32 %v1135, %v1183
        %v1185 = vpop.f32.mrf.mxu0
        %v1186 = vadd.f32 %v1137, %v1185
        %1187 = vmatmul.bf16.gmra.mxu0 %v703
        %v1188 = vpop.f32.mrf.mxu0
        %v1189 = vadd.f32 %v1140, %v1188
        %v1190 = vpop.f32.mrf.mxu0
        %v1191 = vadd.f32 %v1142, %v1190
        %1192 = vmatmul.bf16.gmra.mxu0 %v705
        %v1193 = vpop.f32.mrf.mxu0
        %v1194 = vadd.f32 %v1145, %v1193
        %v1195 = vpop.f32.mrf.mxu0
        %v1196 = vadd.f32 %v1147, %v1195
        %1197 = vdwg.mxu0
        %1198 = vmatpush.bf16.msra.mxu0 %v1001
        %1199 = vmatpush.bf16.msra.mxu0 %v997
        %1200 = vmatpush.bf16.msra.mxu0 %v993
        %1201 = vmatpush.bf16.msra.mxu0 %v989
        %1202 = vmatpush.bf16.msra.mxu0 %v985
        %1203 = vmatpush.bf16.msra.mxu0 %v981
        %1204 = vmatpush.bf16.msra.mxu0 %v977
        %1205 = vmatpush.bf16.msra.mxu0 %v973
        %1206 = vmatmul.bf16.gmra.mxu0 %v690
        %v1207 = vpop.f32.mrf.mxu0
        %v1208 = vadd.f32 %v773, %v1207
        %v1209 = vpop.f32.mrf.mxu0
        %v1210 = vadd.f32 %v773, %v1209
        %1211 = vmatmul.bf16.gmra.mxu0 %v692
        %v1212 = vpop.f32.mrf.mxu0
        %v1213 = vadd.f32 %v773, %v1212
        %v1214 = vpop.f32.mrf.mxu0
        %v1215 = vadd.f32 %v773, %v1214
        %1216 = vmatmul.bf16.gmra.mxu0 %v694
        %v1217 = vpop.f32.mrf.mxu0
        %v1218 = vadd.f32 %v773, %v1217
        %v1219 = vpop.f32.mrf.mxu0
        %v1220 = vadd.f32 %v773, %v1219
        %1221 = vmatmul.bf16.gmra.mxu0 %v696
        %v1222 = vpop.f32.mrf.mxu0
        %v1223 = vadd.f32 %v773, %v1222
        %v1224 = vpop.f32.mrf.mxu0
        %v1225 = vadd.f32 %v773, %v1224
        %1226 = vmatmul.bf16.gmra.mxu0 %v698
        %v1227 = vpop.f32.mrf.mxu0
        %v1228 = vadd.f32 %v773, %v1227
        %v1229 = vpop.f32.mrf.mxu0
        %v1230 = vadd.f32 %v773, %v1229
        %1231 = vmatmul.bf16.gmra.mxu0 %v700
        %v1232 = vpop.f32.mrf.mxu0
        %v1233 = vadd.f32 %v773, %v1232
        %v1234 = vpop.f32.mrf.mxu0
        %v1235 = vadd.f32 %v773, %v1234
        %1236 = vmatmul.bf16.gmra.mxu0 %v702
        %v1237 = vpop.f32.mrf.mxu0
        %v1238 = vadd.f32 %v773, %v1237
        %v1239 = vpop.f32.mrf.mxu0
        %v1240 = vadd.f32 %v773, %v1239
        %1241 = vmatmul.bf16.gmra.mxu0 %v704
        %v1242 = vpop.f32.mrf.mxu0
        %v1243 = vadd.f32 %v773, %v1242
        %v1244 = vpop.f32.mrf.mxu0
        %v1245 = vadd.f32 %v773, %v1244
        %1246 = vdwg.mxu0
        %1247 = vmatpush.bf16.msra.mxu0 %v1033
        %1248 = vmatpush.bf16.msra.mxu0 %v1029
        %1249 = vmatpush.bf16.msra.mxu0 %v1025
        %1250 = vmatpush.bf16.msra.mxu0 %v1021
        %1251 = vmatpush.bf16.msra.mxu0 %v1017
        %1252 = vmatpush.bf16.msra.mxu0 %v1013
        %1253 = vmatpush.bf16.msra.mxu0 %v1009
        %1254 = vmatpush.bf16.msra.mxu0 %v1005
        %1255 = vmatmul.bf16.gmra.mxu0 %v691
        %v1256 = vpop.f32.mrf.mxu0
        %v1257 = vadd.f32 %v1208, %v1256
        %v1258 = vpop.f32.mrf.mxu0
        %v1259 = vadd.f32 %v1210, %v1258
        %1260 = vmatmul.bf16.gmra.mxu0 %v693
        %v1261 = vpop.f32.mrf.mxu0
        %v1262 = vadd.f32 %v1213, %v1261
        %v1263 = vpop.f32.mrf.mxu0
        %v1264 = vadd.f32 %v1215, %v1263
        %1265 = vmatmul.bf16.gmra.mxu0 %v695
        %v1266 = vpop.f32.mrf.mxu0
        %v1267 = vadd.f32 %v1218, %v1266
        %v1268 = vpop.f32.mrf.mxu0
        %v1269 = vadd.f32 %v1220, %v1268
        %1270 = vmatmul.bf16.gmra.mxu0 %v697
        %v1271 = vpop.f32.mrf.mxu0
        %v1272 = vadd.f32 %v1223, %v1271
        %v1273 = vpop.f32.mrf.mxu0
        %v1274 = vadd.f32 %v1225, %v1273
        %1275 = vmatmul.bf16.gmra.mxu0 %v699
        %v1276 = vpop.f32.mrf.mxu0
        %v1277 = vadd.f32 %v1228, %v1276
        %v1278 = vpop.f32.mrf.mxu0
        %v1279 = vadd.f32 %v1230, %v1278
        %1280 = vmatmul.bf16.gmra.mxu0 %v701
        %v1281 = vpop.f32.mrf.mxu0
        %v1282 = vadd.f32 %v1233, %v1281
        %v1283 = vpop.f32.mrf.mxu0
        %v1284 = vadd.f32 %v1235, %v1283
        %1285 = vmatmul.bf16.gmra.mxu0 %v703
        %v1286 = vpop.f32.mrf.mxu0
        %v1287 = vadd.f32 %v1238, %v1286
        %v1288 = vpop.f32.mrf.mxu0
        %v1289 = vadd.f32 %v1240, %v1288
        %1290 = vmatmul.bf16.gmra.mxu0 %v705
        %v1291 = vpop.f32.mrf.mxu0
        %v1292 = vadd.f32 %v1243, %v1291
        %v1293 = vpop.f32.mrf.mxu0
        %v1294 = vadd.f32 %v1245, %v1293
        %1295 = vdwg.mxu0
        %1296 = vmatpush.bf16.msra.mxu0 %v1002
        %1297 = vmatpush.bf16.msra.mxu0 %v998
        %1298 = vmatpush.bf16.msra.mxu0 %v994
        %1299 = vmatpush.bf16.msra.mxu0 %v990
        %1300 = vmatpush.bf16.msra.mxu0 %v986
        %1301 = vmatpush.bf16.msra.mxu0 %v982
        %1302 = vmatpush.bf16.msra.mxu0 %v978
        %1303 = vmatpush.bf16.msra.mxu0 %v974
        %1304 = vmatmul.bf16.gmra.mxu0 %v690
        %v1305 = vpop.f32.mrf.mxu0
        %v1306 = vadd.f32 %v774, %v1305
        %v1307 = vpop.f32.mrf.mxu0
        %v1308 = vadd.f32 %v774, %v1307
        %1309 = vmatmul.bf16.gmra.mxu0 %v692
        %v1310 = vpop.f32.mrf.mxu0
        %v1311 = vadd.f32 %v774, %v1310
        %v1312 = vpop.f32.mrf.mxu0
        %v1313 = vadd.f32 %v774, %v1312
        %1314 = vmatmul.bf16.gmra.mxu0 %v694
        %v1315 = vpop.f32.mrf.mxu0
        %v1316 = vadd.f32 %v774, %v1315
        %v1317 = vpop.f32.mrf.mxu0
        %v1318 = vadd.f32 %v774, %v1317
        %1319 = vmatmul.bf16.gmra.mxu0 %v696
        %v1320 = vpop.f32.mrf.mxu0
        %v1321 = vadd.f32 %v774, %v1320
        %v1322 = vpop.f32.mrf.mxu0
        %v1323 = vadd.f32 %v774, %v1322
        %1324 = vmatmul.bf16.gmra.mxu0 %v698
        %v1325 = vpop.f32.mrf.mxu0
        %v1326 = vadd.f32 %v774, %v1325
        %v1327 = vpop.f32.mrf.mxu0
        %v1328 = vadd.f32 %v774, %v1327
        %1329 = vmatmul.bf16.gmra.mxu0 %v700
        %v1330 = vpop.f32.mrf.mxu0
        %v1331 = vadd.f32 %v774, %v1330
        %v1332 = vpop.f32.mrf.mxu0
        %v1333 = vadd.f32 %v774, %v1332
        %1334 = vmatmul.bf16.gmra.mxu0 %v702
        %v1335 = vpop.f32.mrf.mxu0
        %v1336 = vadd.f32 %v774, %v1335
        %v1337 = vpop.f32.mrf.mxu0
        %v1338 = vadd.f32 %v774, %v1337
        %1339 = vmatmul.bf16.gmra.mxu0 %v704
        %v1340 = vpop.f32.mrf.mxu0
        %v1341 = vadd.f32 %v774, %v1340
        %v1342 = vpop.f32.mrf.mxu0
        %v1343 = vadd.f32 %v774, %v1342
        %1344 = vdwg.mxu0
        %1345 = vmatpush.bf16.msra.mxu0 %v1034
        %1346 = vmatpush.bf16.msra.mxu0 %v1030
        %1347 = vmatpush.bf16.msra.mxu0 %v1026
        %1348 = vmatpush.bf16.msra.mxu0 %v1022
        %1349 = vmatpush.bf16.msra.mxu0 %v1018
        %1350 = vmatpush.bf16.msra.mxu0 %v1014
        %1351 = vmatpush.bf16.msra.mxu0 %v1010
        %1352 = vmatpush.bf16.msra.mxu0 %v1006
        %1353 = vmatmul.bf16.gmra.mxu0 %v691
        %v1354 = vpop.f32.mrf.mxu0
        %v1355 = vadd.f32 %v1306, %v1354
        %v1356 = vpop.f32.mrf.mxu0
        %v1357 = vadd.f32 %v1308, %v1356
        %1358 = vmatmul.bf16.gmra.mxu0 %v693
        %v1359 = vpop.f32.mrf.mxu0
        %v1360 = vadd.f32 %v1311, %v1359
        %v1361 = vpop.f32.mrf.mxu0
        %v1362 = vadd.f32 %v1313, %v1361
        %1363 = vmatmul.bf16.gmra.mxu0 %v695
        %v1364 = vpop.f32.mrf.mxu0
        %v1365 = vadd.f32 %v1316, %v1364
        %v1366 = vpop.f32.mrf.mxu0
        %v1367 = vadd.f32 %v1318, %v1366
        %1368 = vmatmul.bf16.gmra.mxu0 %v697
        %v1369 = vpop.f32.mrf.mxu0
        %v1370 = vadd.f32 %v1321, %v1369
        %v1371 = vpop.f32.mrf.mxu0
        %v1372 = vadd.f32 %v1323, %v1371
        %1373 = vmatmul.bf16.gmra.mxu0 %v699
        %v1374 = vpop.f32.mrf.mxu0
        %v1375 = vadd.f32 %v1326, %v1374
        %v1376 = vpop.f32.mrf.mxu0
        %v1377 = vadd.f32 %v1328, %v1376
        %1378 = vmatmul.bf16.gmra.mxu0 %v701
        %v1379 = vpop.f32.mrf.mxu0
        %v1380 = vadd.f32 %v1331, %v1379
        %v1381 = vpop.f32.mrf.mxu0
        %v1382 = vadd.f32 %v1333, %v1381
        %1383 = vmatmul.bf16.gmra.mxu0 %v703
        %v1384 = vpop.f32.mrf.mxu0
        %v1385 = vadd.f32 %v1336, %v1384
        %v1386 = vpop.f32.mrf.mxu0
        %v1387 = vadd.f32 %v1338, %v1386
        %1388 = vmatmul.bf16.gmra.mxu0 %v705
        %v1389 = vpop.f32.mrf.mxu0
        %v1390 = vadd.f32 %v1341, %v1389
        %v1391 = vpop.f32.mrf.mxu0
        %v1392 = vadd.f32 %v1343, %v1391
        %1393 = vdwg.mxu0
        %1394 = vmatpush.bf16.msra.mxu0 %v1003
        %1395 = vmatpush.bf16.msra.mxu0 %v999
        %1396 = vmatpush.bf16.msra.mxu0 %v995
        %1397 = vmatpush.bf16.msra.mxu0 %v991
        %1398 = vmatpush.bf16.msra.mxu0 %v987
        %1399 = vmatpush.bf16.msra.mxu0 %v983
        %1400 = vmatpush.bf16.msra.mxu0 %v979
        %1401 = vmatpush.bf16.msra.mxu0 %v975
        %1402 = vmatmul.bf16.gmra.mxu0 %v690
        %v1403 = vpop.f32.mrf.mxu0
        %v1404 = vadd.f32 %v775, %v1403
        %v1405 = vpop.f32.mrf.mxu0
        %v1406 = vadd.f32 %v775, %v1405
        %1407 = vmatmul.bf16.gmra.mxu0 %v692
        %v1408 = vpop.f32.mrf.mxu0
        %v1409 = vadd.f32 %v775, %v1408
        %v1410 = vpop.f32.mrf.mxu0
        %v1411 = vadd.f32 %v775, %v1410
        %1412 = vmatmul.bf16.gmra.mxu0 %v694
        %v1413 = vpop.f32.mrf.mxu0
        %v1414 = vadd.f32 %v775, %v1413
        %v1415 = vpop.f32.mrf.mxu0
        %v1416 = vadd.f32 %v775, %v1415
        %1417 = vmatmul.bf16.gmra.mxu0 %v696
        %v1418 = vpop.f32.mrf.mxu0
        %v1419 = vadd.f32 %v775, %v1418
        %v1420 = vpop.f32.mrf.mxu0
        %v1421 = vadd.f32 %v775, %v1420
        %1422 = vmatmul.bf16.gmra.mxu0 %v698
        %v1423 = vpop.f32.mrf.mxu0
        %v1424 = vadd.f32 %v775, %v1423
        %v1425 = vpop.f32.mrf.mxu0
        %v1426 = vadd.f32 %v775, %v1425
        %1427 = vmatmul.bf16.gmra.mxu0 %v700
        %v1428 = vpop.f32.mrf.mxu0
        %v1429 = vadd.f32 %v775, %v1428
        %v1430 = vpop.f32.mrf.mxu0
        %v1431 = vadd.f32 %v775, %v1430
        %1432 = vmatmul.bf16.gmra.mxu0 %v702
        %v1433 = vpop.f32.mrf.mxu0
        %v1434 = vadd.f32 %v775, %v1433
        %v1435 = vpop.f32.mrf.mxu0
        %v1436 = vadd.f32 %v775, %v1435
        %1437 = vmatmul.bf16.gmra.mxu0 %v704
        %v1438 = vpop.f32.mrf.mxu0
        %v1439 = vadd.f32 %v775, %v1438
        %v1440 = vpop.f32.mrf.mxu0
        %v1441 = vadd.f32 %v775, %v1440
        %1442 = vdwg.mxu0
        %1443 = vmatpush.bf16.msra.mxu0 %v1035
        %1444 = vmatpush.bf16.msra.mxu0 %v1031
        %1445 = vmatpush.bf16.msra.mxu0 %v1027
        %1446 = vmatpush.bf16.msra.mxu0 %v1023
        %1447 = vmatpush.bf16.msra.mxu0 %v1019
        %1448 = vmatpush.bf16.msra.mxu0 %v1015
        %1449 = vmatpush.bf16.msra.mxu0 %v1011
        %1450 = vmatpush.bf16.msra.mxu0 %v1007
        %1451 = vmatmul.bf16.gmra.mxu0 %v691
        %v1452 = vpop.f32.mrf.mxu0
        %v1453 = vadd.f32 %v1404, %v1452
        %v1454 = vpop.f32.mrf.mxu0
        %v1455 = vadd.f32 %v1406, %v1454
        %1456 = vmatmul.bf16.gmra.mxu0 %v693
        %v1457 = vpop.f32.mrf.mxu0
        %v1458 = vadd.f32 %v1409, %v1457
        %v1459 = vpop.f32.mrf.mxu0
        %v1460 = vadd.f32 %v1411, %v1459
        %1461 = vmatmul.bf16.gmra.mxu0 %v695
        %v1462 = vpop.f32.mrf.mxu0
        %v1463 = vadd.f32 %v1414, %v1462
        %v1464 = vpop.f32.mrf.mxu0
        %v1465 = vadd.f32 %v1416, %v1464
        %1466 = vmatmul.bf16.gmra.mxu0 %v697
        %v1467 = vpop.f32.mrf.mxu0
        %v1468 = vadd.f32 %v1419, %v1467
        %v1469 = vpop.f32.mrf.mxu0
        %v1470 = vadd.f32 %v1421, %v1469
        %1471 = vmatmul.bf16.gmra.mxu0 %v699
        %v1472 = vpop.f32.mrf.mxu0
        %v1473 = vadd.f32 %v1424, %v1472
        %v1474 = vpop.f32.mrf.mxu0
        %v1475 = vadd.f32 %v1426, %v1474
        %1476 = vmatmul.bf16.gmra.mxu0 %v701
        %v1477 = vpop.f32.mrf.mxu0
        %v1478 = vadd.f32 %v1429, %v1477
        %v1479 = vpop.f32.mrf.mxu0
        %v1480 = vadd.f32 %v1431, %v1479
        %1481 = vmatmul.bf16.gmra.mxu0 %v703
        %v1482 = vpop.f32.mrf.mxu0
        %v1483 = vadd.f32 %v1434, %v1482
        %v1484 = vpop.f32.mrf.mxu0
        %v1485 = vadd.f32 %v1436, %v1484
        %1486 = vmatmul.bf16.gmra.mxu0 %v705
        %v1487 = vpop.f32.mrf.mxu0
        %v1488 = vadd.f32 %v1439, %v1487
        %v1489 = vpop.f32.mrf.mxu0
        %v1490 = vadd.f32 %v1441, %v1489
        %1491 = vdwg.mxu0
        %v1492 = vmax.f32 %v1159, 0.0
        %v1493 = vmax.f32 %v1257, 0.0
        %v1494 = vmax.f32 %v1355, 0.0
        %v1495 = vmax.f32 %v1453, 0.0
        %v1496 = vmax.f32 %v1161, 0.0
        %v1497 = vmax.f32 %v1259, 0.0
        %v1498 = vmax.f32 %v1357, 0.0
        %v1499 = vmax.f32 %v1455, 0.0
        %v1500 = vmax.f32 %v1164, 0.0
        %v1501 = vmax.f32 %v1262, 0.0
        %v1502 = vmax.f32 %v1360, 0.0
        %v1503 = vmax.f32 %v1458, 0.0
        %v1504 = vmax.f32 %v1166, 0.0
        %v1505 = vmax.f32 %v1264, 0.0
        %v1506 = vmax.f32 %v1362, 0.0
        %v1507 = vmax.f32 %v1460, 0.0
        %v1508 = vmax.f32 %v1169, 0.0
        %v1509 = vmax.f32 %v1267, 0.0
        %v1510 = vmax.f32 %v1365, 0.0
        %v1511 = vmax.f32 %v1463, 0.0
        %v1512 = vmax.f32 %v1171, 0.0
        %v1513 = vmax.f32 %v1269, 0.0
        %v1514 = vmax.f32 %v1367, 0.0
        %v1515 = vmax.f32 %v1465, 0.0
        %v1516 = vmax.f32 %v1174, 0.0
        %v1517 = vmax.f32 %v1272, 0.0
        %v1518 = vmax.f32 %v1370, 0.0
        %v1519 = vmax.f32 %v1468, 0.0
        %v1520 = vmax.f32 %v1176, 0.0
        %v1521 = vmax.f32 %v1274, 0.0
        %v1522 = vmax.f32 %v1372, 0.0
        %v1523 = vmax.f32 %v1470, 0.0
        %v1524 = vmax.f32 %v1179, 0.0
        %v1525 = vmax.f32 %v1277, 0.0
        %v1526 = vmax.f32 %v1375, 0.0
        %v1527 = vmax.f32 %v1473, 0.0
        %v1528 = vmax.f32 %v1181, 0.0
        %v1529 = vmax.f32 %v1279, 0.0
        %v1530 = vmax.f32 %v1377, 0.0
        %v1531 = vmax.f32 %v1475, 0.0
        %v1532 = vmax.f32 %v1184, 0.0
        %v1533 = vmax.f32 %v1282, 0.0
        %v1534 = vmax.f32 %v1380, 0.0
        %v1535 = vmax.f32 %v1478, 0.0
        %v1536 = vmax.f32 %v1186, 0.0
        %v1537 = vmax.f32 %v1284, 0.0
        %v1538 = vmax.f32 %v1382, 0.0
        %v1539 = vmax.f32 %v1480, 0.0
        %v1540 = vmax.f32 %v1189, 0.0
        %v1541 = vmax.f32 %v1287, 0.0
        %v1542 = vmax.f32 %v1385, 0.0
        %v1543 = vmax.f32 %v1483, 0.0
        %v1544 = vmax.f32 %v1191, 0.0
        %v1545 = vmax.f32 %v1289, 0.0
        %v1546 = vmax.f32 %v1387, 0.0
        %v1547 = vmax.f32 %v1485, 0.0
        %v1548 = vmax.f32 %v1194, 0.0
        %v1549 = vmax.f32 %v1292, 0.0
        %v1550 = vmax.f32 %v1390, 0.0
        %v1551 = vmax.f32 %v1488, 0.0
        %v1552 = vmax.f32 %v1196, 0.0
        %v1553 = vmax.f32 %v1294, 0.0
        %v1554 = vmax.f32 %v1392, 0.0
        %v1555 = vmax.f32 %v1490, 0.0
        %v1556 = vpack.c.bf16 %v1496, %v1492
        %v1557 = vpack.c.bf16 %v1497, %v1493
        %v1558 = vpack.c.bf16 %v1498, %v1494
        %v1559 = vpack.c.bf16 %v1499, %v1495
        %v1560 = vpack.c.bf16 %v1504, %v1500
        %v1561 = vpack.c.bf16 %v1505, %v1501
        %v1562 = vpack.c.bf16 %v1506, %v1502
        %v1563 = vpack.c.bf16 %v1507, %v1503
        %v1564 = vpack.c.bf16 %v1512, %v1508
        %v1565 = vpack.c.bf16 %v1513, %v1509
        %v1566 = vpack.c.bf16 %v1514, %v1510
        %v1567 = vpack.c.bf16 %v1515, %v1511
        %v1568 = vpack.c.bf16 %v1520, %v1516
        %v1569 = vpack.c.bf16 %v1521, %v1517
        %v1570 = vpack.c.bf16 %v1522, %v1518
        %v1571 = vpack.c.bf16 %v1523, %v1519
        %v1572 = vpack.c.bf16 %v1528, %v1524
        %v1573 = vpack.c.bf16 %v1529, %v1525
        %v1574 = vpack.c.bf16 %v1530, %v1526
        %v1575 = vpack.c.bf16 %v1531, %v1527
        %v1576 = vpack.c.bf16 %v1536, %v1532
        %v1577 = vpack.c.bf16 %v1537, %v1533
        %v1578 = vpack.c.bf16 %v1538, %v1534
        %v1579 = vpack.c.bf16 %v1539, %v1535
        %v1580 = vpack.c.bf16 %v1544, %v1540
        %v1581 = vpack.c.bf16 %v1545, %v1541
        %v1582 = vpack.c.bf16 %v1546, %v1542
        %v1583 = vpack.c.bf16 %v1547, %v1543
        %v1584 = vpack.c.bf16 %v1552, %v1548
        %v1585 = vpack.c.bf16 %v1553, %v1549
        %v1586 = vpack.c.bf16 %v1554, %v1550
        %v1587 = vpack.c.bf16 %v1555, %v1551
        %v1588 = vld [vmem:[#allocation11] sm:$0xff]
        %v1589 = vld [vmem:[#allocation11 + $0x8] sm:$0xff]
        %v1590 = vld [vmem:[#allocation11 + $0x10] sm:$0xff]
        %v1591 = vld [vmem:[#allocation11 + $0x18] sm:$0xf]
        %v1592 = vld [vmem:[#allocation11 + $0x1c] sm:$0xff]
        %v1593 = vld [vmem:[#allocation11 + $0x24] sm:$0xff]
        %v1594 = vld [vmem:[#allocation11 + $0x2c] sm:$0xff]
        %v1595 = vld [vmem:[#allocation11 + $0x34] sm:$0xf]
        %v1596 = vld [vmem:[#allocation11 + $0x38] sm:$0xff]
        %v1597 = vld [vmem:[#allocation11 + $0x40] sm:$0xff]
        %v1598 = vld [vmem:[#allocation11 + $0x48] sm:$0xff]
        %v1599 = vld [vmem:[#allocation11 + $0x50] sm:$0xf]
        %v1600 = vld [vmem:[#allocation11 + $0x54] sm:$0xff]
        %v1601 = vld [vmem:[#allocation11 + $0x5c] sm:$0xff]
        %v1602 = vld [vmem:[#allocation11 + $0x64] sm:$0xff]
        %v1603 = vld [vmem:[#allocation11 + $0x6c] sm:$0xf]
        %v1604 = vld [vmem:[#allocation11 + $0x70] sm:$0xff]
        %v1605 = vld [vmem:[#allocation11 + $0x78] sm:$0xff]
        %v1606 = vld [vmem:[#allocation11 + $0x80] sm:$0xff]
        %v1607 = vld [vmem:[#allocation11 + $0x88] sm:$0xf]
        %v1608 = vld [vmem:[#allocation11 + $0x8c] sm:$0xff]
        %v1609 = vld [vmem:[#allocation11 + $0x94] sm:$0xff]
        %v1610 = vld [vmem:[#allocation11 + $0x9c] sm:$0xff]
        %v1611 = vld [vmem:[#allocation11 + $0xa4] sm:$0xf]
        %v1612 = vld [vmem:[#allocation11 + $0xa8] sm:$0xff]
        %v1613 = vld [vmem:[#allocation11 + $0xb0] sm:$0xff]
        %v1614 = vld [vmem:[#allocation11 + $0xb8] sm:$0xff]
        %v1615 = vld [vmem:[#allocation11 + $0xc0] sm:$0xf]
        %v1616 = vld [vmem:[#allocation11 + $0xc4] sm:$0xff]
        %v1617 = vld [vmem:[#allocation11 + $0xcc] sm:$0xff]
        %v1618 = vld [vmem:[#allocation11 + $0xd4] sm:$0xff]
        %v1619 = vld [vmem:[#allocation11 + $0xdc] sm:$0xf]
        %v1620 = vld [vmem:[#allocation11 + $0xe0] sm:$0xff]
        %v1621 = vld [vmem:[#allocation11 + $0xe8] sm:$0xff]
        %v1622 = vld [vmem:[#allocation11 + $0xf0] sm:$0xff]
        %v1623 = vld [vmem:[#allocation11 + $0xf8] sm:$0xf]
        %v1624 = vld [vmem:[#allocation11 + $0xfc] sm:$0xff]
        %v1625 = vld [vmem:[#allocation11 + $0x104] sm:$0xff]
        %v1626 = vld [vmem:[#allocation11 + $0x10c] sm:$0xff]
        %v1627 = vld [vmem:[#allocation11 + $0x114] sm:$0xf]
        %v1628 = vld [vmem:[#allocation11 + $0x118] sm:$0xff]
        %v1629 = vld [vmem:[#allocation11 + $0x120] sm:$0xff]
        %v1630 = vld [vmem:[#allocation11 + $0x128] sm:$0xff]
        %v1631 = vld [vmem:[#allocation11 + $0x130] sm:$0xf]
        %v1632 = vld [vmem:[#allocation11 + $0x134] sm:$0xff]
        %v1633 = vld [vmem:[#allocation11 + $0x13c] sm:$0xff]
        %v1634 = vld [vmem:[#allocation11 + $0x144] sm:$0xff]
        %v1635 = vld [vmem:[#allocation11 + $0x14c] sm:$0xf]
        %v1636 = vld [vmem:[#allocation11 + $0x150] sm:$0xff]
        %v1637 = vld [vmem:[#allocation11 + $0x158] sm:$0xff]
        %v1638 = vld [vmem:[#allocation11 + $0x160] sm:$0xff]
        %v1639 = vld [vmem:[#allocation11 + $0x168] sm:$0xf]
        %v1640 = vld [vmem:[#allocation11 + $0x16c] sm:$0xff]
        %v1641 = vld [vmem:[#allocation11 + $0x174] sm:$0xff]
        %v1642 = vld [vmem:[#allocation11 + $0x17c] sm:$0xff]
        %v1643 = vld [vmem:[#allocation11 + $0x184] sm:$0xf]
        %v1644 = vld [vmem:[#allocation11 + $0x188] sm:$0xff]
        %v1645 = vld [vmem:[#allocation11 + $0x190] sm:$0xff]
        %v1646 = vld [vmem:[#allocation11 + $0x198] sm:$0xff]
        %v1647 = vld [vmem:[#allocation11 + $0x1a0] sm:$0xf]
        %v1648 = vld [vmem:[#allocation11 + $0x1a4] sm:$0xff]
        %v1649 = vld [vmem:[#allocation11 + $0x1ac] sm:$0xff]
        %v1650 = vld [vmem:[#allocation11 + $0x1b4] sm:$0xff]
        %v1651 = vld [vmem:[#allocation11 + $0x1bc] sm:$0xf]
        %v1652 = vld [vmem:[#allocation11 + $0x1c0] sm:$0xff]
        %v1653 = vld [vmem:[#allocation11 + $0x1c8] sm:$0xff]
        %v1654 = vld [vmem:[#allocation11 + $0x1d0] sm:$0xff]
        %v1655 = vld [vmem:[#allocation11 + $0x1d8] sm:$0xf]
        %v1656 = vld [vmem:[#allocation11 + $0x1dc] sm:$0xff]
        %v1657 = vld [vmem:[#allocation11 + $0x1e4] sm:$0xff]
        %v1658 = vld [vmem:[#allocation11 + $0x1ec] sm:$0xff]
        %v1659 = vld [vmem:[#allocation11 + $0x1f4] sm:$0xf]
        %v1660 = vld [vmem:[#allocation11 + $0x1f8] sm:$0xff]
        %v1661 = vld [vmem:[#allocation11 + $0x200] sm:$0xff]
        %v1662 = vld [vmem:[#allocation11 + $0x208] sm:$0xff]
        %v1663 = vld [vmem:[#allocation11 + $0x210] sm:$0xf]
        %v1664 = vld [vmem:[#allocation11 + $0x214] sm:$0xff]
        %v1665 = vld [vmem:[#allocation11 + $0x21c] sm:$0xff]
        %v1666 = vld [vmem:[#allocation11 + $0x224] sm:$0xff]
        %v1667 = vld [vmem:[#allocation11 + $0x22c] sm:$0xf]
        %v1668 = vld [vmem:[#allocation11 + $0x230] sm:$0xff]
        %v1669 = vld [vmem:[#allocation11 + $0x238] sm:$0xff]
        %v1670 = vld [vmem:[#allocation11 + $0x240] sm:$0xff]
        %v1671 = vld [vmem:[#allocation11 + $0x248] sm:$0xf]
        %v1672 = vld [vmem:[#allocation11 + $0x24c] sm:$0xff]
        %v1673 = vld [vmem:[#allocation11 + $0x254] sm:$0xff]
        %v1674 = vld [vmem:[#allocation11 + $0x25c] sm:$0xff]
        %v1675 = vld [vmem:[#allocation11 + $0x264] sm:$0xf]
        %v1676 = vld [vmem:[#allocation11 + $0x268] sm:$0xff]
        %v1677 = vld [vmem:[#allocation11 + $0x270] sm:$0xff]
        %v1678 = vld [vmem:[#allocation11 + $0x278] sm:$0xff]
        %v1679 = vld [vmem:[#allocation11 + $0x280] sm:$0xf]
        %v1680 = vld [vmem:[#allocation11 + $0x284] sm:$0xff]
        %v1681 = vld [vmem:[#allocation11 + $0x28c] sm:$0xff]
        %v1682 = vld [vmem:[#allocation11 + $0x294] sm:$0xff]
        %v1683 = vld [vmem:[#allocation11 + $0x29c] sm:$0xf]
        %v1684 = vld [vmem:[#allocation11 + $0x2a0] sm:$0xff]
        %v1685 = vld [vmem:[#allocation11 + $0x2a8] sm:$0xff]
        %v1686 = vld [vmem:[#allocation11 + $0x2b0] sm:$0xff]
        %v1687 = vld [vmem:[#allocation11 + $0x2b8] sm:$0xf]
        %v1688 = vld [vmem:[#allocation11 + $0x2bc] sm:$0xff]
        %v1689 = vld [vmem:[#allocation11 + $0x2c4] sm:$0xff]
        %v1690 = vld [vmem:[#allocation11 + $0x2cc] sm:$0xff]
        %v1691 = vld [vmem:[#allocation11 + $0x2d4] sm:$0xf]
        %v1692 = vld [vmem:[#allocation11 + $0x2d8] sm:$0xff]
        %v1693 = vld [vmem:[#allocation11 + $0x2e0] sm:$0xff]
        %v1694 = vld [vmem:[#allocation11 + $0x2e8] sm:$0xff]
        %v1695 = vld [vmem:[#allocation11 + $0x2f0] sm:$0xf]
        %v1696 = vld [vmem:[#allocation11 + $0x2f4] sm:$0xff]
        %v1697 = vld [vmem:[#allocation11 + $0x2fc] sm:$0xff]
        %v1698 = vld [vmem:[#allocation11 + $0x304] sm:$0xff]
        %v1699 = vld [vmem:[#allocation11 + $0x30c] sm:$0xf]
        %v1700 = vld [vmem:[#allocation11 + $0x310] sm:$0xff]
        %v1701 = vld [vmem:[#allocation11 + $0x318] sm:$0xff]
        %v1702 = vld [vmem:[#allocation11 + $0x320] sm:$0xff]
        %v1703 = vld [vmem:[#allocation11 + $0x328] sm:$0xf]
        %v1704 = vld [vmem:[#allocation11 + $0x32c] sm:$0xff]
        %v1705 = vld [vmem:[#allocation11 + $0x334] sm:$0xff]
        %v1706 = vld [vmem:[#allocation11 + $0x33c] sm:$0xff]
        %v1707 = vld [vmem:[#allocation11 + $0x344] sm:$0xf]
        %v1708 = vld [vmem:[#allocation11 + $0x348] sm:$0xff]
        %v1709 = vld [vmem:[#allocation11 + $0x350] sm:$0xff]
        %v1710 = vld [vmem:[#allocation11 + $0x358] sm:$0xff]
        %v1711 = vld [vmem:[#allocation11 + $0x360] sm:$0xf]
        %v1712 = vld [vmem:[#allocation11 + $0x364] sm:$0xff]
        %v1713 = vld [vmem:[#allocation11 + $0x36c] sm:$0xff]
        %v1714 = vld [vmem:[#allocation11 + $0x374] sm:$0xff]
        %v1715 = vld [vmem:[#allocation11 + $0x37c] sm:$0xf]
        %v1716 = vld [vmem:[#allocation11 + $0x380] sm:$0xff]
        %v1717 = vld [vmem:[#allocation11 + $0x388] sm:$0xff]
        %v1718 = vld [vmem:[#allocation11 + $0x390] sm:$0xff]
        %v1719 = vld [vmem:[#allocation11 + $0x398] sm:$0xf]
        %v1720 = vld [vmem:[#allocation11 + $0x39c] sm:$0xff]
        %v1721 = vld [vmem:[#allocation11 + $0x3a4] sm:$0xff]
        %v1722 = vld [vmem:[#allocation11 + $0x3ac] sm:$0xff]
        %v1723 = vld [vmem:[#allocation11 + $0x3b4] sm:$0xf]
        %v1724 = vld [vmem:[#allocation11 + $0x3b8] sm:$0xff]
        %v1725 = vld [vmem:[#allocation11 + $0x3c0] sm:$0xff]
        %v1726 = vld [vmem:[#allocation11 + $0x3c8] sm:$0xff]
        %v1727 = vld [vmem:[#allocation11 + $0x3d0] sm:$0xf]
        %v1728 = vld [vmem:[#allocation11 + $0x3d4] sm:$0xff]
        %v1729 = vld [vmem:[#allocation11 + $0x3dc] sm:$0xff]
        %v1730 = vld [vmem:[#allocation11 + $0x3e4] sm:$0xff]
        %v1731 = vld [vmem:[#allocation11 + $0x3ec] sm:$0xf]
        %v1732 = vld [vmem:[#allocation11 + $0x3f0] sm:$0xff]
        %v1733 = vld [vmem:[#allocation11 + $0x3f8] sm:$0xff]
        %v1734 = vld [vmem:[#allocation11 + $0x400] sm:$0xff]
        %v1735 = vld [vmem:[#allocation11 + $0x408] sm:$0xf]
        %v1736 = vld [vmem:[#allocation11 + $0x40c] sm:$0xff]
        %v1737 = vld [vmem:[#allocation11 + $0x414] sm:$0xff]
        %v1738 = vld [vmem:[#allocation11 + $0x41c] sm:$0xff]
        %v1739 = vld [vmem:[#allocation11 + $0x424] sm:$0xf]
        %v1740 = vld [vmem:[#allocation11 + $0x428] sm:$0xff]
        %v1741 = vld [vmem:[#allocation11 + $0x430] sm:$0xff]
        %v1742 = vld [vmem:[#allocation11 + $0x438] sm:$0xff]
        %v1743 = vld [vmem:[#allocation11 + $0x440] sm:$0xf]
        %v1744 = vld [vmem:[#allocation11 + $0x444] sm:$0xff]
        %v1745 = vld [vmem:[#allocation11 + $0x44c] sm:$0xff]
        %v1746 = vld [vmem:[#allocation11 + $0x454] sm:$0xff]
        %v1747 = vld [vmem:[#allocation11 + $0x45c] sm:$0xf]
        %v1748 = vld [vmem:[#allocation11 + $0x460] sm:$0xff]
        %v1749 = vld [vmem:[#allocation11 + $0x468] sm:$0xff]
        %v1750 = vld [vmem:[#allocation11 + $0x470] sm:$0xff]
        %v1751 = vld [vmem:[#allocation11 + $0x478] sm:$0xf]
        %v1752 = vld [vmem:[#allocation11 + $0x47c] sm:$0xff]
        %v1753 = vld [vmem:[#allocation11 + $0x484] sm:$0xff]
        %v1754 = vld [vmem:[#allocation11 + $0x48c] sm:$0xff]
        %v1755 = vld [vmem:[#allocation11 + $0x494] sm:$0xf]
        %v1756 = vld [vmem:[#allocation11 + $0x498] sm:$0xff]
        %v1757 = vld [vmem:[#allocation11 + $0x4a0] sm:$0xff]
        %v1758 = vld [vmem:[#allocation11 + $0x4a8] sm:$0xff]
        %v1759 = vld [vmem:[#allocation11 + $0x4b0] sm:$0xf]
        %v1760 = vld [vmem:[#allocation11 + $0x4b4] sm:$0xff]
        %v1761 = vld [vmem:[#allocation11 + $0x4bc] sm:$0xff]
        %v1762 = vld [vmem:[#allocation11 + $0x4c4] sm:$0xff]
        %v1763 = vld [vmem:[#allocation11 + $0x4cc] sm:$0xf]
        %v1764 = vld [vmem:[#allocation11 + $0x4d0] sm:$0xff]
        %v1765 = vld [vmem:[#allocation11 + $0x4d8] sm:$0xff]
        %v1766 = vld [vmem:[#allocation11 + $0x4e0] sm:$0xff]
        %v1767 = vld [vmem:[#allocation11 + $0x4e8] sm:$0xf]
        %v1768 = vld [vmem:[#allocation11 + $0x4ec] sm:$0xff]
        %v1769 = vld [vmem:[#allocation11 + $0x4f4] sm:$0xff]
        %v1770 = vld [vmem:[#allocation11 + $0x4fc] sm:$0xff]
        %v1771 = vld [vmem:[#allocation11 + $0x504] sm:$0xf]
        %v1772 = vld [vmem:[#allocation11 + $0x508] sm:$0xff]
        %v1773 = vld [vmem:[#allocation11 + $0x510] sm:$0xff]
        %v1774 = vld [vmem:[#allocation11 + $0x518] sm:$0xff]
        %v1775 = vld [vmem:[#allocation11 + $0x520] sm:$0xf]
        %v1776 = vld [vmem:[#allocation11 + $0x524] sm:$0xff]
        %v1777 = vld [vmem:[#allocation11 + $0x52c] sm:$0xff]
        %v1778 = vld [vmem:[#allocation11 + $0x534] sm:$0xff]
        %v1779 = vld [vmem:[#allocation11 + $0x53c] sm:$0xf]
        %v1780 = vld [vmem:[#allocation11 + $0x540] sm:$0xff]
        %v1781 = vld [vmem:[#allocation11 + $0x548] sm:$0xff]
        %v1782 = vld [vmem:[#allocation11 + $0x550] sm:$0xff]
        %v1783 = vld [vmem:[#allocation11 + $0x558] sm:$0xf]
        %v1784 = vld [vmem:[#allocation11 + $0x55c] sm:$0xff]
        %v1785 = vld [vmem:[#allocation11 + $0x564] sm:$0xff]
        %v1786 = vld [vmem:[#allocation11 + $0x56c] sm:$0xff]
        %v1787 = vld [vmem:[#allocation11 + $0x574] sm:$0xf]
        %v1788 = vld [vmem:[#allocation11 + $0x578] sm:$0xff]
        %v1789 = vld [vmem:[#allocation11 + $0x580] sm:$0xff]
        %v1790 = vld [vmem:[#allocation11 + $0x588] sm:$0xff]
        %v1791 = vld [vmem:[#allocation11 + $0x590] sm:$0xf]
        %v1792 = vld [vmem:[#allocation11 + $0x594] sm:$0xff]
        %v1793 = vld [vmem:[#allocation11 + $0x59c] sm:$0xff]
        %v1794 = vld [vmem:[#allocation11 + $0x5a4] sm:$0xff]
        %v1795 = vld [vmem:[#allocation11 + $0x5ac] sm:$0xf]
        %v1796 = vld [vmem:[#allocation11 + $0x5b0] sm:$0xff]
        %v1797 = vld [vmem:[#allocation11 + $0x5b8] sm:$0xff]
        %v1798 = vld [vmem:[#allocation11 + $0x5c0] sm:$0xff]
        %v1799 = vld [vmem:[#allocation11 + $0x5c8] sm:$0xf]
        %v1800 = vld [vmem:[#allocation11 + $0x5cc] sm:$0xff]
        %v1801 = vld [vmem:[#allocation11 + $0x5d4] sm:$0xff]
        %v1802 = vld [vmem:[#allocation11 + $0x5dc] sm:$0xff]
        %v1803 = vld [vmem:[#allocation11 + $0x5e4] sm:$0xf]
        %v1804 = vld [vmem:[#allocation11 + $0x5e8] sm:$0xff]
        %v1805 = vld [vmem:[#allocation11 + $0x5f0] sm:$0xff]
        %v1806 = vld [vmem:[#allocation11 + $0x5f8] sm:$0xff]
        %v1807 = vld [vmem:[#allocation11 + $0x600] sm:$0xf]
        %v1808 = vld [vmem:[#allocation11 + $0x604] sm:$0xff]
        %v1809 = vld [vmem:[#allocation11 + $0x60c] sm:$0xff]
        %v1810 = vld [vmem:[#allocation11 + $0x614] sm:$0xff]
        %v1811 = vld [vmem:[#allocation11 + $0x61c] sm:$0xf]
        %v1812 = vld [vmem:[#allocation11 + $0x620] sm:$0xff]
        %v1813 = vld [vmem:[#allocation11 + $0x628] sm:$0xff]
        %v1814 = vld [vmem:[#allocation11 + $0x630] sm:$0xff]
        %v1815 = vld [vmem:[#allocation11 + $0x638] sm:$0xf]
        %v1816 = vld [vmem:[#allocation11 + $0x63c] sm:$0xff]
        %v1817 = vld [vmem:[#allocation11 + $0x644] sm:$0xff]
        %v1818 = vld [vmem:[#allocation11 + $0x64c] sm:$0xff]
        %v1819 = vld [vmem:[#allocation11 + $0x654] sm:$0xf]
        %v1820 = vld [vmem:[#allocation11 + $0x658] sm:$0xff]
        %v1821 = vld [vmem:[#allocation11 + $0x660] sm:$0xff]
        %v1822 = vld [vmem:[#allocation11 + $0x668] sm:$0xff]
        %v1823 = vld [vmem:[#allocation11 + $0x670] sm:$0xf]
        %v1824 = vld [vmem:[#allocation11 + $0x674] sm:$0xff]
        %v1825 = vld [vmem:[#allocation11 + $0x67c] sm:$0xff]
        %v1826 = vld [vmem:[#allocation11 + $0x684] sm:$0xff]
        %v1827 = vld [vmem:[#allocation11 + $0x68c] sm:$0xf]
        %v1828 = vld [vmem:[#allocation11 + $0x690] sm:$0xff]
        %v1829 = vld [vmem:[#allocation11 + $0x698] sm:$0xff]
        %v1830 = vld [vmem:[#allocation11 + $0x6a0] sm:$0xff]
        %v1831 = vld [vmem:[#allocation11 + $0x6a8] sm:$0xf]
        %v1832 = vld [vmem:[#allocation11 + $0x6ac] sm:$0xff]
        %v1833 = vld [vmem:[#allocation11 + $0x6b4] sm:$0xff]
        %v1834 = vld [vmem:[#allocation11 + $0x6bc] sm:$0xff]
        %v1835 = vld [vmem:[#allocation11 + $0x6c4] sm:$0xf]
        %v1836 = vld [vmem:[#allocation11 + $0x6c8] sm:$0xff]
        %v1837 = vld [vmem:[#allocation11 + $0x6d0] sm:$0xff]
        %v1838 = vld [vmem:[#allocation11 + $0x6d8] sm:$0xff]
        %v1839 = vld [vmem:[#allocation11 + $0x6e0] sm:$0xf]
        %v1840 = vld [vmem:[#allocation11 + $0x6e4] sm:$0xff]
        %v1841 = vld [vmem:[#allocation11 + $0x6ec] sm:$0xff]
        %v1842 = vld [vmem:[#allocation11 + $0x6f4] sm:$0xff]
        %v1843 = vld [vmem:[#allocation11 + $0x6fc] sm:$0xf]
        %v1844 = vld [vmem:[#allocation13] sm:$0xff]
        %v1846 = vperm.slane %v1844, 0
        %v1847 = vperm.slane %v1844, 1
        %v1848 = vperm.slane %v1844, 2
        %v1849 = vperm.slane %v1844, 3
        %v1850 = vperm.slane %v1844, 4
        %v1851 = vperm.slane %v1844, 5
        %v1852 = vperm.slane %v1844, 6
        %v2116 = vunpack.c.l.b16 %v1588
        %v2117 = vunpack.c.h.b16 %v1588
        %v2118 = vunpack.c.l.b16 %v1589
        %v2119 = vunpack.c.h.b16 %v1589
        %v2120 = vunpack.c.l.b16 %v1590
        %v2121 = vunpack.c.h.b16 %v1590
        %v2122 = vunpack.c.l.b16 %v1591
        %v2123 = vunpack.c.l.b16 %v1592
        %v2124 = vunpack.c.h.b16 %v1592
        %v2125 = vunpack.c.l.b16 %v1593
        %v2126 = vunpack.c.h.b16 %v1593
        %v2127 = vunpack.c.l.b16 %v1594
        %v2128 = vunpack.c.h.b16 %v1594
        %v2129 = vunpack.c.l.b16 %v1595
        %v2130 = vunpack.c.l.b16 %v1596
        %v2131 = vunpack.c.h.b16 %v1596
        %v2132 = vunpack.c.l.b16 %v1597
        %v2133 = vunpack.c.h.b16 %v1597
        %v2134 = vunpack.c.l.b16 %v1598
        %v2135 = vunpack.c.h.b16 %v1598
        %v2136 = vunpack.c.l.b16 %v1599
        %v2137 = vunpack.c.l.b16 %v1600
        %v2138 = vunpack.c.h.b16 %v1600
        %v2139 = vunpack.c.l.b16 %v1601
        %v2140 = vunpack.c.h.b16 %v1601
        %v2141 = vunpack.c.l.b16 %v1602
        %v2142 = vunpack.c.h.b16 %v1602
        %v2143 = vunpack.c.l.b16 %v1603
        %v2144 = vunpack.c.l.b16 %v1604
        %v2145 = vunpack.c.h.b16 %v1604
        %v2146 = vunpack.c.l.b16 %v1605
        %v2147 = vunpack.c.h.b16 %v1605
        %v2148 = vunpack.c.l.b16 %v1606
        %v2149 = vunpack.c.h.b16 %v1606
        %v2150 = vunpack.c.l.b16 %v1607
        %v2151 = vunpack.c.l.b16 %v1608
        %v2152 = vunpack.c.h.b16 %v1608
        %v2153 = vunpack.c.l.b16 %v1609
        %v2154 = vunpack.c.h.b16 %v1609
        %v2155 = vunpack.c.l.b16 %v1610
        %v2156 = vunpack.c.h.b16 %v1610
        %v2157 = vunpack.c.l.b16 %v1611
        %v2158 = vunpack.c.l.b16 %v1612
        %v2159 = vunpack.c.h.b16 %v1612
        %v2160 = vunpack.c.l.b16 %v1613
        %v2161 = vunpack.c.h.b16 %v1613
        %v2162 = vunpack.c.l.b16 %v1614
        %v2163 = vunpack.c.h.b16 %v1614
        %v2164 = vunpack.c.l.b16 %v1615
        %v2165 = vunpack.c.l.b16 %v1616
        %v2166 = vunpack.c.h.b16 %v1616
        %v2167 = vunpack.c.l.b16 %v1617
        %v2168 = vunpack.c.h.b16 %v1617
        %v2169 = vunpack.c.l.b16 %v1618
        %v2170 = vunpack.c.h.b16 %v1618
        %v2171 = vunpack.c.l.b16 %v1619
        %v2172 = vunpack.c.l.b16 %v1620
        %v2173 = vunpack.c.h.b16 %v1620
        %v2174 = vunpack.c.l.b16 %v1621
        %v2175 = vunpack.c.h.b16 %v1621
        %v2176 = vunpack.c.l.b16 %v1622
        %v2177 = vunpack.c.h.b16 %v1622
        %v2178 = vunpack.c.l.b16 %v1623
        %v2179 = vunpack.c.l.b16 %v1624
        %v2180 = vunpack.c.h.b16 %v1624
        %v2181 = vunpack.c.l.b16 %v1625
        %v2182 = vunpack.c.h.b16 %v1625
        %v2183 = vunpack.c.l.b16 %v1626
        %v2184 = vunpack.c.h.b16 %v1626
        %v2185 = vunpack.c.l.b16 %v1627
        %v2186 = vunpack.c.l.b16 %v1628
        %v2187 = vunpack.c.h.b16 %v1628
        %v2188 = vunpack.c.l.b16 %v1629
        %v2189 = vunpack.c.h.b16 %v1629
        %v2190 = vunpack.c.l.b16 %v1630
        %v2191 = vunpack.c.h.b16 %v1630
        %v2192 = vunpack.c.l.b16 %v1631
        %v2193 = vunpack.c.l.b16 %v1632
        %v2194 = vunpack.c.h.b16 %v1632
        %v2195 = vunpack.c.l.b16 %v1633
        %v2196 = vunpack.c.h.b16 %v1633
        %v2197 = vunpack.c.l.b16 %v1634
        %v2198 = vunpack.c.h.b16 %v1634
        %v2199 = vunpack.c.l.b16 %v1635
        %v2200 = vunpack.c.l.b16 %v1636
        %v2201 = vunpack.c.h.b16 %v1636
        %v2202 = vunpack.c.l.b16 %v1637
        %v2203 = vunpack.c.h.b16 %v1637
        %v2204 = vunpack.c.l.b16 %v1638
        %v2205 = vunpack.c.h.b16 %v1638
        %v2206 = vunpack.c.l.b16 %v1639
        %v2207 = vunpack.c.l.b16 %v1640
        %v2208 = vunpack.c.h.b16 %v1640
        %v2209 = vunpack.c.l.b16 %v1641
        %v2210 = vunpack.c.h.b16 %v1641
        %v2211 = vunpack.c.l.b16 %v1642
        %v2212 = vunpack.c.h.b16 %v1642
        %v2213 = vunpack.c.l.b16 %v1643
        %v2214 = vunpack.c.l.b16 %v1644
        %v2215 = vunpack.c.h.b16 %v1644
        %v2216 = vunpack.c.l.b16 %v1645
        %v2217 = vunpack.c.h.b16 %v1645
        %v2218 = vunpack.c.l.b16 %v1646
        %v2219 = vunpack.c.h.b16 %v1646
        %v2220 = vunpack.c.l.b16 %v1647
        %v2221 = vunpack.c.l.b16 %v1648
        %v2222 = vunpack.c.h.b16 %v1648
        %v2223 = vunpack.c.l.b16 %v1649
        %v2224 = vunpack.c.h.b16 %v1649
        %v2225 = vunpack.c.l.b16 %v1650
        %v2226 = vunpack.c.h.b16 %v1650
        %v2227 = vunpack.c.l.b16 %v1651
        %v2228 = vunpack.c.l.b16 %v1652
        %v2229 = vunpack.c.h.b16 %v1652
        %v2230 = vunpack.c.l.b16 %v1653
        %v2231 = vunpack.c.h.b16 %v1653
        %v2232 = vunpack.c.l.b16 %v1654
        %v2233 = vunpack.c.h.b16 %v1654
        %v2234 = vunpack.c.l.b16 %v1655
        %v2235 = vunpack.c.l.b16 %v1656
        %v2236 = vunpack.c.h.b16 %v1656
        %v2237 = vunpack.c.l.b16 %v1657
        %v2238 = vunpack.c.h.b16 %v1657
        %v2239 = vunpack.c.l.b16 %v1658
        %v2240 = vunpack.c.h.b16 %v1658
        %v2241 = vunpack.c.l.b16 %v1659
        %v2242 = vunpack.c.l.b16 %v1660
        %v2243 = vunpack.c.h.b16 %v1660
        %v2244 = vunpack.c.l.b16 %v1661
        %v2245 = vunpack.c.h.b16 %v1661
        %v2246 = vunpack.c.l.b16 %v1662
        %v2247 = vunpack.c.h.b16 %v1662
        %v2248 = vunpack.c.l.b16 %v1663
        %v2249 = vunpack.c.l.b16 %v1664
        %v2250 = vunpack.c.h.b16 %v1664
        %v2251 = vunpack.c.l.b16 %v1665
        %v2252 = vunpack.c.h.b16 %v1665
        %v2253 = vunpack.c.l.b16 %v1666
        %v2254 = vunpack.c.h.b16 %v1666
        %v2255 = vunpack.c.l.b16 %v1667
        %v2256 = vunpack.c.l.b16 %v1668
        %v2257 = vunpack.c.h.b16 %v1668
        %v2258 = vunpack.c.l.b16 %v1669
        %v2259 = vunpack.c.h.b16 %v1669
        %v2260 = vunpack.c.l.b16 %v1670
        %v2261 = vunpack.c.h.b16 %v1670
        %v2262 = vunpack.c.l.b16 %v1671
        %v2263 = vunpack.c.l.b16 %v1672
        %v2264 = vunpack.c.h.b16 %v1672
        %v2265 = vunpack.c.l.b16 %v1673
        %v2266 = vunpack.c.h.b16 %v1673
        %v2267 = vunpack.c.l.b16 %v1674
        %v2268 = vunpack.c.h.b16 %v1674
        %v2269 = vunpack.c.l.b16 %v1675
        %v2270 = vunpack.c.l.b16 %v1676
        %v2271 = vunpack.c.h.b16 %v1676
        %v2272 = vunpack.c.l.b16 %v1677
        %v2273 = vunpack.c.h.b16 %v1677
        %v2274 = vunpack.c.l.b16 %v1678
        %v2275 = vunpack.c.h.b16 %v1678
        %v2276 = vunpack.c.l.b16 %v1679
        %v2277 = vunpack.c.l.b16 %v1680
        %v2278 = vunpack.c.h.b16 %v1680
        %v2279 = vunpack.c.l.b16 %v1681
        %v2280 = vunpack.c.h.b16 %v1681
        %v2281 = vunpack.c.l.b16 %v1682
        %v2282 = vunpack.c.h.b16 %v1682
        %v2283 = vunpack.c.l.b16 %v1683
        %v2284 = vunpack.c.l.b16 %v1684
        %v2285 = vunpack.c.h.b16 %v1684
        %v2286 = vunpack.c.l.b16 %v1685
        %v2287 = vunpack.c.h.b16 %v1685
        %v2288 = vunpack.c.l.b16 %v1686
        %v2289 = vunpack.c.h.b16 %v1686
        %v2290 = vunpack.c.l.b16 %v1687
        %v2291 = vunpack.c.l.b16 %v1688
        %v2292 = vunpack.c.h.b16 %v1688
        %v2293 = vunpack.c.l.b16 %v1689
        %v2294 = vunpack.c.h.b16 %v1689
        %v2295 = vunpack.c.l.b16 %v1690
        %v2296 = vunpack.c.h.b16 %v1690
        %v2297 = vunpack.c.l.b16 %v1691
        %v2298 = vunpack.c.l.b16 %v1692
        %v2299 = vunpack.c.h.b16 %v1692
        %v2300 = vunpack.c.l.b16 %v1693
        %v2301 = vunpack.c.h.b16 %v1693
        %v2302 = vunpack.c.l.b16 %v1694
        %v2303 = vunpack.c.h.b16 %v1694
        %v2304 = vunpack.c.l.b16 %v1695
        %v2305 = vunpack.c.l.b16 %v1696
        %v2306 = vunpack.c.h.b16 %v1696
        %v2307 = vunpack.c.l.b16 %v1697
        %v2308 = vunpack.c.h.b16 %v1697
        %v2309 = vunpack.c.l.b16 %v1698
        %v2310 = vunpack.c.h.b16 %v1698
        %v2311 = vunpack.c.l.b16 %v1699
        %v2312 = vunpack.c.l.b16 %v1700
        %v2313 = vunpack.c.h.b16 %v1700
        %v2314 = vunpack.c.l.b16 %v1701
        %v2315 = vunpack.c.h.b16 %v1701
        %v2316 = vunpack.c.l.b16 %v1702
        %v2317 = vunpack.c.h.b16 %v1702
        %v2318 = vunpack.c.l.b16 %v1703
        %v2319 = vunpack.c.l.b16 %v1704
        %v2320 = vunpack.c.h.b16 %v1704
        %v2321 = vunpack.c.l.b16 %v1705
        %v2322 = vunpack.c.h.b16 %v1705
        %v2323 = vunpack.c.l.b16 %v1706
        %v2324 = vunpack.c.h.b16 %v1706
        %v2325 = vunpack.c.l.b16 %v1707
        %v2326 = vunpack.c.l.b16 %v1708
        %v2327 = vunpack.c.h.b16 %v1708
        %v2328 = vunpack.c.l.b16 %v1709
        %v2329 = vunpack.c.h.b16 %v1709
        %v2330 = vunpack.c.l.b16 %v1710
        %v2331 = vunpack.c.h.b16 %v1710
        %v2332 = vunpack.c.l.b16 %v1711
        %v2333 = vunpack.c.l.b16 %v1712
        %v2334 = vunpack.c.h.b16 %v1712
        %v2335 = vunpack.c.l.b16 %v1713
        %v2336 = vunpack.c.h.b16 %v1713
        %v2337 = vunpack.c.l.b16 %v1714
        %v2338 = vunpack.c.h.b16 %v1714
        %v2339 = vunpack.c.l.b16 %v1715
        %v2340 = vunpack.c.l.b16 %v1716
        %v2341 = vunpack.c.h.b16 %v1716
        %v2342 = vunpack.c.l.b16 %v1717
        %v2343 = vunpack.c.h.b16 %v1717
        %v2344 = vunpack.c.l.b16 %v1718
        %v2345 = vunpack.c.h.b16 %v1718
        %v2346 = vunpack.c.l.b16 %v1719
        %v2347 = vunpack.c.l.b16 %v1720
        %v2348 = vunpack.c.h.b16 %v1720
        %v2349 = vunpack.c.l.b16 %v1721
        %v2350 = vunpack.c.h.b16 %v1721
        %v2351 = vunpack.c.l.b16 %v1722
        %v2352 = vunpack.c.h.b16 %v1722
        %v2353 = vunpack.c.l.b16 %v1723
        %v2354 = vunpack.c.l.b16 %v1724
        %v2355 = vunpack.c.h.b16 %v1724
        %v2356 = vunpack.c.l.b16 %v1725
        %v2357 = vunpack.c.h.b16 %v1725
        %v2358 = vunpack.c.l.b16 %v1726
        %v2359 = vunpack.c.h.b16 %v1726
        %v2360 = vunpack.c.l.b16 %v1727
        %v2361 = vunpack.c.l.b16 %v1728
        %v2362 = vunpack.c.h.b16 %v1728
        %v2363 = vunpack.c.l.b16 %v1729
        %v2364 = vunpack.c.h.b16 %v1729
        %v2365 = vunpack.c.l.b16 %v1730
        %v2366 = vunpack.c.h.b16 %v1730
        %v2367 = vunpack.c.l.b16 %v1731
        %v2368 = vunpack.c.l.b16 %v1732
        %v2369 = vunpack.c.h.b16 %v1732
        %v2370 = vunpack.c.l.b16 %v1733
        %v2371 = vunpack.c.h.b16 %v1733
        %v2372 = vunpack.c.l.b16 %v1734
        %v2373 = vunpack.c.h.b16 %v1734
        %v2374 = vunpack.c.l.b16 %v1735
        %v2375 = vunpack.c.l.b16 %v1736
        %v2376 = vunpack.c.h.b16 %v1736
        %v2377 = vunpack.c.l.b16 %v1737
        %v2378 = vunpack.c.h.b16 %v1737
        %v2379 = vunpack.c.l.b16 %v1738
        %v2380 = vunpack.c.h.b16 %v1738
        %v2381 = vunpack.c.l.b16 %v1739
        %v2382 = vunpack.c.l.b16 %v1740
        %v2383 = vunpack.c.h.b16 %v1740
        %v2384 = vunpack.c.l.b16 %v1741
        %v2385 = vunpack.c.h.b16 %v1741
        %v2386 = vunpack.c.l.b16 %v1742
        %v2387 = vunpack.c.h.b16 %v1742
        %v2388 = vunpack.c.l.b16 %v1743
        %v2389 = vunpack.c.l.b16 %v1744
        %v2390 = vunpack.c.h.b16 %v1744
        %v2391 = vunpack.c.l.b16 %v1745
        %v2392 = vunpack.c.h.b16 %v1745
        %v2393 = vunpack.c.l.b16 %v1746
        %v2394 = vunpack.c.h.b16 %v1746
        %v2395 = vunpack.c.l.b16 %v1747
        %v2396 = vunpack.c.l.b16 %v1748
        %v2397 = vunpack.c.h.b16 %v1748
        %v2398 = vunpack.c.l.b16 %v1749
        %v2399 = vunpack.c.h.b16 %v1749
        %v2400 = vunpack.c.l.b16 %v1750
        %v2401 = vunpack.c.h.b16 %v1750
        %v2402 = vunpack.c.l.b16 %v1751
        %v2403 = vunpack.c.l.b16 %v1752
        %v2404 = vunpack.c.h.b16 %v1752
        %v2405 = vunpack.c.l.b16 %v1753
        %v2406 = vunpack.c.h.b16 %v1753
        %v2407 = vunpack.c.l.b16 %v1754
        %v2408 = vunpack.c.h.b16 %v1754
        %v2409 = vunpack.c.l.b16 %v1755
        %v2410 = vunpack.c.l.b16 %v1756
        %v2411 = vunpack.c.h.b16 %v1756
        %v2412 = vunpack.c.l.b16 %v1757
        %v2413 = vunpack.c.h.b16 %v1757
        %v2414 = vunpack.c.l.b16 %v1758
        %v2415 = vunpack.c.h.b16 %v1758
        %v2416 = vunpack.c.l.b16 %v1759
        %v2417 = vunpack.c.l.b16 %v1760
        %v2418 = vunpack.c.h.b16 %v1760
        %v2419 = vunpack.c.l.b16 %v1761
        %v2420 = vunpack.c.h.b16 %v1761
        %v2421 = vunpack.c.l.b16 %v1762
        %v2422 = vunpack.c.h.b16 %v1762
        %v2423 = vunpack.c.l.b16 %v1763
        %v2424 = vunpack.c.l.b16 %v1764
        %v2425 = vunpack.c.h.b16 %v1764
        %v2426 = vunpack.c.l.b16 %v1765
        %v2427 = vunpack.c.h.b16 %v1765
        %v2428 = vunpack.c.l.b16 %v1766
        %v2429 = vunpack.c.h.b16 %v1766
        %v2430 = vunpack.c.l.b16 %v1767
        %v2431 = vunpack.c.l.b16 %v1768
        %v2432 = vunpack.c.h.b16 %v1768
        %v2433 = vunpack.c.l.b16 %v1769
        %v2434 = vunpack.c.h.b16 %v1769
        %v2435 = vunpack.c.l.b16 %v1770
        %v2436 = vunpack.c.h.b16 %v1770
        %v2437 = vunpack.c.l.b16 %v1771
        %v2438 = vunpack.c.l.b16 %v1772
        %v2439 = vunpack.c.h.b16 %v1772
        %v2440 = vunpack.c.l.b16 %v1773
        %v2441 = vunpack.c.h.b16 %v1773
        %v2442 = vunpack.c.l.b16 %v1774
        %v2443 = vunpack.c.h.b16 %v1774
        %v2444 = vunpack.c.l.b16 %v1775
        %v2445 = vunpack.c.l.b16 %v1776
        %v2446 = vunpack.c.h.b16 %v1776
        %v2447 = vunpack.c.l.b16 %v1777
        %v2448 = vunpack.c.h.b16 %v1777
        %v2449 = vunpack.c.l.b16 %v1778
        %v2450 = vunpack.c.h.b16 %v1778
        %v2451 = vunpack.c.l.b16 %v1779
        %v2452 = vunpack.c.l.b16 %v1780
        %v2453 = vunpack.c.h.b16 %v1780
        %v2454 = vunpack.c.l.b16 %v1781
        %v2455 = vunpack.c.h.b16 %v1781
        %v2456 = vunpack.c.l.b16 %v1782
        %v2457 = vunpack.c.h.b16 %v1782
        %v2458 = vunpack.c.l.b16 %v1783
        %v2459 = vunpack.c.l.b16 %v1784
        %v2460 = vunpack.c.h.b16 %v1784
        %v2461 = vunpack.c.l.b16 %v1785
        %v2462 = vunpack.c.h.b16 %v1785
        %v2463 = vunpack.c.l.b16 %v1786
        %v2464 = vunpack.c.h.b16 %v1786
        %v2465 = vunpack.c.l.b16 %v1787
        %v2466 = vunpack.c.l.b16 %v1788
        %v2467 = vunpack.c.h.b16 %v1788
        %v2468 = vunpack.c.l.b16 %v1789
        %v2469 = vunpack.c.h.b16 %v1789
        %v2470 = vunpack.c.l.b16 %v1790
        %v2471 = vunpack.c.h.b16 %v1790
        %v2472 = vunpack.c.l.b16 %v1791
        %v2473 = vunpack.c.l.b16 %v1792
        %v2474 = vunpack.c.h.b16 %v1792
        %v2475 = vunpack.c.l.b16 %v1793
        %v2476 = vunpack.c.h.b16 %v1793
        %v2477 = vunpack.c.l.b16 %v1794
        %v2478 = vunpack.c.h.b16 %v1794
        %v2479 = vunpack.c.l.b16 %v1795
        %v2480 = vunpack.c.l.b16 %v1796
        %v2481 = vunpack.c.h.b16 %v1796
        %v2482 = vunpack.c.l.b16 %v1797
        %v2483 = vunpack.c.h.b16 %v1797
        %v2484 = vunpack.c.l.b16 %v1798
        %v2485 = vunpack.c.h.b16 %v1798
        %v2486 = vunpack.c.l.b16 %v1799
        %v2487 = vunpack.c.l.b16 %v1800
        %v2488 = vunpack.c.h.b16 %v1800
        %v2489 = vunpack.c.l.b16 %v1801
        %v2490 = vunpack.c.h.b16 %v1801
        %v2491 = vunpack.c.l.b16 %v1802
        %v2492 = vunpack.c.h.b16 %v1802
        %v2493 = vunpack.c.l.b16 %v1803
        %v2494 = vunpack.c.l.b16 %v1804
        %v2495 = vunpack.c.h.b16 %v1804
        %v2496 = vunpack.c.l.b16 %v1805
        %v2497 = vunpack.c.h.b16 %v1805
        %v2498 = vunpack.c.l.b16 %v1806
        %v2499 = vunpack.c.h.b16 %v1806
        %v2500 = vunpack.c.l.b16 %v1807
        %v2501 = vunpack.c.l.b16 %v1808
        %v2502 = vunpack.c.h.b16 %v1808
        %v2503 = vunpack.c.l.b16 %v1809
        %v2504 = vunpack.c.h.b16 %v1809
        %v2505 = vunpack.c.l.b16 %v1810
        %v2506 = vunpack.c.h.b16 %v1810
        %v2507 = vunpack.c.l.b16 %v1811
        %v2508 = vunpack.c.l.b16 %v1812
        %v2509 = vunpack.c.h.b16 %v1812
        %v2510 = vunpack.c.l.b16 %v1813
        %v2511 = vunpack.c.h.b16 %v1813
        %v2512 = vunpack.c.l.b16 %v1814
        %v2513 = vunpack.c.h.b16 %v1814
        %v2514 = vunpack.c.l.b16 %v1815
        %v2515 = vunpack.c.l.b16 %v1816
        %v2516 = vunpack.c.h.b16 %v1816
        %v2517 = vunpack.c.l.b16 %v1817
        %v2518 = vunpack.c.h.b16 %v1817
        %v2519 = vunpack.c.l.b16 %v1818
        %v2520 = vunpack.c.h.b16 %v1818
        %v2521 = vunpack.c.l.b16 %v1819
        %v2522 = vunpack.c.l.b16 %v1820
        %v2523 = vunpack.c.h.b16 %v1820
        %v2524 = vunpack.c.l.b16 %v1821
        %v2525 = vunpack.c.h.b16 %v1821
        %v2526 = vunpack.c.l.b16 %v1822
        %v2527 = vunpack.c.h.b16 %v1822
        %v2528 = vunpack.c.l.b16 %v1823
        %v2529 = vunpack.c.l.b16 %v1824
        %v2530 = vunpack.c.h.b16 %v1824
        %v2531 = vunpack.c.l.b16 %v1825
        %v2532 = vunpack.c.h.b16 %v1825
        %v2533 = vunpack.c.l.b16 %v1826
        %v2534 = vunpack.c.h.b16 %v1826
        %v2535 = vunpack.c.l.b16 %v1827
        %v2536 = vunpack.c.l.b16 %v1828
        %v2537 = vunpack.c.h.b16 %v1828
        %v2538 = vunpack.c.l.b16 %v1829
        %v2539 = vunpack.c.h.b16 %v1829
        %v2540 = vunpack.c.l.b16 %v1830
        %v2541 = vunpack.c.h.b16 %v1830
        %v2542 = vunpack.c.l.b16 %v1831
        %v2543 = vunpack.c.l.b16 %v1832
        %v2544 = vunpack.c.h.b16 %v1832
        %v2545 = vunpack.c.l.b16 %v1833
        %v2546 = vunpack.c.h.b16 %v1833
        %v2547 = vunpack.c.l.b16 %v1834
        %v2548 = vunpack.c.h.b16 %v1834
        %v2549 = vunpack.c.l.b16 %v1835
        %v2550 = vunpack.c.l.b16 %v1836
        %v2551 = vunpack.c.h.b16 %v1836
        %v2552 = vunpack.c.l.b16 %v1837
        %v2553 = vunpack.c.h.b16 %v1837
        %v2554 = vunpack.c.l.b16 %v1838
        %v2555 = vunpack.c.h.b16 %v1838
        %v2556 = vunpack.c.l.b16 %v1839
        %v2557 = vunpack.c.l.b16 %v1840
        %v2558 = vunpack.c.h.b16 %v1840
        %v2559 = vunpack.c.l.b16 %v1841
        %v2560 = vunpack.c.h.b16 %v1841
        %v2561 = vunpack.c.l.b16 %v1842
        %v2562 = vunpack.c.h.b16 %v1842
        %v2563 = vunpack.c.l.b16 %v1843
        %v2564 = vpack.c.b16 %v2123, %v2116
        %v2565 = vpack.c.b16 %v2124, %v2117
        %v2566 = vpack.c.b16 %v2125, %v2118
        %v2567 = vpack.c.b16 %v2126, %v2119
        %v2568 = vpack.c.b16 %v2127, %v2120
        %v2569 = vpack.c.b16 %v2128, %v2121
        %v2570 = vpack.c.b16 %v2129, %v2122
        %v2571 = vpack.c.b16 %v2137, %v2130
        %v2572 = vpack.c.b16 %v2138, %v2131
        %v2573 = vpack.c.b16 %v2139, %v2132
        %v2574 = vpack.c.b16 %v2140, %v2133
        %v2575 = vpack.c.b16 %v2141, %v2134
        %v2576 = vpack.c.b16 %v2142, %v2135
        %v2577 = vpack.c.b16 %v2143, %v2136
        %v2578 = vpack.c.b16 %v2151, %v2144
        %v2579 = vpack.c.b16 %v2152, %v2145
        %v2580 = vpack.c.b16 %v2153, %v2146
        %v2581 = vpack.c.b16 %v2154, %v2147
        %v2582 = vpack.c.b16 %v2155, %v2148
        %v2583 = vpack.c.b16 %v2156, %v2149
        %v2584 = vpack.c.b16 %v2157, %v2150
        %v2585 = vpack.c.b16 %v2165, %v2158
        %v2586 = vpack.c.b16 %v2166, %v2159
        %v2587 = vpack.c.b16 %v2167, %v2160
        %v2588 = vpack.c.b16 %v2168, %v2161
        %v2589 = vpack.c.b16 %v2169, %v2162
        %v2590 = vpack.c.b16 %v2170, %v2163
        %v2591 = vpack.c.b16 %v2171, %v2164
        %v2592 = vpack.c.b16 %v2179, %v2172
        %v2593 = vpack.c.b16 %v2180, %v2173
        %v2594 = vpack.c.b16 %v2181, %v2174
        %v2595 = vpack.c.b16 %v2182, %v2175
        %v2596 = vpack.c.b16 %v2183, %v2176
        %v2597 = vpack.c.b16 %v2184, %v2177
        %v2598 = vpack.c.b16 %v2185, %v2178
        %v2599 = vpack.c.b16 %v2193, %v2186
        %v2600 = vpack.c.b16 %v2194, %v2187
        %v2601 = vpack.c.b16 %v2195, %v2188
        %v2602 = vpack.c.b16 %v2196, %v2189
        %v2603 = vpack.c.b16 %v2197, %v2190
        %v2604 = vpack.c.b16 %v2198, %v2191
        %v2605 = vpack.c.b16 %v2199, %v2192
        %v2606 = vpack.c.b16 %v2207, %v2200
        %v2607 = vpack.c.b16 %v2208, %v2201
        %v2608 = vpack.c.b16 %v2209, %v2202
        %v2609 = vpack.c.b16 %v2210, %v2203
        %v2610 = vpack.c.b16 %v2211, %v2204
        %v2611 = vpack.c.b16 %v2212, %v2205
        %v2612 = vpack.c.b16 %v2213, %v2206
        %v2613 = vpack.c.b16 %v2221, %v2214
        %v2614 = vpack.c.b16 %v2222, %v2215
        %v2615 = vpack.c.b16 %v2223, %v2216
        %v2616 = vpack.c.b16 %v2224, %v2217
        %v2617 = vpack.c.b16 %v2225, %v2218
        %v2618 = vpack.c.b16 %v2226, %v2219
        %v2619 = vpack.c.b16 %v2227, %v2220
        %v2620 = vpack.c.b16 %v2235, %v2228
        %v2621 = vpack.c.b16 %v2236, %v2229
        %v2622 = vpack.c.b16 %v2237, %v2230
        %v2623 = vpack.c.b16 %v2238, %v2231
        %v2624 = vpack.c.b16 %v2239, %v2232
        %v2625 = vpack.c.b16 %v2240, %v2233
        %v2626 = vpack.c.b16 %v2241, %v2234
        %v2627 = vpack.c.b16 %v2249, %v2242
        %v2628 = vpack.c.b16 %v2250, %v2243
        %v2629 = vpack.c.b16 %v2251, %v2244
        %v2630 = vpack.c.b16 %v2252, %v2245
        %v2631 = vpack.c.b16 %v2253, %v2246
        %v2632 = vpack.c.b16 %v2254, %v2247
        %v2633 = vpack.c.b16 %v2255, %v2248
        %v2634 = vpack.c.b16 %v2263, %v2256
        %v2635 = vpack.c.b16 %v2264, %v2257
        %v2636 = vpack.c.b16 %v2265, %v2258
        %v2637 = vpack.c.b16 %v2266, %v2259
        %v2638 = vpack.c.b16 %v2267, %v2260
        %v2639 = vpack.c.b16 %v2268, %v2261
        %v2640 = vpack.c.b16 %v2269, %v2262
        %v2641 = vpack.c.b16 %v2277, %v2270
        %v2642 = vpack.c.b16 %v2278, %v2271
        %v2643 = vpack.c.b16 %v2279, %v2272
        %v2644 = vpack.c.b16 %v2280, %v2273
        %v2645 = vpack.c.b16 %v2281, %v2274
        %v2646 = vpack.c.b16 %v2282, %v2275
        %v2647 = vpack.c.b16 %v2283, %v2276
        %v2648 = vpack.c.b16 %v2291, %v2284
        %v2649 = vpack.c.b16 %v2292, %v2285
        %v2650 = vpack.c.b16 %v2293, %v2286
        %v2651 = vpack.c.b16 %v2294, %v2287
        %v2652 = vpack.c.b16 %v2295, %v2288
        %v2653 = vpack.c.b16 %v2296, %v2289
        %v2654 = vpack.c.b16 %v2297, %v2290
        %v2655 = vpack.c.b16 %v2305, %v2298
        %v2656 = vpack.c.b16 %v2306, %v2299
        %v2657 = vpack.c.b16 %v2307, %v2300
        %v2658 = vpack.c.b16 %v2308, %v2301
        %v2659 = vpack.c.b16 %v2309, %v2302
        %v2660 = vpack.c.b16 %v2310, %v2303
        %v2661 = vpack.c.b16 %v2311, %v2304
        %v2662 = vpack.c.b16 %v2319, %v2312
        %v2663 = vpack.c.b16 %v2320, %v2313
        %v2664 = vpack.c.b16 %v2321, %v2314
        %v2665 = vpack.c.b16 %v2322, %v2315
        %v2666 = vpack.c.b16 %v2323, %v2316
        %v2667 = vpack.c.b16 %v2324, %v2317
        %v2668 = vpack.c.b16 %v2325, %v2318
        %v2669 = vpack.c.b16 %v2333, %v2326
        %v2670 = vpack.c.b16 %v2334, %v2327
        %v2671 = vpack.c.b16 %v2335, %v2328
        %v2672 = vpack.c.b16 %v2336, %v2329
        %v2673 = vpack.c.b16 %v2337, %v2330
        %v2674 = vpack.c.b16 %v2338, %v2331
        %v2675 = vpack.c.b16 %v2339, %v2332
        %v2676 = vpack.c.b16 %v2347, %v2340
        %v2677 = vpack.c.b16 %v2348, %v2341
        %v2678 = vpack.c.b16 %v2349, %v2342
        %v2679 = vpack.c.b16 %v2350, %v2343
        %v2680 = vpack.c.b16 %v2351, %v2344
        %v2681 = vpack.c.b16 %v2352, %v2345
        %v2682 = vpack.c.b16 %v2353, %v2346
        %v2683 = vpack.c.b16 %v2361, %v2354
        %v2684 = vpack.c.b16 %v2362, %v2355
        %v2685 = vpack.c.b16 %v2363, %v2356
        %v2686 = vpack.c.b16 %v2364, %v2357
        %v2687 = vpack.c.b16 %v2365, %v2358
        %v2688 = vpack.c.b16 %v2366, %v2359
        %v2689 = vpack.c.b16 %v2367, %v2360
        %v2690 = vpack.c.b16 %v2375, %v2368
        %v2691 = vpack.c.b16 %v2376, %v2369
        %v2692 = vpack.c.b16 %v2377, %v2370
        %v2693 = vpack.c.b16 %v2378, %v2371
        %v2694 = vpack.c.b16 %v2379, %v2372
        %v2695 = vpack.c.b16 %v2380, %v2373
        %v2696 = vpack.c.b16 %v2381, %v2374
        %v2697 = vpack.c.b16 %v2389, %v2382
        %v2698 = vpack.c.b16 %v2390, %v2383
        %v2699 = vpack.c.b16 %v2391, %v2384
        %v2700 = vpack.c.b16 %v2392, %v2385
        %v2701 = vpack.c.b16 %v2393, %v2386
        %v2702 = vpack.c.b16 %v2394, %v2387
        %v2703 = vpack.c.b16 %v2395, %v2388
        %v2704 = vpack.c.b16 %v2403, %v2396
        %v2705 = vpack.c.b16 %v2404, %v2397
        %v2706 = vpack.c.b16 %v2405, %v2398
        %v2707 = vpack.c.b16 %v2406, %v2399
        %v2708 = vpack.c.b16 %v2407, %v2400
        %v2709 = vpack.c.b16 %v2408, %v2401
        %v2710 = vpack.c.b16 %v2409, %v2402
        %v2711 = vpack.c.b16 %v2417, %v2410
        %v2712 = vpack.c.b16 %v2418, %v2411
        %v2713 = vpack.c.b16 %v2419, %v2412
        %v2714 = vpack.c.b16 %v2420, %v2413
        %v2715 = vpack.c.b16 %v2421, %v2414
        %v2716 = vpack.c.b16 %v2422, %v2415
        %v2717 = vpack.c.b16 %v2423, %v2416
        %v2718 = vpack.c.b16 %v2431, %v2424
        %v2719 = vpack.c.b16 %v2432, %v2425
        %v2720 = vpack.c.b16 %v2433, %v2426
        %v2721 = vpack.c.b16 %v2434, %v2427
        %v2722 = vpack.c.b16 %v2435, %v2428
        %v2723 = vpack.c.b16 %v2436, %v2429
        %v2724 = vpack.c.b16 %v2437, %v2430
        %v2725 = vpack.c.b16 %v2445, %v2438
        %v2726 = vpack.c.b16 %v2446, %v2439
        %v2727 = vpack.c.b16 %v2447, %v2440
        %v2728 = vpack.c.b16 %v2448, %v2441
        %v2729 = vpack.c.b16 %v2449, %v2442
        %v2730 = vpack.c.b16 %v2450, %v2443
        %v2731 = vpack.c.b16 %v2451, %v2444
        %v2732 = vpack.c.b16 %v2459, %v2452
        %v2733 = vpack.c.b16 %v2460, %v2453
        %v2734 = vpack.c.b16 %v2461, %v2454
        %v2735 = vpack.c.b16 %v2462, %v2455
        %v2736 = vpack.c.b16 %v2463, %v2456
        %v2737 = vpack.c.b16 %v2464, %v2457
        %v2738 = vpack.c.b16 %v2465, %v2458
        %v2739 = vpack.c.b16 %v2473, %v2466
        %v2740 = vpack.c.b16 %v2474, %v2467
        %v2741 = vpack.c.b16 %v2475, %v2468
        %v2742 = vpack.c.b16 %v2476, %v2469
        %v2743 = vpack.c.b16 %v2477, %v2470
        %v2744 = vpack.c.b16 %v2478, %v2471
        %v2745 = vpack.c.b16 %v2479, %v2472
        %v2746 = vpack.c.b16 %v2487, %v2480
        %v2747 = vpack.c.b16 %v2488, %v2481
        %v2748 = vpack.c.b16 %v2489, %v2482
        %v2749 = vpack.c.b16 %v2490, %v2483
        %v2750 = vpack.c.b16 %v2491, %v2484
        %v2751 = vpack.c.b16 %v2492, %v2485
        %v2752 = vpack.c.b16 %v2493, %v2486
        %v2753 = vpack.c.b16 %v2501, %v2494
        %v2754 = vpack.c.b16 %v2502, %v2495
        %v2755 = vpack.c.b16 %v2503, %v2496
        %v2756 = vpack.c.b16 %v2504, %v2497
        %v2757 = vpack.c.b16 %v2505, %v2498
        %v2758 = vpack.c.b16 %v2506, %v2499
        %v2759 = vpack.c.b16 %v2507, %v2500
        %v2760 = vpack.c.b16 %v2515, %v2508
        %v2761 = vpack.c.b16 %v2516, %v2509
        %v2762 = vpack.c.b16 %v2517, %v2510
        %v2763 = vpack.c.b16 %v2518, %v2511
        %v2764 = vpack.c.b16 %v2519, %v2512
        %v2765 = vpack.c.b16 %v2520, %v2513
        %v2766 = vpack.c.b16 %v2521, %v2514
        %v2767 = vpack.c.b16 %v2529, %v2522
        %v2768 = vpack.c.b16 %v2530, %v2523
        %v2769 = vpack.c.b16 %v2531, %v2524
        %v2770 = vpack.c.b16 %v2532, %v2525
        %v2771 = vpack.c.b16 %v2533, %v2526
        %v2772 = vpack.c.b16 %v2534, %v2527
        %v2773 = vpack.c.b16 %v2535, %v2528
        %v2774 = vpack.c.b16 %v2543, %v2536
        %v2775 = vpack.c.b16 %v2544, %v2537
        %v2776 = vpack.c.b16 %v2545, %v2538
        %v2777 = vpack.c.b16 %v2546, %v2539
        %v2778 = vpack.c.b16 %v2547, %v2540
        %v2779 = vpack.c.b16 %v2548, %v2541
        %v2780 = vpack.c.b16 %v2549, %v2542
        %v2781 = vpack.c.b16 %v2557, %v2550
        %v2782 = vpack.c.b16 %v2558, %v2551
        %v2783 = vpack.c.b16 %v2559, %v2552
        %v2784 = vpack.c.b16 %v2560, %v2553
        %v2785 = vpack.c.b16 %v2561, %v2554
        %v2786 = vpack.c.b16 %v2562, %v2555
        %v2787 = vpack.c.b16 %v2563, %v2556
        %3012 = vmatpush.bf16.msra.mxu0 %v2613
        %3013 = vmatpush.bf16.msra.mxu0 %v2606
        %3014 = vmatpush.bf16.msra.mxu0 %v2599
        %3015 = vmatpush.bf16.msra.mxu0 %v2592
        %3016 = vmatpush.bf16.msra.mxu0 %v2585
        %3017 = vmatpush.bf16.msra.mxu0 %v2578
        %3018 = vmatpush.bf16.msra.mxu0 %v2571
        %3019 = vmatpush.bf16.msra.mxu0 %v2564
        %3020 = vmatmul.bf16.gmra.mxu0 %v1556
        %v3021 = vpop.f32.mrf.mxu0
        %v3022 = vadd.f32 %v1846, %v3021
        %v3023 = vpop.f32.mrf.mxu0
        %v3024 = vadd.f32 %v1846, %v3023
        %3025 = vmatmul.bf16.gmra.mxu0 %v1560
        %v3026 = vpop.f32.mrf.mxu0
        %v3027 = vadd.f32 %v1846, %v3026
        %v3028 = vpop.f32.mrf.mxu0
        %v3029 = vadd.f32 %v1846, %v3028
        %3030 = vmatmul.bf16.gmra.mxu0 %v1564
        %v3031 = vpop.f32.mrf.mxu0
        %v3032 = vadd.f32 %v1846, %v3031
        %v3033 = vpop.f32.mrf.mxu0
        %v3034 = vadd.f32 %v1846, %v3033
        %3035 = vmatmul.bf16.gmra.mxu0 %v1568
        %v3036 = vpop.f32.mrf.mxu0
        %v3037 = vadd.f32 %v1846, %v3036
        %v3038 = vpop.f32.mrf.mxu0
        %v3039 = vadd.f32 %v1846, %v3038
        %3040 = vmatmul.bf16.gmra.mxu0 %v1572
        %v3041 = vpop.f32.mrf.mxu0
        %v3042 = vadd.f32 %v1846, %v3041
        %v3043 = vpop.f32.mrf.mxu0
        %v3044 = vadd.f32 %v1846, %v3043
        %3045 = vmatmul.bf16.gmra.mxu0 %v1576
        %v3046 = vpop.f32.mrf.mxu0
        %v3047 = vadd.f32 %v1846, %v3046
        %v3048 = vpop.f32.mrf.mxu0
        %v3049 = vadd.f32 %v1846, %v3048
        %3050 = vmatmul.bf16.gmra.mxu0 %v1580
        %v3051 = vpop.f32.mrf.mxu0
        %v3052 = vadd.f32 %v1846, %v3051
        %v3053 = vpop.f32.mrf.mxu0
        %v3054 = vadd.f32 %v1846, %v3053
        %3055 = vmatmul.bf16.gmra.mxu0 %v1584
        %v3056 = vpop.f32.mrf.mxu0
        %v3057 = vadd.f32 %v1846, %v3056
        %v3058 = vpop.f32.mrf.mxu0
        %v3059 = vadd.f32 %v1846, %v3058
        %3060 = vdwg.mxu0
        %3061 = vmatpush.bf16.msra.mxu0 %v2669
        %3062 = vmatpush.bf16.msra.mxu0 %v2662
        %3063 = vmatpush.bf16.msra.mxu0 %v2655
        %3064 = vmatpush.bf16.msra.mxu0 %v2648
        %3065 = vmatpush.bf16.msra.mxu0 %v2641
        %3066 = vmatpush.bf16.msra.mxu0 %v2634
        %3067 = vmatpush.bf16.msra.mxu0 %v2627
        %3068 = vmatpush.bf16.msra.mxu0 %v2620
        %3069 = vmatmul.bf16.gmra.mxu0 %v1557
        %v3070 = vpop.f32.mrf.mxu0
        %v3071 = vadd.f32 %v3022, %v3070
        %v3072 = vpop.f32.mrf.mxu0
        %v3073 = vadd.f32 %v3024, %v3072
        %3074 = vmatmul.bf16.gmra.mxu0 %v1561
        %v3075 = vpop.f32.mrf.mxu0
        %v3076 = vadd.f32 %v3027, %v3075
        %v3077 = vpop.f32.mrf.mxu0
        %v3078 = vadd.f32 %v3029, %v3077
        %3079 = vmatmul.bf16.gmra.mxu0 %v1565
        %v3080 = vpop.f32.mrf.mxu0
        %v3081 = vadd.f32 %v3032, %v3080
        %v3082 = vpop.f32.mrf.mxu0
        %v3083 = vadd.f32 %v3034, %v3082
        %3084 = vmatmul.bf16.gmra.mxu0 %v1569
        %v3085 = vpop.f32.mrf.mxu0
        %v3086 = vadd.f32 %v3037, %v3085
        %v3087 = vpop.f32.mrf.mxu0
        %v3088 = vadd.f32 %v3039, %v3087
        %3089 = vmatmul.bf16.gmra.mxu0 %v1573
        %v3090 = vpop.f32.mrf.mxu0
        %v3091 = vadd.f32 %v3042, %v3090
        %v3092 = vpop.f32.mrf.mxu0
        %v3093 = vadd.f32 %v3044, %v3092
        %3094 = vmatmul.bf16.gmra.mxu0 %v1577
        %v3095 = vpop.f32.mrf.mxu0
        %v3096 = vadd.f32 %v3047, %v3095
        %v3097 = vpop.f32.mrf.mxu0
        %v3098 = vadd.f32 %v3049, %v3097
        %3099 = vmatmul.bf16.gmra.mxu0 %v1581
        %v3100 = vpop.f32.mrf.mxu0
        %v3101 = vadd.f32 %v3052, %v3100
        %v3102 = vpop.f32.mrf.mxu0
        %v3103 = vadd.f32 %v3054, %v3102
        %3104 = vmatmul.bf16.gmra.mxu0 %v1585
        %v3105 = vpop.f32.mrf.mxu0
        %v3106 = vadd.f32 %v3057, %v3105
        %v3107 = vpop.f32.mrf.mxu0
        %v3108 = vadd.f32 %v3059, %v3107
        %3109 = vdwg.mxu0
        %3110 = vmatpush.bf16.msra.mxu0 %v2725
        %3111 = vmatpush.bf16.msra.mxu0 %v2718
        %3112 = vmatpush.bf16.msra.mxu0 %v2711
        %3113 = vmatpush.bf16.msra.mxu0 %v2704
        %3114 = vmatpush.bf16.msra.mxu0 %v2697
        %3115 = vmatpush.bf16.msra.mxu0 %v2690
        %3116 = vmatpush.bf16.msra.mxu0 %v2683
        %3117 = vmatpush.bf16.msra.mxu0 %v2676
        %3118 = vmatmul.bf16.gmra.mxu0 %v1558
        %v3119 = vpop.f32.mrf.mxu0
        %v3120 = vadd.f32 %v3071, %v3119
        %v3121 = vpop.f32.mrf.mxu0
        %v3122 = vadd.f32 %v3073, %v3121
        %3123 = vmatmul.bf16.gmra.mxu0 %v1562
        %v3124 = vpop.f32.mrf.mxu0
        %v3125 = vadd.f32 %v3076, %v3124
        %v3126 = vpop.f32.mrf.mxu0
        %v3127 = vadd.f32 %v3078, %v3126
        %3128 = vmatmul.bf16.gmra.mxu0 %v1566
        %v3129 = vpop.f32.mrf.mxu0
        %v3130 = vadd.f32 %v3081, %v3129
        %v3131 = vpop.f32.mrf.mxu0
        %v3132 = vadd.f32 %v3083, %v3131
        %3133 = vmatmul.bf16.gmra.mxu0 %v1570
        %v3134 = vpop.f32.mrf.mxu0
        %v3135 = vadd.f32 %v3086, %v3134
        %v3136 = vpop.f32.mrf.mxu0
        %v3137 = vadd.f32 %v3088, %v3136
        %3138 = vmatmul.bf16.gmra.mxu0 %v1574
        %v3139 = vpop.f32.mrf.mxu0
        %v3140 = vadd.f32 %v3091, %v3139
        %v3141 = vpop.f32.mrf.mxu0
        %v3142 = vadd.f32 %v3093, %v3141
        %3143 = vmatmul.bf16.gmra.mxu0 %v1578
        %v3144 = vpop.f32.mrf.mxu0
        %v3145 = vadd.f32 %v3096, %v3144
        %v3146 = vpop.f32.mrf.mxu0
        %v3147 = vadd.f32 %v3098, %v3146
        %3148 = vmatmul.bf16.gmra.mxu0 %v1582
        %v3149 = vpop.f32.mrf.mxu0
        %v3150 = vadd.f32 %v3101, %v3149
        %v3151 = vpop.f32.mrf.mxu0
        %v3152 = vadd.f32 %v3103, %v3151
        %3153 = vmatmul.bf16.gmra.mxu0 %v1586
        %v3154 = vpop.f32.mrf.mxu0
        %v3155 = vadd.f32 %v3106, %v3154
        %v3156 = vpop.f32.mrf.mxu0
        %v3157 = vadd.f32 %v3108, %v3156
        %3158 = vdwg.mxu0
        %3159 = vmatpush.bf16.msra.mxu0 %v2781
        %3160 = vmatpush.bf16.msra.mxu0 %v2774
        %3161 = vmatpush.bf16.msra.mxu0 %v2767
        %3162 = vmatpush.bf16.msra.mxu0 %v2760
        %3163 = vmatpush.bf16.msra.mxu0 %v2753
        %3164 = vmatpush.bf16.msra.mxu0 %v2746
        %3165 = vmatpush.bf16.msra.mxu0 %v2739
        %3166 = vmatpush.bf16.msra.mxu0 %v2732
        %3167 = vmatmul.bf16.gmra.mxu0 %v1559
        %v3168 = vpop.f32.mrf.mxu0
        %v3169 = vadd.f32 %v3120, %v3168
        %v3170 = vpop.f32.mrf.mxu0
        %v3171 = vadd.f32 %v3122, %v3170
        %3172 = vmatmul.bf16.gmra.mxu0 %v1563
        %v3173 = vpop.f32.mrf.mxu0
        %v3174 = vadd.f32 %v3125, %v3173
        %v3175 = vpop.f32.mrf.mxu0
        %v3176 = vadd.f32 %v3127, %v3175
        %3177 = vmatmul.bf16.gmra.mxu0 %v1567
        %v3178 = vpop.f32.mrf.mxu0
        %v3179 = vadd.f32 %v3130, %v3178
        %v3180 = vpop.f32.mrf.mxu0
        %v3181 = vadd.f32 %v3132, %v3180
        %3182 = vmatmul.bf16.gmra.mxu0 %v1571
        %v3183 = vpop.f32.mrf.mxu0
        %v3184 = vadd.f32 %v3135, %v3183
        %v3185 = vpop.f32.mrf.mxu0
        %v3186 = vadd.f32 %v3137, %v3185
        %3187 = vmatmul.bf16.gmra.mxu0 %v1575
        %v3188 = vpop.f32.mrf.mxu0
        %v3189 = vadd.f32 %v3140, %v3188
        %v3190 = vpop.f32.mrf.mxu0
        %v3191 = vadd.f32 %v3142, %v3190
        %3192 = vmatmul.bf16.gmra.mxu0 %v1579
        %v3193 = vpop.f32.mrf.mxu0
        %v3194 = vadd.f32 %v3145, %v3193
        %v3195 = vpop.f32.mrf.mxu0
        %v3196 = vadd.f32 %v3147, %v3195
        %3197 = vmatmul.bf16.gmra.mxu0 %v1583
        %v3198 = vpop.f32.mrf.mxu0
        %v3199 = vadd.f32 %v3150, %v3198
        %v3200 = vpop.f32.mrf.mxu0
        %v3201 = vadd.f32 %v3152, %v3200
        %3202 = vmatmul.bf16.gmra.mxu0 %v1587
        %v3203 = vpop.f32.mrf.mxu0
        %v3204 = vadd.f32 %v3155, %v3203
        %v3205 = vpop.f32.mrf.mxu0
        %v3206 = vadd.f32 %v3157, %v3205
        %3207 = vdwg.mxu0
        %3208 = vmatpush.bf16.msra.mxu0 %v2614
        %3209 = vmatpush.bf16.msra.mxu0 %v2607
        %3210 = vmatpush.bf16.msra.mxu0 %v2600
        %3211 = vmatpush.bf16.msra.mxu0 %v2593
        %3212 = vmatpush.bf16.msra.mxu0 %v2586
        %3213 = vmatpush.bf16.msra.mxu0 %v2579
        %3214 = vmatpush.bf16.msra.mxu0 %v2572
        %3215 = vmatpush.bf16.msra.mxu0 %v2565
        %3216 = vmatmul.bf16.gmra.mxu0 %v1556
        %v3217 = vpop.f32.mrf.mxu0
        %v3218 = vadd.f32 %v1847, %v3217
        %v3219 = vpop.f32.mrf.mxu0
        %v3220 = vadd.f32 %v1847, %v3219
        %3221 = vmatmul.bf16.gmra.mxu0 %v1560
        %v3222 = vpop.f32.mrf.mxu0
        %v3223 = vadd.f32 %v1847, %v3222
        %v3224 = vpop.f32.mrf.mxu0
        %v3225 = vadd.f32 %v1847, %v3224
        %3226 = vmatmul.bf16.gmra.mxu0 %v1564
        %v3227 = vpop.f32.mrf.mxu0
        %v3228 = vadd.f32 %v1847, %v3227
        %v3229 = vpop.f32.mrf.mxu0
        %v3230 = vadd.f32 %v1847, %v3229
        %3231 = vmatmul.bf16.gmra.mxu0 %v1568
        %v3232 = vpop.f32.mrf.mxu0
        %v3233 = vadd.f32 %v1847, %v3232
        %v3234 = vpop.f32.mrf.mxu0
        %v3235 = vadd.f32 %v1847, %v3234
        %3236 = vmatmul.bf16.gmra.mxu0 %v1572
        %v3237 = vpop.f32.mrf.mxu0
        %v3238 = vadd.f32 %v1847, %v3237
        %v3239 = vpop.f32.mrf.mxu0
        %v3240 = vadd.f32 %v1847, %v3239
        %3241 = vmatmul.bf16.gmra.mxu0 %v1576
        %v3242 = vpop.f32.mrf.mxu0
        %v3243 = vadd.f32 %v1847, %v3242
        %v3244 = vpop.f32.mrf.mxu0
        %v3245 = vadd.f32 %v1847, %v3244
        %3246 = vmatmul.bf16.gmra.mxu0 %v1580
        %v3247 = vpop.f32.mrf.mxu0
        %v3248 = vadd.f32 %v1847, %v3247
        %v3249 = vpop.f32.mrf.mxu0
        %v3250 = vadd.f32 %v1847, %v3249
        %3251 = vmatmul.bf16.gmra.mxu0 %v1584
        %v3252 = vpop.f32.mrf.mxu0
        %v3253 = vadd.f32 %v1847, %v3252
        %v3254 = vpop.f32.mrf.mxu0
        %v3255 = vadd.f32 %v1847, %v3254
        %3256 = vdwg.mxu0
        %3257 = vmatpush.bf16.msra.mxu0 %v2670
        %3258 = vmatpush.bf16.msra.mxu0 %v2663
        %3259 = vmatpush.bf16.msra.mxu0 %v2656
        %3260 = vmatpush.bf16.msra.mxu0 %v2649
        %3261 = vmatpush.bf16.msra.mxu0 %v2642
        %3262 = vmatpush.bf16.msra.mxu0 %v2635
        %3263 = vmatpush.bf16.msra.mxu0 %v2628
        %3264 = vmatpush.bf16.msra.mxu0 %v2621
        %3265 = vmatmul.bf16.gmra.mxu0 %v1557
        %v3266 = vpop.f32.mrf.mxu0
        %v3267 = vadd.f32 %v3218, %v3266
        %v3268 = vpop.f32.mrf.mxu0
        %v3269 = vadd.f32 %v3220, %v3268
        %3270 = vmatmul.bf16.gmra.mxu0 %v1561
        %v3271 = vpop.f32.mrf.mxu0
        %v3272 = vadd.f32 %v3223, %v3271
        %v3273 = vpop.f32.mrf.mxu0
        %v3274 = vadd.f32 %v3225, %v3273
        %3275 = vmatmul.bf16.gmra.mxu0 %v1565
        %v3276 = vpop.f32.mrf.mxu0
        %v3277 = vadd.f32 %v3228, %v3276
        %v3278 = vpop.f32.mrf.mxu0
        %v3279 = vadd.f32 %v3230, %v3278
        %3280 = vmatmul.bf16.gmra.mxu0 %v1569
        %v3281 = vpop.f32.mrf.mxu0
        %v3282 = vadd.f32 %v3233, %v3281
        %v3283 = vpop.f32.mrf.mxu0
        %v3284 = vadd.f32 %v3235, %v3283
        %3285 = vmatmul.bf16.gmra.mxu0 %v1573
        %v3286 = vpop.f32.mrf.mxu0
        %v3287 = vadd.f32 %v3238, %v3286
        %v3288 = vpop.f32.mrf.mxu0
        %v3289 = vadd.f32 %v3240, %v3288
        %3290 = vmatmul.bf16.gmra.mxu0 %v1577
        %v3291 = vpop.f32.mrf.mxu0
        %v3292 = vadd.f32 %v3243, %v3291
        %v3293 = vpop.f32.mrf.mxu0
        %v3294 = vadd.f32 %v3245, %v3293
        %3295 = vmatmul.bf16.gmra.mxu0 %v1581
        %v3296 = vpop.f32.mrf.mxu0
        %v3297 = vadd.f32 %v3248, %v3296
        %v3298 = vpop.f32.mrf.mxu0
        %v3299 = vadd.f32 %v3250, %v3298
        %3300 = vmatmul.bf16.gmra.mxu0 %v1585
        %v3301 = vpop.f32.mrf.mxu0
        %v3302 = vadd.f32 %v3253, %v3301
        %v3303 = vpop.f32.mrf.mxu0
        %v3304 = vadd.f32 %v3255, %v3303
        %3305 = vdwg.mxu0
        %3306 = vmatpush.bf16.msra.mxu0 %v2726
        %3307 = vmatpush.bf16.msra.mxu0 %v2719
        %3308 = vmatpush.bf16.msra.mxu0 %v2712
        %3309 = vmatpush.bf16.msra.mxu0 %v2705
        %3310 = vmatpush.bf16.msra.mxu0 %v2698
        %3311 = vmatpush.bf16.msra.mxu0 %v2691
        %3312 = vmatpush.bf16.msra.mxu0 %v2684
        %3313 = vmatpush.bf16.msra.mxu0 %v2677
        %3314 = vmatmul.bf16.gmra.mxu0 %v1558
        %v3315 = vpop.f32.mrf.mxu0
        %v3316 = vadd.f32 %v3267, %v3315
        %v3317 = vpop.f32.mrf.mxu0
        %v3318 = vadd.f32 %v3269, %v3317
        %3319 = vmatmul.bf16.gmra.mxu0 %v1562
        %v3320 = vpop.f32.mrf.mxu0
        %v3321 = vadd.f32 %v3272, %v3320
        %v3322 = vpop.f32.mrf.mxu0
        %v3323 = vadd.f32 %v3274, %v3322
        %3324 = vmatmul.bf16.gmra.mxu0 %v1566
        %v3325 = vpop.f32.mrf.mxu0
        %v3326 = vadd.f32 %v3277, %v3325
        %v3327 = vpop.f32.mrf.mxu0
        %v3328 = vadd.f32 %v3279, %v3327
        %3329 = vmatmul.bf16.gmra.mxu0 %v1570
        %v3330 = vpop.f32.mrf.mxu0
        %v3331 = vadd.f32 %v3282, %v3330
        %v3332 = vpop.f32.mrf.mxu0
        %v3333 = vadd.f32 %v3284, %v3332
        %3334 = vmatmul.bf16.gmra.mxu0 %v1574
        %v3335 = vpop.f32.mrf.mxu0
        %v3336 = vadd.f32 %v3287, %v3335
        %v3337 = vpop.f32.mrf.mxu0
        %v3338 = vadd.f32 %v3289, %v3337
        %3339 = vmatmul.bf16.gmra.mxu0 %v1578
        %v3340 = vpop.f32.mrf.mxu0
        %v3341 = vadd.f32 %v3292, %v3340
        %v3342 = vpop.f32.mrf.mxu0
        %v3343 = vadd.f32 %v3294, %v3342
        %3344 = vmatmul.bf16.gmra.mxu0 %v1582
        %v3345 = vpop.f32.mrf.mxu0
        %v3346 = vadd.f32 %v3297, %v3345
        %v3347 = vpop.f32.mrf.mxu0
        %v3348 = vadd.f32 %v3299, %v3347
        %3349 = vmatmul.bf16.gmra.mxu0 %v1586
        %v3350 = vpop.f32.mrf.mxu0
        %v3351 = vadd.f32 %v3302, %v3350
        %v3352 = vpop.f32.mrf.mxu0
        %v3353 = vadd.f32 %v3304, %v3352
        %3354 = vdwg.mxu0
        %3355 = vmatpush.bf16.msra.mxu0 %v2782
        %3356 = vmatpush.bf16.msra.mxu0 %v2775
        %3357 = vmatpush.bf16.msra.mxu0 %v2768
        %3358 = vmatpush.bf16.msra.mxu0 %v2761
        %3359 = vmatpush.bf16.msra.mxu0 %v2754
        %3360 = vmatpush.bf16.msra.mxu0 %v2747
        %3361 = vmatpush.bf16.msra.mxu0 %v2740
        %3362 = vmatpush.bf16.msra.mxu0 %v2733
        %3363 = vmatmul.bf16.gmra.mxu0 %v1559
        %v3364 = vpop.f32.mrf.mxu0
        %v3365 = vadd.f32 %v3316, %v3364
        %v3366 = vpop.f32.mrf.mxu0
        %v3367 = vadd.f32 %v3318, %v3366
        %3368 = vmatmul.bf16.gmra.mxu0 %v1563
        %v3369 = vpop.f32.mrf.mxu0
        %v3370 = vadd.f32 %v3321, %v3369
        %v3371 = vpop.f32.mrf.mxu0
        %v3372 = vadd.f32 %v3323, %v3371
        %3373 = vmatmul.bf16.gmra.mxu0 %v1567
        %v3374 = vpop.f32.mrf.mxu0
        %v3375 = vadd.f32 %v3326, %v3374
        %v3376 = vpop.f32.mrf.mxu0
        %v3377 = vadd.f32 %v3328, %v3376
        %3378 = vmatmul.bf16.gmra.mxu0 %v1571
        %v3379 = vpop.f32.mrf.mxu0
        %v3380 = vadd.f32 %v3331, %v3379
        %v3381 = vpop.f32.mrf.mxu0
        %v3382 = vadd.f32 %v3333, %v3381
        %3383 = vmatmul.bf16.gmra.mxu0 %v1575
        %v3384 = vpop.f32.mrf.mxu0
        %v3385 = vadd.f32 %v3336, %v3384
        %v3386 = vpop.f32.mrf.mxu0
        %v3387 = vadd.f32 %v3338, %v3386
        %3388 = vmatmul.bf16.gmra.mxu0 %v1579
        %v3389 = vpop.f32.mrf.mxu0
        %v3390 = vadd.f32 %v3341, %v3389
        %v3391 = vpop.f32.mrf.mxu0
        %v3392 = vadd.f32 %v3343, %v3391
        %3393 = vmatmul.bf16.gmra.mxu0 %v1583
        %v3394 = vpop.f32.mrf.mxu0
        %v3395 = vadd.f32 %v3346, %v3394
        %v3396 = vpop.f32.mrf.mxu0
        %v3397 = vadd.f32 %v3348, %v3396
        %3398 = vmatmul.bf16.gmra.mxu0 %v1587
        %v3399 = vpop.f32.mrf.mxu0
        %v3400 = vadd.f32 %v3351, %v3399
        %v3401 = vpop.f32.mrf.mxu0
        %v3402 = vadd.f32 %v3353, %v3401
        %3403 = vdwg.mxu0
        %3404 = vmatpush.bf16.msra.mxu0 %v2615
        %3405 = vmatpush.bf16.msra.mxu0 %v2608
        %3406 = vmatpush.bf16.msra.mxu0 %v2601
        %3407 = vmatpush.bf16.msra.mxu0 %v2594
        %3408 = vmatpush.bf16.msra.mxu0 %v2587
        %3409 = vmatpush.bf16.msra.mxu0 %v2580
        %3410 = vmatpush.bf16.msra.mxu0 %v2573
        %3411 = vmatpush.bf16.msra.mxu0 %v2566
        %3412 = vmatmul.bf16.gmra.mxu0 %v1556
        %v3413 = vpop.f32.mrf.mxu0
        %v3414 = vadd.f32 %v1848, %v3413
        %v3415 = vpop.f32.mrf.mxu0
        %v3416 = vadd.f32 %v1848, %v3415
        %3417 = vmatmul.bf16.gmra.mxu0 %v1560
        %v3418 = vpop.f32.mrf.mxu0
        %v3419 = vadd.f32 %v1848, %v3418
        %v3420 = vpop.f32.mrf.mxu0
        %v3421 = vadd.f32 %v1848, %v3420
        %3422 = vmatmul.bf16.gmra.mxu0 %v1564
        %v3423 = vpop.f32.mrf.mxu0
        %v3424 = vadd.f32 %v1848, %v3423
        %v3425 = vpop.f32.mrf.mxu0
        %v3426 = vadd.f32 %v1848, %v3425
        %3427 = vmatmul.bf16.gmra.mxu0 %v1568
        %v3428 = vpop.f32.mrf.mxu0
        %v3429 = vadd.f32 %v1848, %v3428
        %v3430 = vpop.f32.mrf.mxu0
        %v3431 = vadd.f32 %v1848, %v3430
        %3432 = vmatmul.bf16.gmra.mxu0 %v1572
        %v3433 = vpop.f32.mrf.mxu0
        %v3434 = vadd.f32 %v1848, %v3433
        %v3435 = vpop.f32.mrf.mxu0
        %v3436 = vadd.f32 %v1848, %v3435
        %3437 = vmatmul.bf16.gmra.mxu0 %v1576
        %v3438 = vpop.f32.mrf.mxu0
        %v3439 = vadd.f32 %v1848, %v3438
        %v3440 = vpop.f32.mrf.mxu0
        %v3441 = vadd.f32 %v1848, %v3440
        %3442 = vmatmul.bf16.gmra.mxu0 %v1580
        %v3443 = vpop.f32.mrf.mxu0
        %v3444 = vadd.f32 %v1848, %v3443
        %v3445 = vpop.f32.mrf.mxu0
        %v3446 = vadd.f32 %v1848, %v3445
        %3447 = vmatmul.bf16.gmra.mxu0 %v1584
        %v3448 = vpop.f32.mrf.mxu0
        %v3449 = vadd.f32 %v1848, %v3448
        %v3450 = vpop.f32.mrf.mxu0
        %v3451 = vadd.f32 %v1848, %v3450
        %3452 = vdwg.mxu0
        %3453 = vmatpush.bf16.msra.mxu0 %v2671
        %3454 = vmatpush.bf16.msra.mxu0 %v2664
        %3455 = vmatpush.bf16.msra.mxu0 %v2657
        %3456 = vmatpush.bf16.msra.mxu0 %v2650
        %3457 = vmatpush.bf16.msra.mxu0 %v2643
        %3458 = vmatpush.bf16.msra.mxu0 %v2636
        %3459 = vmatpush.bf16.msra.mxu0 %v2629
        %3460 = vmatpush.bf16.msra.mxu0 %v2622
        %3461 = vmatmul.bf16.gmra.mxu0 %v1557
        %v3462 = vpop.f32.mrf.mxu0
        %v3463 = vadd.f32 %v3414, %v3462
        %v3464 = vpop.f32.mrf.mxu0
        %v3465 = vadd.f32 %v3416, %v3464
        %3466 = vmatmul.bf16.gmra.mxu0 %v1561
        %v3467 = vpop.f32.mrf.mxu0
        %v3468 = vadd.f32 %v3419, %v3467
        %v3469 = vpop.f32.mrf.mxu0
        %v3470 = vadd.f32 %v3421, %v3469
        %3471 = vmatmul.bf16.gmra.mxu0 %v1565
        %v3472 = vpop.f32.mrf.mxu0
        %v3473 = vadd.f32 %v3424, %v3472
        %v3474 = vpop.f32.mrf.mxu0
        %v3475 = vadd.f32 %v3426, %v3474
        %3476 = vmatmul.bf16.gmra.mxu0 %v1569
        %v3477 = vpop.f32.mrf.mxu0
        %v3478 = vadd.f32 %v3429, %v3477
        %v3479 = vpop.f32.mrf.mxu0
        %v3480 = vadd.f32 %v3431, %v3479
        %3481 = vmatmul.bf16.gmra.mxu0 %v1573
        %v3482 = vpop.f32.mrf.mxu0
        %v3483 = vadd.f32 %v3434, %v3482
        %v3484 = vpop.f32.mrf.mxu0
        %v3485 = vadd.f32 %v3436, %v3484
        %3486 = vmatmul.bf16.gmra.mxu0 %v1577
        %v3487 = vpop.f32.mrf.mxu0
        %v3488 = vadd.f32 %v3439, %v3487
        %v3489 = vpop.f32.mrf.mxu0
        %v3490 = vadd.f32 %v3441, %v3489
        %3491 = vmatmul.bf16.gmra.mxu0 %v1581
        %v3492 = vpop.f32.mrf.mxu0
        %v3493 = vadd.f32 %v3444, %v3492
        %v3494 = vpop.f32.mrf.mxu0
        %v3495 = vadd.f32 %v3446, %v3494
        %3496 = vmatmul.bf16.gmra.mxu0 %v1585
        %v3497 = vpop.f32.mrf.mxu0
        %v3498 = vadd.f32 %v3449, %v3497
        %v3499 = vpop.f32.mrf.mxu0
        %v3500 = vadd.f32 %v3451, %v3499
        %3501 = vdwg.mxu0
        %3502 = vmatpush.bf16.msra.mxu0 %v2727
        %3503 = vmatpush.bf16.msra.mxu0 %v2720
        %3504 = vmatpush.bf16.msra.mxu0 %v2713
        %3505 = vmatpush.bf16.msra.mxu0 %v2706
        %3506 = vmatpush.bf16.msra.mxu0 %v2699
        %3507 = vmatpush.bf16.msra.mxu0 %v2692
        %3508 = vmatpush.bf16.msra.mxu0 %v2685
        %3509 = vmatpush.bf16.msra.mxu0 %v2678
        %3510 = vmatmul.bf16.gmra.mxu0 %v1558
        %v3511 = vpop.f32.mrf.mxu0
        %v3512 = vadd.f32 %v3463, %v3511
        %v3513 = vpop.f32.mrf.mxu0
        %v3514 = vadd.f32 %v3465, %v3513
        %3515 = vmatmul.bf16.gmra.mxu0 %v1562
        %v3516 = vpop.f32.mrf.mxu0
        %v3517 = vadd.f32 %v3468, %v3516
        %v3518 = vpop.f32.mrf.mxu0
        %v3519 = vadd.f32 %v3470, %v3518
        %3520 = vmatmul.bf16.gmra.mxu0 %v1566
        %v3521 = vpop.f32.mrf.mxu0
        %v3522 = vadd.f32 %v3473, %v3521
        %v3523 = vpop.f32.mrf.mxu0
        %v3524 = vadd.f32 %v3475, %v3523
        %3525 = vmatmul.bf16.gmra.mxu0 %v1570
        %v3526 = vpop.f32.mrf.mxu0
        %v3527 = vadd.f32 %v3478, %v3526
        %v3528 = vpop.f32.mrf.mxu0
        %v3529 = vadd.f32 %v3480, %v3528
        %3530 = vmatmul.bf16.gmra.mxu0 %v1574
        %v3531 = vpop.f32.mrf.mxu0
        %v3532 = vadd.f32 %v3483, %v3531
        %v3533 = vpop.f32.mrf.mxu0
        %v3534 = vadd.f32 %v3485, %v3533
        %3535 = vmatmul.bf16.gmra.mxu0 %v1578
        %v3536 = vpop.f32.mrf.mxu0
        %v3537 = vadd.f32 %v3488, %v3536
        %v3538 = vpop.f32.mrf.mxu0
        %v3539 = vadd.f32 %v3490, %v3538
        %3540 = vmatmul.bf16.gmra.mxu0 %v1582
        %v3541 = vpop.f32.mrf.mxu0
        %v3542 = vadd.f32 %v3493, %v3541
        %v3543 = vpop.f32.mrf.mxu0
        %v3544 = vadd.f32 %v3495, %v3543
        %3545 = vmatmul.bf16.gmra.mxu0 %v1586
        %v3546 = vpop.f32.mrf.mxu0
        %v3547 = vadd.f32 %v3498, %v3546
        %v3548 = vpop.f32.mrf.mxu0
        %v3549 = vadd.f32 %v3500, %v3548
        %3550 = vdwg.mxu0
        %3551 = vmatpush.bf16.msra.mxu0 %v2783
        %3552 = vmatpush.bf16.msra.mxu0 %v2776
        %3553 = vmatpush.bf16.msra.mxu0 %v2769
        %3554 = vmatpush.bf16.msra.mxu0 %v2762
        %3555 = vmatpush.bf16.msra.mxu0 %v2755
        %3556 = vmatpush.bf16.msra.mxu0 %v2748
        %3557 = vmatpush.bf16.msra.mxu0 %v2741
        %3558 = vmatpush.bf16.msra.mxu0 %v2734
        %3559 = vmatmul.bf16.gmra.mxu0 %v1559
        %v3560 = vpop.f32.mrf.mxu0
        %v3561 = vadd.f32 %v3512, %v3560
        %v3562 = vpop.f32.mrf.mxu0
        %v3563 = vadd.f32 %v3514, %v3562
        %3564 = vmatmul.bf16.gmra.mxu0 %v1563
        %v3565 = vpop.f32.mrf.mxu0
        %v3566 = vadd.f32 %v3517, %v3565
        %v3567 = vpop.f32.mrf.mxu0
        %v3568 = vadd.f32 %v3519, %v3567
        %3569 = vmatmul.bf16.gmra.mxu0 %v1567
        %v3570 = vpop.f32.mrf.mxu0
        %v3571 = vadd.f32 %v3522, %v3570
        %v3572 = vpop.f32.mrf.mxu0
        %v3573 = vadd.f32 %v3524, %v3572
        %3574 = vmatmul.bf16.gmra.mxu0 %v1571
        %v3575 = vpop.f32.mrf.mxu0
        %v3576 = vadd.f32 %v3527, %v3575
        %v3577 = vpop.f32.mrf.mxu0
        %v3578 = vadd.f32 %v3529, %v3577
        %3579 = vmatmul.bf16.gmra.mxu0 %v1575
        %v3580 = vpop.f32.mrf.mxu0
        %v3581 = vadd.f32 %v3532, %v3580
        %v3582 = vpop.f32.mrf.mxu0
        %v3583 = vadd.f32 %v3534, %v3582
        %3584 = vmatmul.bf16.gmra.mxu0 %v1579
        %v3585 = vpop.f32.mrf.mxu0
        %v3586 = vadd.f32 %v3537, %v3585
        %v3587 = vpop.f32.mrf.mxu0
        %v3588 = vadd.f32 %v3539, %v3587
        %3589 = vmatmul.bf16.gmra.mxu0 %v1583
        %v3590 = vpop.f32.mrf.mxu0
        %v3591 = vadd.f32 %v3542, %v3590
        %v3592 = vpop.f32.mrf.mxu0
        %v3593 = vadd.f32 %v3544, %v3592
        %3594 = vmatmul.bf16.gmra.mxu0 %v1587
        %v3595 = vpop.f32.mrf.mxu0
        %v3596 = vadd.f32 %v3547, %v3595
        %v3597 = vpop.f32.mrf.mxu0
        %v3598 = vadd.f32 %v3549, %v3597
        %3599 = vdwg.mxu0
        %3600 = vmatpush.bf16.msra.mxu0 %v2616
        %3601 = vmatpush.bf16.msra.mxu0 %v2609
        %3602 = vmatpush.bf16.msra.mxu0 %v2602
        %3603 = vmatpush.bf16.msra.mxu0 %v2595
        %3604 = vmatpush.bf16.msra.mxu0 %v2588
        %3605 = vmatpush.bf16.msra.mxu0 %v2581
        %3606 = vmatpush.bf16.msra.mxu0 %v2574
        %3607 = vmatpush.bf16.msra.mxu0 %v2567
        %3608 = vmatmul.bf16.gmra.mxu0 %v1556
        %v3609 = vpop.f32.mrf.mxu0
        %v3610 = vadd.f32 %v1849, %v3609
        %v3611 = vpop.f32.mrf.mxu0
        %v3612 = vadd.f32 %v1849, %v3611
        %3613 = vmatmul.bf16.gmra.mxu0 %v1560
        %v3614 = vpop.f32.mrf.mxu0
        %v3615 = vadd.f32 %v1849, %v3614
        %v3616 = vpop.f32.mrf.mxu0
        %v3617 = vadd.f32 %v1849, %v3616
        %3618 = vmatmul.bf16.gmra.mxu0 %v1564
        %v3619 = vpop.f32.mrf.mxu0
        %v3620 = vadd.f32 %v1849, %v3619
        %v3621 = vpop.f32.mrf.mxu0
        %v3622 = vadd.f32 %v1849, %v3621
        %3623 = vmatmul.bf16.gmra.mxu0 %v1568
        %v3624 = vpop.f32.mrf.mxu0
        %v3625 = vadd.f32 %v1849, %v3624
        %v3626 = vpop.f32.mrf.mxu0
        %v3627 = vadd.f32 %v1849, %v3626
        %3628 = vmatmul.bf16.gmra.mxu0 %v1572
        %v3629 = vpop.f32.mrf.mxu0
        %v3630 = vadd.f32 %v1849, %v3629
        %v3631 = vpop.f32.mrf.mxu0
        %v3632 = vadd.f32 %v1849, %v3631
        %3633 = vmatmul.bf16.gmra.mxu0 %v1576
        %v3634 = vpop.f32.mrf.mxu0
        %v3635 = vadd.f32 %v1849, %v3634
        %v3636 = vpop.f32.mrf.mxu0
        %v3637 = vadd.f32 %v1849, %v3636
        %3638 = vmatmul.bf16.gmra.mxu0 %v1580
        %v3639 = vpop.f32.mrf.mxu0
        %v3640 = vadd.f32 %v1849, %v3639
        %v3641 = vpop.f32.mrf.mxu0
        %v3642 = vadd.f32 %v1849, %v3641
        %3643 = vmatmul.bf16.gmra.mxu0 %v1584
        %v3644 = vpop.f32.mrf.mxu0
        %v3645 = vadd.f32 %v1849, %v3644
        %v3646 = vpop.f32.mrf.mxu0
        %v3647 = vadd.f32 %v1849, %v3646
        %3648 = vdwg.mxu0
        %3649 = vmatpush.bf16.msra.mxu0 %v2672
        %3650 = vmatpush.bf16.msra.mxu0 %v2665
        %3651 = vmatpush.bf16.msra.mxu0 %v2658
        %3652 = vmatpush.bf16.msra.mxu0 %v2651
        %3653 = vmatpush.bf16.msra.mxu0 %v2644
        %3654 = vmatpush.bf16.msra.mxu0 %v2637
        %3655 = vmatpush.bf16.msra.mxu0 %v2630
        %3656 = vmatpush.bf16.msra.mxu0 %v2623
        %3657 = vmatmul.bf16.gmra.mxu0 %v1557
        %v3658 = vpop.f32.mrf.mxu0
        %v3659 = vadd.f32 %v3610, %v3658
        %v3660 = vpop.f32.mrf.mxu0
        %v3661 = vadd.f32 %v3612, %v3660
        %3662 = vmatmul.bf16.gmra.mxu0 %v1561
        %v3663 = vpop.f32.mrf.mxu0
        %v3664 = vadd.f32 %v3615, %v3663
        %v3665 = vpop.f32.mrf.mxu0
        %v3666 = vadd.f32 %v3617, %v3665
        %3667 = vmatmul.bf16.gmra.mxu0 %v1565
        %v3668 = vpop.f32.mrf.mxu0
        %v3669 = vadd.f32 %v3620, %v3668
        %v3670 = vpop.f32.mrf.mxu0
        %v3671 = vadd.f32 %v3622, %v3670
        %3672 = vmatmul.bf16.gmra.mxu0 %v1569
        %v3673 = vpop.f32.mrf.mxu0
        %v3674 = vadd.f32 %v3625, %v3673
        %v3675 = vpop.f32.mrf.mxu0
        %v3676 = vadd.f32 %v3627, %v3675
        %3677 = vmatmul.bf16.gmra.mxu0 %v1573
        %v3678 = vpop.f32.mrf.mxu0
        %v3679 = vadd.f32 %v3630, %v3678
        %v3680 = vpop.f32.mrf.mxu0
        %v3681 = vadd.f32 %v3632, %v3680
        %3682 = vmatmul.bf16.gmra.mxu0 %v1577
        %v3683 = vpop.f32.mrf.mxu0
        %v3684 = vadd.f32 %v3635, %v3683
        %v3685 = vpop.f32.mrf.mxu0
        %v3686 = vadd.f32 %v3637, %v3685
        %3687 = vmatmul.bf16.gmra.mxu0 %v1581
        %v3688 = vpop.f32.mrf.mxu0
        %v3689 = vadd.f32 %v3640, %v3688
        %v3690 = vpop.f32.mrf.mxu0
        %v3691 = vadd.f32 %v3642, %v3690
        %3692 = vmatmul.bf16.gmra.mxu0 %v1585
        %v3693 = vpop.f32.mrf.mxu0
        %v3694 = vadd.f32 %v3645, %v3693
        %v3695 = vpop.f32.mrf.mxu0
        %v3696 = vadd.f32 %v3647, %v3695
        %3697 = vdwg.mxu0
        %3698 = vmatpush.bf16.msra.mxu0 %v2728
        %3699 = vmatpush.bf16.msra.mxu0 %v2721
        %3700 = vmatpush.bf16.msra.mxu0 %v2714
        %3701 = vmatpush.bf16.msra.mxu0 %v2707
        %3702 = vmatpush.bf16.msra.mxu0 %v2700
        %3703 = vmatpush.bf16.msra.mxu0 %v2693
        %3704 = vmatpush.bf16.msra.mxu0 %v2686
        %3705 = vmatpush.bf16.msra.mxu0 %v2679
        %3706 = vmatmul.bf16.gmra.mxu0 %v1558
        %v3707 = vpop.f32.mrf.mxu0
        %v3708 = vadd.f32 %v3659, %v3707
        %v3709 = vpop.f32.mrf.mxu0
        %v3710 = vadd.f32 %v3661, %v3709
        %3711 = vmatmul.bf16.gmra.mxu0 %v1562
        %v3712 = vpop.f32.mrf.mxu0
        %v3713 = vadd.f32 %v3664, %v3712
        %v3714 = vpop.f32.mrf.mxu0
        %v3715 = vadd.f32 %v3666, %v3714
        %3716 = vmatmul.bf16.gmra.mxu0 %v1566
        %v3717 = vpop.f32.mrf.mxu0
        %v3718 = vadd.f32 %v3669, %v3717
        %v3719 = vpop.f32.mrf.mxu0
        %v3720 = vadd.f32 %v3671, %v3719
        %3721 = vmatmul.bf16.gmra.mxu0 %v1570
        %v3722 = vpop.f32.mrf.mxu0
        %v3723 = vadd.f32 %v3674, %v3722
        %v3724 = vpop.f32.mrf.mxu0
        %v3725 = vadd.f32 %v3676, %v3724
        %3726 = vmatmul.bf16.gmra.mxu0 %v1574
        %v3727 = vpop.f32.mrf.mxu0
        %v3728 = vadd.f32 %v3679, %v3727
        %v3729 = vpop.f32.mrf.mxu0
        %v3730 = vadd.f32 %v3681, %v3729
        %3731 = vmatmul.bf16.gmra.mxu0 %v1578
        %v3732 = vpop.f32.mrf.mxu0
        %v3733 = vadd.f32 %v3684, %v3732
        %v3734 = vpop.f32.mrf.mxu0
        %v3735 = vadd.f32 %v3686, %v3734
        %3736 = vmatmul.bf16.gmra.mxu0 %v1582
        %v3737 = vpop.f32.mrf.mxu0
        %v3738 = vadd.f32 %v3689, %v3737
        %v3739 = vpop.f32.mrf.mxu0
        %v3740 = vadd.f32 %v3691, %v3739
        %3741 = vmatmul.bf16.gmra.mxu0 %v1586
        %v3742 = vpop.f32.mrf.mxu0
        %v3743 = vadd.f32 %v3694, %v3742
        %v3744 = vpop.f32.mrf.mxu0
        %v3745 = vadd.f32 %v3696, %v3744
        %3746 = vdwg.mxu0
        %3747 = vmatpush.bf16.msra.mxu0 %v2784
        %3748 = vmatpush.bf16.msra.mxu0 %v2777
        %3749 = vmatpush.bf16.msra.mxu0 %v2770
        %3750 = vmatpush.bf16.msra.mxu0 %v2763
        %3751 = vmatpush.bf16.msra.mxu0 %v2756
        %3752 = vmatpush.bf16.msra.mxu0 %v2749
        %3753 = vmatpush.bf16.msra.mxu0 %v2742
        %3754 = vmatpush.bf16.msra.mxu0 %v2735
        %3755 = vmatmul.bf16.gmra.mxu0 %v1559
        %v3756 = vpop.f32.mrf.mxu0
        %v3757 = vadd.f32 %v3708, %v3756
        %v3758 = vpop.f32.mrf.mxu0
        %v3759 = vadd.f32 %v3710, %v3758
        %3760 = vmatmul.bf16.gmra.mxu0 %v1563
        %v3761 = vpop.f32.mrf.mxu0
        %v3762 = vadd.f32 %v3713, %v3761
        %v3763 = vpop.f32.mrf.mxu0
        %v3764 = vadd.f32 %v3715, %v3763
        %3765 = vmatmul.bf16.gmra.mxu0 %v1567
        %v3766 = vpop.f32.mrf.mxu0
        %v3767 = vadd.f32 %v3718, %v3766
        %v3768 = vpop.f32.mrf.mxu0
        %v3769 = vadd.f32 %v3720, %v3768
        %3770 = vmatmul.bf16.gmra.mxu0 %v1571
        %v3771 = vpop.f32.mrf.mxu0
        %v3772 = vadd.f32 %v3723, %v3771
        %v3773 = vpop.f32.mrf.mxu0
        %v3774 = vadd.f32 %v3725, %v3773
        %3775 = vmatmul.bf16.gmra.mxu0 %v1575
        %v3776 = vpop.f32.mrf.mxu0
        %v3777 = vadd.f32 %v3728, %v3776
        %v3778 = vpop.f32.mrf.mxu0
        %v3779 = vadd.f32 %v3730, %v3778
        %3780 = vmatmul.bf16.gmra.mxu0 %v1579
        %v3781 = vpop.f32.mrf.mxu0
        %v3782 = vadd.f32 %v3733, %v3781
        %v3783 = vpop.f32.mrf.mxu0
        %v3784 = vadd.f32 %v3735, %v3783
        %3785 = vmatmul.bf16.gmra.mxu0 %v1583
        %v3786 = vpop.f32.mrf.mxu0
        %v3787 = vadd.f32 %v3738, %v3786
        %v3788 = vpop.f32.mrf.mxu0
        %v3789 = vadd.f32 %v3740, %v3788
        %3790 = vmatmul.bf16.gmra.mxu0 %v1587
        %v3791 = vpop.f32.mrf.mxu0
        %v3792 = vadd.f32 %v3743, %v3791
        %v3793 = vpop.f32.mrf.mxu0
        %v3794 = vadd.f32 %v3745, %v3793
        %3795 = vdwg.mxu0
        %3796 = vmatpush.bf16.msra.mxu0 %v2617
        %3797 = vmatpush.bf16.msra.mxu0 %v2610
        %3798 = vmatpush.bf16.msra.mxu0 %v2603
        %3799 = vmatpush.bf16.msra.mxu0 %v2596
        %3800 = vmatpush.bf16.msra.mxu0 %v2589
        %3801 = vmatpush.bf16.msra.mxu0 %v2582
        %3802 = vmatpush.bf16.msra.mxu0 %v2575
        %3803 = vmatpush.bf16.msra.mxu0 %v2568
        %3804 = vmatmul.bf16.gmra.mxu0 %v1556
        %v3805 = vpop.f32.mrf.mxu0
        %v3806 = vadd.f32 %v1850, %v3805
        %v3807 = vpop.f32.mrf.mxu0
        %v3808 = vadd.f32 %v1850, %v3807
        %3809 = vmatmul.bf16.gmra.mxu0 %v1560
        %v3810 = vpop.f32.mrf.mxu0
        %v3811 = vadd.f32 %v1850, %v3810
        %v3812 = vpop.f32.mrf.mxu0
        %v3813 = vadd.f32 %v1850, %v3812
        %3814 = vmatmul.bf16.gmra.mxu0 %v1564
        %v3815 = vpop.f32.mrf.mxu0
        %v3816 = vadd.f32 %v1850, %v3815
        %v3817 = vpop.f32.mrf.mxu0
        %v3818 = vadd.f32 %v1850, %v3817
        %3819 = vmatmul.bf16.gmra.mxu0 %v1568
        %v3820 = vpop.f32.mrf.mxu0
        %v3821 = vadd.f32 %v1850, %v3820
        %v3822 = vpop.f32.mrf.mxu0
        %v3823 = vadd.f32 %v1850, %v3822
        %3824 = vmatmul.bf16.gmra.mxu0 %v1572
        %v3825 = vpop.f32.mrf.mxu0
        %v3826 = vadd.f32 %v1850, %v3825
        %v3827 = vpop.f32.mrf.mxu0
        %v3828 = vadd.f32 %v1850, %v3827
        %3829 = vmatmul.bf16.gmra.mxu0 %v1576
        %v3830 = vpop.f32.mrf.mxu0
        %v3831 = vadd.f32 %v1850, %v3830
        %v3832 = vpop.f32.mrf.mxu0
        %v3833 = vadd.f32 %v1850, %v3832
        %3834 = vmatmul.bf16.gmra.mxu0 %v1580
        %v3835 = vpop.f32.mrf.mxu0
        %v3836 = vadd.f32 %v1850, %v3835
        %v3837 = vpop.f32.mrf.mxu0
        %v3838 = vadd.f32 %v1850, %v3837
        %3839 = vmatmul.bf16.gmra.mxu0 %v1584
        %v3840 = vpop.f32.mrf.mxu0
        %v3841 = vadd.f32 %v1850, %v3840
        %v3842 = vpop.f32.mrf.mxu0
        %v3843 = vadd.f32 %v1850, %v3842
        %3844 = vdwg.mxu0
        %3845 = vmatpush.bf16.msra.mxu0 %v2673
        %3846 = vmatpush.bf16.msra.mxu0 %v2666
        %3847 = vmatpush.bf16.msra.mxu0 %v2659
        %3848 = vmatpush.bf16.msra.mxu0 %v2652
        %3849 = vmatpush.bf16.msra.mxu0 %v2645
        %3850 = vmatpush.bf16.msra.mxu0 %v2638
        %3851 = vmatpush.bf16.msra.mxu0 %v2631
        %3852 = vmatpush.bf16.msra.mxu0 %v2624
        %3853 = vmatmul.bf16.gmra.mxu0 %v1557
        %v3854 = vpop.f32.mrf.mxu0
        %v3855 = vadd.f32 %v3806, %v3854
        %v3856 = vpop.f32.mrf.mxu0
        %v3857 = vadd.f32 %v3808, %v3856
        %3858 = vmatmul.bf16.gmra.mxu0 %v1561
        %v3859 = vpop.f32.mrf.mxu0
        %v3860 = vadd.f32 %v3811, %v3859
        %v3861 = vpop.f32.mrf.mxu0
        %v3862 = vadd.f32 %v3813, %v3861
        %3863 = vmatmul.bf16.gmra.mxu0 %v1565
        %v3864 = vpop.f32.mrf.mxu0
        %v3865 = vadd.f32 %v3816, %v3864
        %v3866 = vpop.f32.mrf.mxu0
        %v3867 = vadd.f32 %v3818, %v3866
        %3868 = vmatmul.bf16.gmra.mxu0 %v1569
        %v3869 = vpop.f32.mrf.mxu0
        %v3870 = vadd.f32 %v3821, %v3869
        %v3871 = vpop.f32.mrf.mxu0
        %v3872 = vadd.f32 %v3823, %v3871
        %3873 = vmatmul.bf16.gmra.mxu0 %v1573
        %v3874 = vpop.f32.mrf.mxu0
        %v3875 = vadd.f32 %v3826, %v3874
        %v3876 = vpop.f32.mrf.mxu0
        %v3877 = vadd.f32 %v3828, %v3876
        %3878 = vmatmul.bf16.gmra.mxu0 %v1577
        %v3879 = vpop.f32.mrf.mxu0
        %v3880 = vadd.f32 %v3831, %v3879
        %v3881 = vpop.f32.mrf.mxu0
        %v3882 = vadd.f32 %v3833, %v3881
        %3883 = vmatmul.bf16.gmra.mxu0 %v1581
        %v3884 = vpop.f32.mrf.mxu0
        %v3885 = vadd.f32 %v3836, %v3884
        %v3886 = vpop.f32.mrf.mxu0
        %v3887 = vadd.f32 %v3838, %v3886
        %3888 = vmatmul.bf16.gmra.mxu0 %v1585
        %v3889 = vpop.f32.mrf.mxu0
        %v3890 = vadd.f32 %v3841, %v3889
        %v3891 = vpop.f32.mrf.mxu0
        %v3892 = vadd.f32 %v3843, %v3891
        %3893 = vdwg.mxu0
        %3894 = vmatpush.bf16.msra.mxu0 %v2729
        %3895 = vmatpush.bf16.msra.mxu0 %v2722
        %3896 = vmatpush.bf16.msra.mxu0 %v2715
        %3897 = vmatpush.bf16.msra.mxu0 %v2708
        %3898 = vmatpush.bf16.msra.mxu0 %v2701
        %3899 = vmatpush.bf16.msra.mxu0 %v2694
        %3900 = vmatpush.bf16.msra.mxu0 %v2687
        %3901 = vmatpush.bf16.msra.mxu0 %v2680
        %3902 = vmatmul.bf16.gmra.mxu0 %v1558
        %v3903 = vpop.f32.mrf.mxu0
        %v3904 = vadd.f32 %v3855, %v3903
        %v3905 = vpop.f32.mrf.mxu0
        %v3906 = vadd.f32 %v3857, %v3905
        %3907 = vmatmul.bf16.gmra.mxu0 %v1562
        %v3908 = vpop.f32.mrf.mxu0
        %v3909 = vadd.f32 %v3860, %v3908
        %v3910 = vpop.f32.mrf.mxu0
        %v3911 = vadd.f32 %v3862, %v3910
        %3912 = vmatmul.bf16.gmra.mxu0 %v1566
        %v3913 = vpop.f32.mrf.mxu0
        %v3914 = vadd.f32 %v3865, %v3913
        %v3915 = vpop.f32.mrf.mxu0
        %v3916 = vadd.f32 %v3867, %v3915
        %3917 = vmatmul.bf16.gmra.mxu0 %v1570
        %v3918 = vpop.f32.mrf.mxu0
        %v3919 = vadd.f32 %v3870, %v3918
        %v3920 = vpop.f32.mrf.mxu0
        %v3921 = vadd.f32 %v3872, %v3920
        %3922 = vmatmul.bf16.gmra.mxu0 %v1574
        %v3923 = vpop.f32.mrf.mxu0
        %v3924 = vadd.f32 %v3875, %v3923
        %v3925 = vpop.f32.mrf.mxu0
        %v3926 = vadd.f32 %v3877, %v3925
        %3927 = vmatmul.bf16.gmra.mxu0 %v1578
        %v3928 = vpop.f32.mrf.mxu0
        %v3929 = vadd.f32 %v3880, %v3928
        %v3930 = vpop.f32.mrf.mxu0
        %v3931 = vadd.f32 %v3882, %v3930
        %3932 = vmatmul.bf16.gmra.mxu0 %v1582
        %v3933 = vpop.f32.mrf.mxu0
        %v3934 = vadd.f32 %v3885, %v3933
        %v3935 = vpop.f32.mrf.mxu0
        %v3936 = vadd.f32 %v3887, %v3935
        %3937 = vmatmul.bf16.gmra.mxu0 %v1586
        %v3938 = vpop.f32.mrf.mxu0
        %v3939 = vadd.f32 %v3890, %v3938
        %v3940 = vpop.f32.mrf.mxu0
        %v3941 = vadd.f32 %v3892, %v3940
        %3942 = vdwg.mxu0
        %3943 = vmatpush.bf16.msra.mxu0 %v2785
        %3944 = vmatpush.bf16.msra.mxu0 %v2778
        %3945 = vmatpush.bf16.msra.mxu0 %v2771
        %3946 = vmatpush.bf16.msra.mxu0 %v2764
        %3947 = vmatpush.bf16.msra.mxu0 %v2757
        %3948 = vmatpush.bf16.msra.mxu0 %v2750
        %3949 = vmatpush.bf16.msra.mxu0 %v2743
        %3950 = vmatpush.bf16.msra.mxu0 %v2736
        %3951 = vmatmul.bf16.gmra.mxu0 %v1559
        %v3952 = vpop.f32.mrf.mxu0
        %v3953 = vadd.f32 %v3904, %v3952
        %v3954 = vpop.f32.mrf.mxu0
        %v3955 = vadd.f32 %v3906, %v3954
        %3956 = vmatmul.bf16.gmra.mxu0 %v1563
        %v3957 = vpop.f32.mrf.mxu0
        %v3958 = vadd.f32 %v3909, %v3957
        %v3959 = vpop.f32.mrf.mxu0
        %v3960 = vadd.f32 %v3911, %v3959
        %3961 = vmatmul.bf16.gmra.mxu0 %v1567
        %v3962 = vpop.f32.mrf.mxu0
        %v3963 = vadd.f32 %v3914, %v3962
        %v3964 = vpop.f32.mrf.mxu0
        %v3965 = vadd.f32 %v3916, %v3964
        %3966 = vmatmul.bf16.gmra.mxu0 %v1571
        %v3967 = vpop.f32.mrf.mxu0
        %v3968 = vadd.f32 %v3919, %v3967
        %v3969 = vpop.f32.mrf.mxu0
        %v3970 = vadd.f32 %v3921, %v3969
        %3971 = vmatmul.bf16.gmra.mxu0 %v1575
        %v3972 = vpop.f32.mrf.mxu0
        %v3973 = vadd.f32 %v3924, %v3972
        %v3974 = vpop.f32.mrf.mxu0
        %v3975 = vadd.f32 %v3926, %v3974
        %3976 = vmatmul.bf16.gmra.mxu0 %v1579
        %v3977 = vpop.f32.mrf.mxu0
        %v3978 = vadd.f32 %v3929, %v3977
        %v3979 = vpop.f32.mrf.mxu0
        %v3980 = vadd.f32 %v3931, %v3979
        %3981 = vmatmul.bf16.gmra.mxu0 %v1583
        %v3982 = vpop.f32.mrf.mxu0
        %v3983 = vadd.f32 %v3934, %v3982
        %v3984 = vpop.f32.mrf.mxu0
        %v3985 = vadd.f32 %v3936, %v3984
        %3986 = vmatmul.bf16.gmra.mxu0 %v1587
        %v3987 = vpop.f32.mrf.mxu0
        %v3988 = vadd.f32 %v3939, %v3987
        %v3989 = vpop.f32.mrf.mxu0
        %v3990 = vadd.f32 %v3941, %v3989
        %3991 = vdwg.mxu0
        %3992 = vmatpush.bf16.msra.mxu0 %v2618
        %3993 = vmatpush.bf16.msra.mxu0 %v2611
        %3994 = vmatpush.bf16.msra.mxu0 %v2604
        %3995 = vmatpush.bf16.msra.mxu0 %v2597
        %3996 = vmatpush.bf16.msra.mxu0 %v2590
        %3997 = vmatpush.bf16.msra.mxu0 %v2583
        %3998 = vmatpush.bf16.msra.mxu0 %v2576
        %3999 = vmatpush.bf16.msra.mxu0 %v2569
        %4000 = vmatmul.bf16.gmra.mxu0 %v1556
        %v4001 = vpop.f32.mrf.mxu0
        %v4002 = vadd.f32 %v1851, %v4001
        %v4003 = vpop.f32.mrf.mxu0
        %v4004 = vadd.f32 %v1851, %v4003
        %4005 = vmatmul.bf16.gmra.mxu0 %v1560
        %v4006 = vpop.f32.mrf.mxu0
        %v4007 = vadd.f32 %v1851, %v4006
        %v4008 = vpop.f32.mrf.mxu0
        %v4009 = vadd.f32 %v1851, %v4008
        %4010 = vmatmul.bf16.gmra.mxu0 %v1564
        %v4011 = vpop.f32.mrf.mxu0
        %v4012 = vadd.f32 %v1851, %v4011
        %v4013 = vpop.f32.mrf.mxu0
        %v4014 = vadd.f32 %v1851, %v4013
        %4015 = vmatmul.bf16.gmra.mxu0 %v1568
        %v4016 = vpop.f32.mrf.mxu0
        %v4017 = vadd.f32 %v1851, %v4016
        %v4018 = vpop.f32.mrf.mxu0
        %v4019 = vadd.f32 %v1851, %v4018
        %4020 = vmatmul.bf16.gmra.mxu0 %v1572
        %v4021 = vpop.f32.mrf.mxu0
        %v4022 = vadd.f32 %v1851, %v4021
        %v4023 = vpop.f32.mrf.mxu0
        %v4024 = vadd.f32 %v1851, %v4023
        %4025 = vmatmul.bf16.gmra.mxu0 %v1576
        %v4026 = vpop.f32.mrf.mxu0
        %v4027 = vadd.f32 %v1851, %v4026
        %v4028 = vpop.f32.mrf.mxu0
        %v4029 = vadd.f32 %v1851, %v4028
        %4030 = vmatmul.bf16.gmra.mxu0 %v1580
        %v4031 = vpop.f32.mrf.mxu0
        %v4032 = vadd.f32 %v1851, %v4031
        %v4033 = vpop.f32.mrf.mxu0
        %v4034 = vadd.f32 %v1851, %v4033
        %4035 = vmatmul.bf16.gmra.mxu0 %v1584
        %v4036 = vpop.f32.mrf.mxu0
        %v4037 = vadd.f32 %v1851, %v4036
        %v4038 = vpop.f32.mrf.mxu0
        %v4039 = vadd.f32 %v1851, %v4038
        %4040 = vdwg.mxu0
        %4041 = vmatpush.bf16.msra.mxu0 %v2674
        %4042 = vmatpush.bf16.msra.mxu0 %v2667
        %4043 = vmatpush.bf16.msra.mxu0 %v2660
        %4044 = vmatpush.bf16.msra.mxu0 %v2653
        %4045 = vmatpush.bf16.msra.mxu0 %v2646
        %4046 = vmatpush.bf16.msra.mxu0 %v2639
        %4047 = vmatpush.bf16.msra.mxu0 %v2632
        %4048 = vmatpush.bf16.msra.mxu0 %v2625
        %4049 = vmatmul.bf16.gmra.mxu0 %v1557
        %v4050 = vpop.f32.mrf.mxu0
        %v4051 = vadd.f32 %v4002, %v4050
        %v4052 = vpop.f32.mrf.mxu0
        %v4053 = vadd.f32 %v4004, %v4052
        %4054 = vmatmul.bf16.gmra.mxu0 %v1561
        %v4055 = vpop.f32.mrf.mxu0
        %v4056 = vadd.f32 %v4007, %v4055
        %v4057 = vpop.f32.mrf.mxu0
        %v4058 = vadd.f32 %v4009, %v4057
        %4059 = vmatmul.bf16.gmra.mxu0 %v1565
        %v4060 = vpop.f32.mrf.mxu0
        %v4061 = vadd.f32 %v4012, %v4060
        %v4062 = vpop.f32.mrf.mxu0
        %v4063 = vadd.f32 %v4014, %v4062
        %4064 = vmatmul.bf16.gmra.mxu0 %v1569
        %v4065 = vpop.f32.mrf.mxu0
        %v4066 = vadd.f32 %v4017, %v4065
        %v4067 = vpop.f32.mrf.mxu0
        %v4068 = vadd.f32 %v4019, %v4067
        %4069 = vmatmul.bf16.gmra.mxu0 %v1573
        %v4070 = vpop.f32.mrf.mxu0
        %v4071 = vadd.f32 %v4022, %v4070
        %v4072 = vpop.f32.mrf.mxu0
        %v4073 = vadd.f32 %v4024, %v4072
        %4074 = vmatmul.bf16.gmra.mxu0 %v1577
        %v4075 = vpop.f32.mrf.mxu0
        %v4076 = vadd.f32 %v4027, %v4075
        %v4077 = vpop.f32.mrf.mxu0
        %v4078 = vadd.f32 %v4029, %v4077
        %4079 = vmatmul.bf16.gmra.mxu0 %v1581
        %v4080 = vpop.f32.mrf.mxu0
        %v4081 = vadd.f32 %v4032, %v4080
        %v4082 = vpop.f32.mrf.mxu0
        %v4083 = vadd.f32 %v4034, %v4082
        %4084 = vmatmul.bf16.gmra.mxu0 %v1585
        %v4085 = vpop.f32.mrf.mxu0
        %v4086 = vadd.f32 %v4037, %v4085
        %v4087 = vpop.f32.mrf.mxu0
        %v4088 = vadd.f32 %v4039, %v4087
        %4089 = vdwg.mxu0
        %4090 = vmatpush.bf16.msra.mxu0 %v2730
        %4091 = vmatpush.bf16.msra.mxu0 %v2723
        %4092 = vmatpush.bf16.msra.mxu0 %v2716
        %4093 = vmatpush.bf16.msra.mxu0 %v2709
        %4094 = vmatpush.bf16.msra.mxu0 %v2702
        %4095 = vmatpush.bf16.msra.mxu0 %v2695
        %4096 = vmatpush.bf16.msra.mxu0 %v2688
        %4097 = vmatpush.bf16.msra.mxu0 %v2681
        %4098 = vmatmul.bf16.gmra.mxu0 %v1558
        %v4099 = vpop.f32.mrf.mxu0
        %v4100 = vadd.f32 %v4051, %v4099
        %v4101 = vpop.f32.mrf.mxu0
        %v4102 = vadd.f32 %v4053, %v4101
        %4103 = vmatmul.bf16.gmra.mxu0 %v1562
        %v4104 = vpop.f32.mrf.mxu0
        %v4105 = vadd.f32 %v4056, %v4104
        %v4106 = vpop.f32.mrf.mxu0
        %v4107 = vadd.f32 %v4058, %v4106
        %4108 = vmatmul.bf16.gmra.mxu0 %v1566
        %v4109 = vpop.f32.mrf.mxu0
        %v4110 = vadd.f32 %v4061, %v4109
        %v4111 = vpop.f32.mrf.mxu0
        %v4112 = vadd.f32 %v4063, %v4111
        %4113 = vmatmul.bf16.gmra.mxu0 %v1570
        %v4114 = vpop.f32.mrf.mxu0
        %v4115 = vadd.f32 %v4066, %v4114
        %v4116 = vpop.f32.mrf.mxu0
        %v4117 = vadd.f32 %v4068, %v4116
        %4118 = vmatmul.bf16.gmra.mxu0 %v1574
        %v4119 = vpop.f32.mrf.mxu0
        %v4120 = vadd.f32 %v4071, %v4119
        %v4121 = vpop.f32.mrf.mxu0
        %v4122 = vadd.f32 %v4073, %v4121
        %4123 = vmatmul.bf16.gmra.mxu0 %v1578
        %v4124 = vpop.f32.mrf.mxu0
        %v4125 = vadd.f32 %v4076, %v4124
        %v4126 = vpop.f32.mrf.mxu0
        %v4127 = vadd.f32 %v4078, %v4126
        %4128 = vmatmul.bf16.gmra.mxu0 %v1582
        %v4129 = vpop.f32.mrf.mxu0
        %v4130 = vadd.f32 %v4081, %v4129
        %v4131 = vpop.f32.mrf.mxu0
        %v4132 = vadd.f32 %v4083, %v4131
        %4133 = vmatmul.bf16.gmra.mxu0 %v1586
        %v4134 = vpop.f32.mrf.mxu0
        %v4135 = vadd.f32 %v4086, %v4134
        %v4136 = vpop.f32.mrf.mxu0
        %v4137 = vadd.f32 %v4088, %v4136
        %4138 = vdwg.mxu0
        %4139 = vmatpush.bf16.msra.mxu0 %v2786
        %4140 = vmatpush.bf16.msra.mxu0 %v2779
        %4141 = vmatpush.bf16.msra.mxu0 %v2772
        %4142 = vmatpush.bf16.msra.mxu0 %v2765
        %4143 = vmatpush.bf16.msra.mxu0 %v2758
        %4144 = vmatpush.bf16.msra.mxu0 %v2751
        %4145 = vmatpush.bf16.msra.mxu0 %v2744
        %4146 = vmatpush.bf16.msra.mxu0 %v2737
        %4147 = vmatmul.bf16.gmra.mxu0 %v1559
        %v4148 = vpop.f32.mrf.mxu0
        %v4149 = vadd.f32 %v4100, %v4148
        %v4150 = vpop.f32.mrf.mxu0
        %v4151 = vadd.f32 %v4102, %v4150
        %4152 = vmatmul.bf16.gmra.mxu0 %v1563
        %v4153 = vpop.f32.mrf.mxu0
        %v4154 = vadd.f32 %v4105, %v4153
        %v4155 = vpop.f32.mrf.mxu0
        %v4156 = vadd.f32 %v4107, %v4155
        %4157 = vmatmul.bf16.gmra.mxu0 %v1567
        %v4158 = vpop.f32.mrf.mxu0
        %v4159 = vadd.f32 %v4110, %v4158
        %v4160 = vpop.f32.mrf.mxu0
        %v4161 = vadd.f32 %v4112, %v4160
        %4162 = vmatmul.bf16.gmra.mxu0 %v1571
        %v4163 = vpop.f32.mrf.mxu0
        %v4164 = vadd.f32 %v4115, %v4163
        %v4165 = vpop.f32.mrf.mxu0
        %v4166 = vadd.f32 %v4117, %v4165
        %4167 = vmatmul.bf16.gmra.mxu0 %v1575
        %v4168 = vpop.f32.mrf.mxu0
        %v4169 = vadd.f32 %v4120, %v4168
        %v4170 = vpop.f32.mrf.mxu0
        %v4171 = vadd.f32 %v4122, %v4170
        %4172 = vmatmul.bf16.gmra.mxu0 %v1579
        %v4173 = vpop.f32.mrf.mxu0
        %v4174 = vadd.f32 %v4125, %v4173
        %v4175 = vpop.f32.mrf.mxu0
        %v4176 = vadd.f32 %v4127, %v4175
        %4177 = vmatmul.bf16.gmra.mxu0 %v1583
        %v4178 = vpop.f32.mrf.mxu0
        %v4179 = vadd.f32 %v4130, %v4178
        %v4180 = vpop.f32.mrf.mxu0
        %v4181 = vadd.f32 %v4132, %v4180
        %4182 = vmatmul.bf16.gmra.mxu0 %v1587
        %v4183 = vpop.f32.mrf.mxu0
        %v4184 = vadd.f32 %v4135, %v4183
        %v4185 = vpop.f32.mrf.mxu0
        %v4186 = vadd.f32 %v4137, %v4185
        %4187 = vdwg.mxu0
        %4188 = vmatpush.bf16.msra.mxu0 %v2619
        %4189 = vmatpush.bf16.msra.mxu0 %v2612
        %4190 = vmatpush.bf16.msra.mxu0 %v2605
        %4191 = vmatpush.bf16.msra.mxu0 %v2598
        %4192 = vmatpush.bf16.msra.mxu0 %v2591
        %4193 = vmatpush.bf16.msra.mxu0 %v2584
        %4194 = vmatpush.bf16.msra.mxu0 %v2577
        %4195 = vmatpush.bf16.msra.mxu0 %v2570
        %4196 = vmatmul.bf16.gmra.mxu0 %v1556
        %v4197 = vpop.f32.mrf.mxu0
        %v4198 = vadd.f32 %v1852, %v4197
        %v4199 = vpop.f32.mrf.mxu0
        %v4200 = vadd.f32 %v1852, %v4199
        %4201 = vmatmul.bf16.gmra.mxu0 %v1560
        %v4202 = vpop.f32.mrf.mxu0
        %v4203 = vadd.f32 %v1852, %v4202
        %v4204 = vpop.f32.mrf.mxu0
        %v4205 = vadd.f32 %v1852, %v4204
        %4206 = vmatmul.bf16.gmra.mxu0 %v1564
        %v4207 = vpop.f32.mrf.mxu0
        %v4208 = vadd.f32 %v1852, %v4207
        %v4209 = vpop.f32.mrf.mxu0
        %v4210 = vadd.f32 %v1852, %v4209
        %4211 = vmatmul.bf16.gmra.mxu0 %v1568
        %v4212 = vpop.f32.mrf.mxu0
        %v4213 = vadd.f32 %v1852, %v4212
        %v4214 = vpop.f32.mrf.mxu0
        %v4215 = vadd.f32 %v1852, %v4214
        %4216 = vmatmul.bf16.gmra.mxu0 %v1572
        %v4217 = vpop.f32.mrf.mxu0
        %v4218 = vadd.f32 %v1852, %v4217
        %v4219 = vpop.f32.mrf.mxu0
        %v4220 = vadd.f32 %v1852, %v4219
        %4221 = vmatmul.bf16.gmra.mxu0 %v1576
        %v4222 = vpop.f32.mrf.mxu0
        %v4223 = vadd.f32 %v1852, %v4222
        %v4224 = vpop.f32.mrf.mxu0
        %v4225 = vadd.f32 %v1852, %v4224
        %4226 = vmatmul.bf16.gmra.mxu0 %v1580
        %v4227 = vpop.f32.mrf.mxu0
        %v4228 = vadd.f32 %v1852, %v4227
        %v4229 = vpop.f32.mrf.mxu0
        %v4230 = vadd.f32 %v1852, %v4229
        %4231 = vmatmul.bf16.gmra.mxu0 %v1584
        %v4232 = vpop.f32.mrf.mxu0
        %v4233 = vadd.f32 %v1852, %v4232
        %v4234 = vpop.f32.mrf.mxu0
        %v4235 = vadd.f32 %v1852, %v4234
        %4236 = vdwg.mxu0
        %4237 = vmatpush.bf16.msra.mxu0 %v2675
        %4238 = vmatpush.bf16.msra.mxu0 %v2668
        %4239 = vmatpush.bf16.msra.mxu0 %v2661
        %4240 = vmatpush.bf16.msra.mxu0 %v2654
        %4241 = vmatpush.bf16.msra.mxu0 %v2647
        %4242 = vmatpush.bf16.msra.mxu0 %v2640
        %4243 = vmatpush.bf16.msra.mxu0 %v2633
        %4244 = vmatpush.bf16.msra.mxu0 %v2626
        %4245 = vmatmul.bf16.gmra.mxu0 %v1557
        %v4246 = vpop.f32.mrf.mxu0
        %v4247 = vadd.f32 %v4198, %v4246
        %v4248 = vpop.f32.mrf.mxu0
        %v4249 = vadd.f32 %v4200, %v4248
        %4250 = vmatmul.bf16.gmra.mxu0 %v1561
        %v4251 = vpop.f32.mrf.mxu0
        %v4252 = vadd.f32 %v4203, %v4251
        %v4253 = vpop.f32.mrf.mxu0
        %v4254 = vadd.f32 %v4205, %v4253
        %4255 = vmatmul.bf16.gmra.mxu0 %v1565
        %v4256 = vpop.f32.mrf.mxu0
        %v4257 = vadd.f32 %v4208, %v4256
        %v4258 = vpop.f32.mrf.mxu0
        %v4259 = vadd.f32 %v4210, %v4258
        %4260 = vmatmul.bf16.gmra.mxu0 %v1569
        %v4261 = vpop.f32.mrf.mxu0
        %v4262 = vadd.f32 %v4213, %v4261
        %v4263 = vpop.f32.mrf.mxu0
        %v4264 = vadd.f32 %v4215, %v4263
        %4265 = vmatmul.bf16.gmra.mxu0 %v1573
        %v4266 = vpop.f32.mrf.mxu0
        %v4267 = vadd.f32 %v4218, %v4266
        %v4268 = vpop.f32.mrf.mxu0
        %v4269 = vadd.f32 %v4220, %v4268
        %4270 = vmatmul.bf16.gmra.mxu0 %v1577
        %v4271 = vpop.f32.mrf.mxu0
        %v4272 = vadd.f32 %v4223, %v4271
        %v4273 = vpop.f32.mrf.mxu0
        %v4274 = vadd.f32 %v4225, %v4273
        %4275 = vmatmul.bf16.gmra.mxu0 %v1581
        %v4276 = vpop.f32.mrf.mxu0
        %v4277 = vadd.f32 %v4228, %v4276
        %v4278 = vpop.f32.mrf.mxu0
        %v4279 = vadd.f32 %v4230, %v4278
        %4280 = vmatmul.bf16.gmra.mxu0 %v1585
        %v4281 = vpop.f32.mrf.mxu0
        %v4282 = vadd.f32 %v4233, %v4281
        %v4283 = vpop.f32.mrf.mxu0
        %v4284 = vadd.f32 %v4235, %v4283
        %4285 = vdwg.mxu0
        %4286 = vmatpush.bf16.msra.mxu0 %v2731
        %4287 = vmatpush.bf16.msra.mxu0 %v2724
        %4288 = vmatpush.bf16.msra.mxu0 %v2717
        %4289 = vmatpush.bf16.msra.mxu0 %v2710
        %4290 = vmatpush.bf16.msra.mxu0 %v2703
        %4291 = vmatpush.bf16.msra.mxu0 %v2696
        %4292 = vmatpush.bf16.msra.mxu0 %v2689
        %4293 = vmatpush.bf16.msra.mxu0 %v2682
        %4294 = vmatmul.bf16.gmra.mxu0 %v1558
        %v4295 = vpop.f32.mrf.mxu0
        %v4296 = vadd.f32 %v4247, %v4295
        %v4297 = vpop.f32.mrf.mxu0
        %v4298 = vadd.f32 %v4249, %v4297
        %4299 = vmatmul.bf16.gmra.mxu0 %v1562
        %v4300 = vpop.f32.mrf.mxu0
        %v4301 = vadd.f32 %v4252, %v4300
        %v4302 = vpop.f32.mrf.mxu0
        %v4303 = vadd.f32 %v4254, %v4302
        %4304 = vmatmul.bf16.gmra.mxu0 %v1566
        %v4305 = vpop.f32.mrf.mxu0
        %v4306 = vadd.f32 %v4257, %v4305
        %v4307 = vpop.f32.mrf.mxu0
        %v4308 = vadd.f32 %v4259, %v4307
        %4309 = vmatmul.bf16.gmra.mxu0 %v1570
        %v4310 = vpop.f32.mrf.mxu0
        %v4311 = vadd.f32 %v4262, %v4310
        %v4312 = vpop.f32.mrf.mxu0
        %v4313 = vadd.f32 %v4264, %v4312
        %4314 = vmatmul.bf16.gmra.mxu0 %v1574
        %v4315 = vpop.f32.mrf.mxu0
        %v4316 = vadd.f32 %v4267, %v4315
        %v4317 = vpop.f32.mrf.mxu0
        %v4318 = vadd.f32 %v4269, %v4317
        %4319 = vmatmul.bf16.gmra.mxu0 %v1578
        %v4320 = vpop.f32.mrf.mxu0
        %v4321 = vadd.f32 %v4272, %v4320
        %v4322 = vpop.f32.mrf.mxu0
        %v4323 = vadd.f32 %v4274, %v4322
        %4324 = vmatmul.bf16.gmra.mxu0 %v1582
        %v4325 = vpop.f32.mrf.mxu0
        %v4326 = vadd.f32 %v4277, %v4325
        %v4327 = vpop.f32.mrf.mxu0
        %v4328 = vadd.f32 %v4279, %v4327
        %4329 = vmatmul.bf16.gmra.mxu0 %v1586
        %v4330 = vpop.f32.mrf.mxu0
        %v4331 = vadd.f32 %v4282, %v4330
        %v4332 = vpop.f32.mrf.mxu0
        %v4333 = vadd.f32 %v4284, %v4332
        %4334 = vdwg.mxu0
        %4335 = vmatpush.bf16.msra.mxu0 %v2787
        %4336 = vmatpush.bf16.msra.mxu0 %v2780
        %4337 = vmatpush.bf16.msra.mxu0 %v2773
        %4338 = vmatpush.bf16.msra.mxu0 %v2766
        %4339 = vmatpush.bf16.msra.mxu0 %v2759
        %4340 = vmatpush.bf16.msra.mxu0 %v2752
        %4341 = vmatpush.bf16.msra.mxu0 %v2745
        %4342 = vmatpush.bf16.msra.mxu0 %v2738
        %4343 = vmatmul.bf16.gmra.mxu0 %v1559
        %v4344 = vpop.f32.mrf.mxu0
        %v4345 = vadd.f32 %v4296, %v4344
        %v4346 = vpop.f32.mrf.mxu0
        %v4347 = vadd.f32 %v4298, %v4346
        %4348 = vmatmul.bf16.gmra.mxu0 %v1563
        %v4349 = vpop.f32.mrf.mxu0
        %v4350 = vadd.f32 %v4301, %v4349
        %v4351 = vpop.f32.mrf.mxu0
        %v4352 = vadd.f32 %v4303, %v4351
        %4353 = vmatmul.bf16.gmra.mxu0 %v1567
        %v4354 = vpop.f32.mrf.mxu0
        %v4355 = vadd.f32 %v4306, %v4354
        %v4356 = vpop.f32.mrf.mxu0
        %v4357 = vadd.f32 %v4308, %v4356
        %4358 = vmatmul.bf16.gmra.mxu0 %v1571
        %v4359 = vpop.f32.mrf.mxu0
        %v4360 = vadd.f32 %v4311, %v4359
        %v4361 = vpop.f32.mrf.mxu0
        %v4362 = vadd.f32 %v4313, %v4361
        %4363 = vmatmul.bf16.gmra.mxu0 %v1575
        %v4364 = vpop.f32.mrf.mxu0
        %v4365 = vadd.f32 %v4316, %v4364
        %v4366 = vpop.f32.mrf.mxu0
        %v4367 = vadd.f32 %v4318, %v4366
        %4368 = vmatmul.bf16.gmra.mxu0 %v1579
        %v4369 = vpop.f32.mrf.mxu0
        %v4370 = vadd.f32 %v4321, %v4369
        %v4371 = vpop.f32.mrf.mxu0
        %v4372 = vadd.f32 %v4323, %v4371
        %4373 = vmatmul.bf16.gmra.mxu0 %v1583
        %v4374 = vpop.f32.mrf.mxu0
        %v4375 = vadd.f32 %v4326, %v4374
        %v4376 = vpop.f32.mrf.mxu0
        %v4377 = vadd.f32 %v4328, %v4376
        %4378 = vmatmul.bf16.gmra.mxu0 %v1587
        %v4379 = vpop.f32.mrf.mxu0
        %v4380 = vadd.f32 %v4331, %v4379
        %v4381 = vpop.f32.mrf.mxu0
        %v4382 = vadd.f32 %v4333, %v4381
        %4383 = vdwg.mxu0
        %v4384 = vtanh.pop %v3169
        %v4385 = vtanh.pop %v3365
        %v4386 = vtanh.pop %v3561
        %v4387 = vtanh.pop %v3757
        %v4388 = vtanh.pop %v3953
        %v4389 = vtanh.pop %v4149
        %v4390 = vtanh.pop %v4345
        %v4391 = vtanh.pop %v3171
        %v4392 = vtanh.pop %v3367
        %v4393 = vtanh.pop %v3563
        %v4394 = vtanh.pop %v3759
        %v4395 = vtanh.pop %v3955
        %v4396 = vtanh.pop %v4151
        %v4397 = vtanh.pop %v4347
        %v4398 = vtanh.pop %v3174
        %v4399 = vtanh.pop %v3370
        %v4400 = vtanh.pop %v3566
        %v4401 = vtanh.pop %v3762
        %v4402 = vtanh.pop %v3958
        %v4403 = vtanh.pop %v4154
        %v4404 = vtanh.pop %v4350
        %v4405 = vtanh.pop %v3176
        %v4406 = vtanh.pop %v3372
        %v4407 = vtanh.pop %v3568
        %v4408 = vtanh.pop %v3764
        %v4409 = vtanh.pop %v3960
        %v4410 = vtanh.pop %v4156
        %v4411 = vtanh.pop %v4352
        %v4412 = vtanh.pop %v3179
        %v4413 = vtanh.pop %v3375
        %v4414 = vtanh.pop %v3571
        %v4415 = vtanh.pop %v3767
        %v4416 = vtanh.pop %v3963
        %v4417 = vtanh.pop %v4159
        %v4418 = vtanh.pop %v4355
        %v4419 = vtanh.pop %v3181
        %v4420 = vtanh.pop %v3377
        %v4421 = vtanh.pop %v3573
        %v4422 = vtanh.pop %v3769
        %v4423 = vtanh.pop %v3965
        %v4424 = vtanh.pop %v4161
        %v4425 = vtanh.pop %v4357
        %v4426 = vtanh.pop %v3184
        %v4427 = vtanh.pop %v3380
        %v4428 = vtanh.pop %v3576
        %v4429 = vtanh.pop %v3772
        %v4430 = vtanh.pop %v3968
        %v4431 = vtanh.pop %v4164
        %v4432 = vtanh.pop %v4360
        %v4433 = vtanh.pop %v3186
        %v4434 = vtanh.pop %v3382
        %v4435 = vtanh.pop %v3578
        %v4436 = vtanh.pop %v3774
        %v4437 = vtanh.pop %v3970
        %v4438 = vtanh.pop %v4166
        %v4439 = vtanh.pop %v4362
        %v4440 = vtanh.pop %v3189
        %v4441 = vtanh.pop %v3385
        %v4442 = vtanh.pop %v3581
        %v4443 = vtanh.pop %v3777
        %v4444 = vtanh.pop %v3973
        %v4445 = vtanh.pop %v4169
        %v4446 = vtanh.pop %v4365
        %v4447 = vtanh.pop %v3191
        %v4448 = vtanh.pop %v3387
        %v4449 = vtanh.pop %v3583
        %v4450 = vtanh.pop %v3779
        %v4451 = vtanh.pop %v3975
        %v4452 = vtanh.pop %v4171
        %v4453 = vtanh.pop %v4367
        %v4454 = vtanh.pop %v3194
        %v4455 = vtanh.pop %v3390
        %v4456 = vtanh.pop %v3586
        %v4457 = vtanh.pop %v3782
        %v4458 = vtanh.pop %v3978
        %v4459 = vtanh.pop %v4174
        %v4460 = vtanh.pop %v4370
        %v4461 = vtanh.pop %v3196
        %v4462 = vtanh.pop %v3392
        %v4463 = vtanh.pop %v3588
        %v4464 = vtanh.pop %v3784
        %v4465 = vtanh.pop %v3980
        %v4466 = vtanh.pop %v4176
        %v4467 = vtanh.pop %v4372
        %v4468 = vtanh.pop %v3199
        %v4469 = vtanh.pop %v3395
        %v4470 = vtanh.pop %v3591
        %v4471 = vtanh.pop %v3787
        %v4472 = vtanh.pop %v3983
        %v4473 = vtanh.pop %v4179
        %v4474 = vtanh.pop %v4375
        %v4475 = vtanh.pop %v3201
        %v4476 = vtanh.pop %v3397
        %v4477 = vtanh.pop %v3593
        %v4478 = vtanh.pop %v3789
        %v4479 = vtanh.pop %v3985
        %v4480 = vtanh.pop %v4181
        %v4481 = vtanh.pop %v4377
        %v4482 = vtanh.pop %v3204
        %v4483 = vtanh.pop %v3400
        %v4484 = vtanh.pop %v3596
        %v4485 = vtanh.pop %v3792
        %v4486 = vtanh.pop %v3988
        %v4487 = vtanh.pop %v4184
        %v4488 = vtanh.pop %v4380
        %v4489 = vtanh.pop %v3206
        %v4490 = vtanh.pop %v3402
        %v4491 = vtanh.pop %v3598
        %v4492 = vtanh.pop %v3794
        %v4493 = vtanh.pop %v3990
        %v4494 = vtanh.pop %v4186
        %v4495 = vtanh.pop %v4382
        %4496 = vst [vmem:[%s391] sm:$0xff] %v4384
        %4497 = vst [vmem:[%s391 + $0x8] sm:$0xff] %v4385
        %4498 = vst [vmem:[%s391 + $0x10] sm:$0xff] %v4386
        %4499 = vst [vmem:[%s391 + $0x18] sm:$0xff] %v4387
        %4500 = vst [vmem:[%s391 + $0x20] sm:$0xff] %v4388
        %4501 = vst [vmem:[%s391 + $0x28] sm:$0xff] %v4389
        %4502 = vst [vmem:[%s391 + $0x30] sm:$0xff] %v4390
        %4503 = vst [vmem:[%s391 + $0x38] sm:$0xff] %v4391
        %4504 = vst [vmem:[%s391 + $0x40] sm:$0xff] %v4392
        %4505 = vst [vmem:[%s391 + $0x48] sm:$0xff] %v4393
        %4506 = vst [vmem:[%s391 + $0x50] sm:$0xff] %v4394
        %4507 = vst [vmem:[%s391 + $0x58] sm:$0xff] %v4395
        %4508 = vst [vmem:[%s391 + $0x60] sm:$0xff] %v4396
        %4509 = vst [vmem:[%s391 + $0x68] sm:$0xff] %v4397
        %4510 = vst [vmem:[%s391 + $0x70] sm:$0xff] %v4398
        %4511 = vst [vmem:[%s391 + $0x78] sm:$0xff] %v4399
        %4512 = vst [vmem:[%s391 + $0x80] sm:$0xff] %v4400
        %4513 = vst [vmem:[%s391 + $0x88] sm:$0xff] %v4401
        %4514 = vst [vmem:[%s391 + $0x90] sm:$0xff] %v4402
        %4515 = vst [vmem:[%s391 + $0x98] sm:$0xff] %v4403
        %4516 = vst [vmem:[%s391 + $0xa0] sm:$0xff] %v4404
        %4517 = vst [vmem:[%s391 + $0xa8] sm:$0xff] %v4405
        %4518 = vst [vmem:[%s391 + $0xb0] sm:$0xff] %v4406
        %4519 = vst [vmem:[%s391 + $0xb8] sm:$0xff] %v4407
        %4520 = vst [vmem:[%s391 + $0xc0] sm:$0xff] %v4408
        %4521 = vst [vmem:[%s391 + $0xc8] sm:$0xff] %v4409
        %4522 = vst [vmem:[%s391 + $0xd0] sm:$0xff] %v4410
        %4523 = vst [vmem:[%s391 + $0xd8] sm:$0xff] %v4411
        %4524 = vst [vmem:[%s391 + $0xe0] sm:$0xff] %v4412
        %4525 = vst [vmem:[%s391 + $0xe8] sm:$0xff] %v4413
        %4526 = vst [vmem:[%s391 + $0xf0] sm:$0xff] %v4414
        %4527 = vst [vmem:[%s391 + $0xf8] sm:$0xff] %v4415
        %4528 = vst [vmem:[%s391 + $0x100] sm:$0xff] %v4416
        %4529 = vst [vmem:[%s391 + $0x108] sm:$0xff] %v4417
        %4530 = vst [vmem:[%s391 + $0x110] sm:$0xff] %v4418
        %4531 = vst [vmem:[%s391 + $0x118] sm:$0xff] %v4419
        %4532 = vst [vmem:[%s391 + $0x120] sm:$0xff] %v4420
        %4533 = vst [vmem:[%s391 + $0x128] sm:$0xff] %v4421
        %4534 = vst [vmem:[%s391 + $0x130] sm:$0xff] %v4422
        %4535 = vst [vmem:[%s391 + $0x138] sm:$0xff] %v4423
        %4536 = vst [vmem:[%s391 + $0x140] sm:$0xff] %v4424
        %4537 = vst [vmem:[%s391 + $0x148] sm:$0xff] %v4425
        %4538 = vst [vmem:[%s391 + $0x150] sm:$0xff] %v4426
        %4539 = vst [vmem:[%s391 + $0x158] sm:$0xff] %v4427
        %4540 = vst [vmem:[%s391 + $0x160] sm:$0xff] %v4428
        %4541 = vst [vmem:[%s391 + $0x168] sm:$0xff] %v4429
        %4542 = vst [vmem:[%s391 + $0x170] sm:$0xff] %v4430
        %4543 = vst [vmem:[%s391 + $0x178] sm:$0xff] %v4431
        %4544 = vst [vmem:[%s391 + $0x180] sm:$0xff] %v4432
        %4545 = vst [vmem:[%s391 + $0x188] sm:$0xff] %v4433
        %4546 = vst [vmem:[%s391 + $0x190] sm:$0xff] %v4434
        %4547 = vst [vmem:[%s391 + $0x198] sm:$0xff] %v4435
        %4548 = vst [vmem:[%s391 + $0x1a0] sm:$0xff] %v4436
        %4549 = vst [vmem:[%s391 + $0x1a8] sm:$0xff] %v4437
        %4550 = vst [vmem:[%s391 + $0x1b0] sm:$0xff] %v4438
        %4551 = vst [vmem:[%s391 + $0x1b8] sm:$0xff] %v4439
        %4552 = vst [vmem:[%s391 + $0x1c0] sm:$0xff] %v4440
        %4553 = vst [vmem:[%s391 + $0x1c8] sm:$0xff] %v4441
        %4554 = vst [vmem:[%s391 + $0x1d0] sm:$0xff] %v4442
        %4555 = vst [vmem:[%s391 + $0x1d8] sm:$0xff] %v4443
        %4556 = vst [vmem:[%s391 + $0x1e0] sm:$0xff] %v4444
        %4557 = vst [vmem:[%s391 + $0x1e8] sm:$0xff] %v4445
        %4558 = vst [vmem:[%s391 + $0x1f0] sm:$0xff] %v4446
        %4559 = vst [vmem:[%s391 + $0x1f8] sm:$0xff] %v4447
        %4560 = vst [vmem:[%s391 + $0x200] sm:$0xff] %v4448
        %4561 = vst [vmem:[%s391 + $0x208] sm:$0xff] %v4449
        %4562 = vst [vmem:[%s391 + $0x210] sm:$0xff] %v4450
        %4563 = vst [vmem:[%s391 + $0x218] sm:$0xff] %v4451
        %4564 = vst [vmem:[%s391 + $0x220] sm:$0xff] %v4452
        %4565 = vst [vmem:[%s391 + $0x228] sm:$0xff] %v4453
        %4566 = vst [vmem:[%s391 + $0x230] sm:$0xff] %v4454
        %4567 = vst [vmem:[%s391 + $0x238] sm:$0xff] %v4455
        %4568 = vst [vmem:[%s391 + $0x240] sm:$0xff] %v4456
        %4569 = vst [vmem:[%s391 + $0x248] sm:$0xff] %v4457
        %4570 = vst [vmem:[%s391 + $0x250] sm:$0xff] %v4458
        %4571 = vst [vmem:[%s391 + $0x258] sm:$0xff] %v4459
        %4572 = vst [vmem:[%s391 + $0x260] sm:$0xff] %v4460
        %4573 = vst [vmem:[%s391 + $0x268] sm:$0xff] %v4461
        %4574 = vst [vmem:[%s391 + $0x270] sm:$0xff] %v4462
        %4575 = vst [vmem:[%s391 + $0x278] sm:$0xff] %v4463
        %4576 = vst [vmem:[%s391 + $0x280] sm:$0xff] %v4464
        %4577 = vst [vmem:[%s391 + $0x288] sm:$0xff] %v4465
        %4578 = vst [vmem:[%s391 + $0x290] sm:$0xff] %v4466
        %4579 = vst [vmem:[%s391 + $0x298] sm:$0xff] %v4467
        %4580 = vst [vmem:[%s391 + $0x2a0] sm:$0xff] %v4468
        %4581 = vst [vmem:[%s391 + $0x2a8] sm:$0xff] %v4469
        %4582 = vst [vmem:[%s391 + $0x2b0] sm:$0xff] %v4470
        %4583 = vst [vmem:[%s391 + $0x2b8] sm:$0xff] %v4471
        %4584 = vst [vmem:[%s391 + $0x2c0] sm:$0xff] %v4472
        %4585 = vst [vmem:[%s391 + $0x2c8] sm:$0xff] %v4473
        %4586 = vst [vmem:[%s391 + $0x2d0] sm:$0xff] %v4474
        %4587 = vst [vmem:[%s391 + $0x2d8] sm:$0xff] %v4475
        %4588 = vst [vmem:[%s391 + $0x2e0] sm:$0xff] %v4476
        %4589 = vst [vmem:[%s391 + $0x2e8] sm:$0xff] %v4477
        %4590 = vst [vmem:[%s391 + $0x2f0] sm:$0xff] %v4478
        %4591 = vst [vmem:[%s391 + $0x2f8] sm:$0xff] %v4479
        %4592 = vst [vmem:[%s391 + $0x300] sm:$0xff] %v4480
        %4593 = vst [vmem:[%s391 + $0x308] sm:$0xff] %v4481
        %4594 = vst [vmem:[%s391 + $0x310] sm:$0xff] %v4482
        %4595 = vst [vmem:[%s391 + $0x318] sm:$0xff] %v4483
        %4596 = vst [vmem:[%s391 + $0x320] sm:$0xff] %v4484
        %4597 = vst [vmem:[%s391 + $0x328] sm:$0xff] %v4485
        %4598 = vst [vmem:[%s391 + $0x330] sm:$0xff] %v4486
        %4599 = vst [vmem:[%s391 + $0x338] sm:$0xff] %v4487
        %4600 = vst [vmem:[%s391 + $0x340] sm:$0xff] %v4488
        %4601 = vst [vmem:[%s391 + $0x348] sm:$0xff] %v4489
        %4602 = vst [vmem:[%s391 + $0x350] sm:$0xff] %v4490
        %4603 = vst [vmem:[%s391 + $0x358] sm:$0xff] %v4491
        %4604 = vst [vmem:[%s391 + $0x360] sm:$0xff] %v4492
        %4605 = vst [vmem:[%s391 + $0x368] sm:$0xff] %v4493
        %4606 = vst [vmem:[%s391 + $0x370] sm:$0xff] %v4494
        %4607 = vst [vmem:[%s391 + $0x378] sm:$0xff] %v4495
        %s4608 = sand.u32 %s187, 1
        %s4609 = scalar_lea.sflag [#allocation4], %s4608
        %s4610 = sand.u32 %s187, 1
        %s4611 = smul.addr %s4610, 896
        %s4612 = scalar_lea.vmem [#allocation14], %s4611
        // Predicated region
        $region77: #{tpu_custom_call.1} parent=47 // pred_check
          %p4613 = pneg %p197
        $region78: #{tpu_custom_call.1} parent=47 // pred_check_branch
          %4615 = sbr.rel (%p4613) target = $region80
        $region79: #{tpu_custom_call.1} parent=47 // pred_region
          %s4616 = smul.u32 16, %s27
          %4618 = vsyncadd %s4609, 0
          %s4619 = smul.addr %s4616, 7
          %s4620 = smul.addr %s4619, 8
          %s4621 = scalar_lea.hbm %s7, %s4620
          %s4622 = sshll.u32 %s4612, 4
          %s4623 = int_to_ptr.vmem [resolvable:$true] %s4622
          %s4624 = sshll.u32 %s4621, 4
          %s4625 = int_to_ptr.hbm [resolvable:$true] %s4624
          %4630 = dma.vmem_to_hbm [thread:$0]  %s4623, 14336, %s4625, %s4609, 896, 896, 56
        $region80: #{tpu_custom_call.1} parent=47 // pred_fallthru
          _
      $region48: #{tpu_custom_call.1} parent=5 // pred_fallthru
        _
      %p4631 = scmp.le.s32.totalorder 2, %s22
      // Predicated region
      $region81: #{tpu_custom_call.1} parent=5 // pred_check
        %p4632 = pneg %p4631
      $region82: #{tpu_custom_call.1} parent=5 // pred_check_branch
        %4634 = sbr.rel (%p4632) target = $region84
      $region83: #{tpu_custom_call.1} parent=5 // pred_region
        %s4635 = ssub.s32 %s22, 2
        // Predicated region
        $region85: #{tpu_custom_call.1} parent=83 // pred_check
          %p4636 = pneg %p203
        $region86: #{tpu_custom_call.1} parent=83 // pred_check_branch
          %4638 = sbr.rel (%p4636) target = $region88
        $region87: #{tpu_custom_call.1} parent=83 // pred_region
          %s4639 = sand.u32 %s188, 1
          %s4640 = scalar_lea.sflag [#allocation4], %s4639
          %s4641 = sand.u32 %s188, 1
          %s4642 = smul.addr %s4641, 896
          %s4643 = scalar_lea.vmem [#allocation14], %s4642
          %4645 = dma.done %s4640, 14336
        $region88: #{tpu_custom_call.1} parent=83 // pred_fallthru
          _
      $region84: #{tpu_custom_call.1} parent=5 // pred_fallthru
        _
    $region6: #{tpu_custom_call.1} parent=1 // loop_footer
      %s26 = sadd.s32 1, %s22
    $region7: #{tpu_custom_call.1} parent=1 // loop_footer_branch
      %21 = sbr.rel target = $region3
    $region8: #{tpu_custom_call.1} parent=1 // loop_exit
      _
    %4646 = vsyncpa [#allocation3], 1
    %s4647 = scalar_lea.sflag [#allocation3], 1
    %4648 = vsyncpa %s4647, 1
    %4649 = vsyncpa [#allocation6], 1
    %4650 = vsyncpa [#allocation9], 1
    %4651 = vsyncpa [#allocation12], 1
    %4652 = vsyncpa [#allocation4], 1
    %s4653 = scalar_lea.sflag [#allocation4], 1
    %4654 = vsyncpa %s4653, 1

</llo_original>
